<compile_context>
chip_gen: v7x
topology: tpu7x:2x2x1
jax: 0.10.0
libtpu: 0.0.40
codegen_flags: <defaults>
</compile_context>

<pallas_src>
import math

import jax
import jax.numpy as jnp
from jax import lax
from jax.experimental import pallas as pl
from jax.experimental.pallas import tpu as pltpu


# ----------------------------------------------------------------------------
# Per-generation knobs
# ----------------------------------------------------------------------------
def _device_kind():
    try:
        return jax.devices()[0].device_kind.lower()
    except Exception:
        return ""


def _pick_vmem_limit():
    kind = _device_kind()
    if "v7" in kind or "7x" in kind:
        return 48 * 1024 * 1024      # 64 MiB physical on v7x -> leave headroom
    return 64 * 1024 * 1024          # v5e/v6e: 128 MiB physical


def _pick_exp_dtype():
    # bf16 EUP exists on v6e/v7x (roughly doubles transcendental throughput);
    # keep f32 elsewhere (v5e has no bf16 EUP, no win).
    kind = _device_kind()
    if "v6" in kind or "v7" in kind or "7x" in kind:
        return jnp.bfloat16
    return jnp.float32


def _const_weight_spec(block_shape, index_map):
    """Constant-index weight block: single-buffered (double buffering a
    constant block only wastes VMEM)."""
    buffered = getattr(pl, "Buffered", None)
    if buffered is not None:
        try:
            return pl.BlockSpec(block_shape, index_map,
                                pipeline_mode=buffered(1))
        except TypeError:   # older jax without pipeline_mode on BlockSpec
            pass
    return pl.BlockSpec(block_shape, index_map)


# ----------------------------------------------------------------------------
# Stage 1: fused QKV projection + RMSNorm(Q,K) + RoPE(Q,K)
# ----------------------------------------------------------------------------
def make_qkv_rope_kernel(num_q_heads, num_k_heads, head_dim, eps=1e-6):
    hd = head_dim
    nq, nk = num_q_heads, num_k_heads

    def rms_norm(x, w):                       # x: (tq, hd) f32, w: (1, hd)
        var = jnp.mean(x * x, axis=-1, keepdims=True)
        return x * lax.rsqrt(var + eps) * w

    def rope(x, cos, sin_signed):
        # rotate_half(x) = cat(-x2, x1) = roll(x, hd//2) * [-1.., +1..];
        # sign vector pre-folded into sin_signed (XLU roll, no concat).
        return x * cos + pltpu.roll(x, hd // 2, 1) * sin_signed

    def kernel(x_ref, w_ref, qnw_ref, knw_ref, cos_ref, sin_ref,
               q_out_ref, k_out_ref, v_out_ref, qkv_acc):
        x = x_ref[0].astype(jnp.bfloat16)      # (tq, D)
        cos = cos_ref[...]                     # (tq, hd) f32
        sin = sin_ref[...]                     # (tq, hd) f32, sign folded in
        qnw = qnw_ref[...]                     # (1, hd)  (softmax scale folded)
        knw = knw_ref[...]

        # Single fused QKV matmul: bf16 MXU, f32 accumulation into VMEM scratch.
        qkv_acc[...] = jnp.dot(x, w_ref[...],
                               preferred_element_type=jnp.float32)

        for h in range(nq):                    # hd-aligned lane slices
            qh = qkv_acc[:, h * hd:(h + 1) * hd]
            qh = rope(rms_norm(qh, qnw), cos, sin)
            q_out_ref[0, h] = qh.astype(jnp.bfloat16)

        for h in range(nk):
            kh = qkv_acc[:, (nq + h) * hd:(nq + h + 1) * hd]
            kh = rope(rms_norm(kh, knw), cos, sin)
            k_out_ref[0, h] = kh.astype(jnp.bfloat16)
            v_out_ref[0, h] = qkv_acc[:, (nq + nk + h) * hd:
                                      (nq + nk + h + 1) * hd].astype(jnp.bfloat16)

    return kernel


# ----------------------------------------------------------------------------
# Stage 2: flash attention (online softmax, GQA head-group stacking) fused
#          with the output projection (per-head accumulation, no concat).
# ----------------------------------------------------------------------------
def make_flash_outproj_kernel(num_groups, head_dim, model_dim, tile_q,
                              exp_dtype=jnp.float32):
    ng, hd, D, tq = num_groups, head_dim, model_dim, tile_q

    def kernel(q_ref, k_ref, v_ref, wout_ref, o_ref, m_s, l_s, acc_s, oacc_s):
        h = pl.program_id(2)                   # KV-head index
        ki = pl.program_id(3)                  # KV-tile index
        nh = pl.num_programs(2)
        nkv = pl.num_programs(3)

        @pl.when((h == 0) & (ki == 0))
        def _():
            oacc_s[...] = jnp.zeros(oacc_s.shape, jnp.float32)

        @pl.when(ki == 0)
        def _():
            m_s[...] = jnp.full(m_s.shape, -jnp.inf, jnp.float32)
            l_s[...] = jnp.zeros(l_s.shape, jnp.float32)
            acc_s[...] = jnp.zeros(acc_s.shape, jnp.float32)

        # Stack the ng query heads sharing this KV head: bigger MXU M dim.
        q = q_ref[0].reshape(ng * tq, hd)      # bf16 (ng*tq, hd)
        k = k_ref[0, 0]                        # bf16 (tkv, hd)
        v = v_ref[0, 0]                        # bf16 (tkv, hd)

        # Contract last dims directly - no materialized K transpose.
        # 1/sqrt(hd) softmax scale already folded into Q (stage 1 norm weight).
        s = lax.dot_general(q, k, (((1,), (1,)), ((), ())),
                            preferred_element_type=jnp.float32)

        m_prev = m_s[...]
        m_new = jnp.maximum(m_prev, jnp.max(s, axis=-1, keepdims=True))
        alpha = jnp.exp(m_prev - m_new)
        # Big-tile exponent in bf16 on v6e/v7x (EUP-bound); f32 accumulation.
        p = jnp.exp((s - m_new).astype(exp_dtype))
        l_s[...] = alpha * l_s[...] + jnp.sum(p, axis=-1, keepdims=True,
                                              dtype=jnp.float32)
        acc_s[...] = alpha * acc_s[...] + jnp.dot(
            p.astype(jnp.bfloat16), v, preferred_element_type=jnp.float32)
        m_s[...] = m_new

        @pl.when(ki == nkv - 1)
        def _():
            o = acc_s[...] * pl.reciprocal(l_s[...], approx=True)
            o = o.astype(jnp.bfloat16)         # (ng*tq, hd)
            # Output projection accumulated per head group; w_out is resident
            # in VMEM, slice just the (hd, D) rows this group needs.
            contrib = jnp.zeros((tq, D), jnp.float32)
            for g in range(ng):
                w_g = wout_ref[h, pl.ds(g * hd, hd), :]      # (hd, D) bf16
                contrib = contrib + jnp.dot(
                    o[g * tq:(g + 1) * tq, :], w_g,
                    preferred_element_type=jnp.float32)
            oacc_s[...] = oacc_s[...] + contrib

        @pl.when((h == nh - 1) & (ki == nkv - 1))
        def _():
            o_ref[0] = oacc_s[...].astype(o_ref.dtype)   # lane-dense (tq, D)

    return kernel


# ----------------------------------------------------------------------------
# Wrapper
# ----------------------------------------------------------------------------
def openelm_attention(x, w_qkv, w_out, q_norm_w, k_norm_w, cos, sin,
                      num_q_heads, num_k_heads, head_dim,
                      *, tile_q=128, tile_kv=256):
    # tile_q / tile_kv are the per-generation knobs: tile_kv=256 fills the
    # 256-wide MXU on v6e/v7x; raise tile_q (K/V re-streaming ~ S/tile_q) as
    # far as VMEM allows (sweep per chip; halve on v7x's 64 MiB VMEM).
    B, S, D = x.shape
    hd = head_dim
    nq, nk = num_q_heads, num_k_heads
    assert nq % nk == 0, "GQA requires num_q_heads % num_k_heads == 0"
    ng = nq // nk
    tile_q = min(tile_q, S)
    tile_kv = min(tile_kv, S)
    assert S % tile_q == 0 and S % tile_kv == 0
    assert hd % 2 == 0

    total = (nq + 2 * nk) * hd
    assert w_qkv.shape == (D, total)

    vmem_limit = _pick_vmem_limit()
    exp_dtype = _pick_exp_dtype()
    scale = 1.0 / math.sqrt(head_dim)

    # bf16 MXU operands (f32 accumulation stays in-kernel). Single fused QKV
    # weight -> one DMA stream / one resident buffer.
    w_qkv_b = w_qkv.astype(jnp.bfloat16)
    # w_out reshaped to (nk, ng*hd, D): row [h, g*hd + r] == original row
    # ((h*ng + g)*hd + r), matching the GQA head-group stacking in stage 2.
    w_out_b = w_out.astype(jnp.bfloat16).reshape(nk, ng * hd, D)

    # Fold the rotate-half sign pattern into the sin table.
    sign = jnp.concatenate([-jnp.ones((hd // 2,), jnp.float32),
                            jnp.ones((hd // 2,), jnp.float32)])
    sin_signed = (sin.astype(jnp.float32) * sign[None, :])
    cos_f = cos.astype(jnp.float32)

    # Fold the softmax scale into the Q norm weight (RMSNorm output is linear
    # in its weight, RoPE is linear in its input -> equivalent to scaling s).
    qnw = (q_norm_w.astype(jnp.float32) * scale).reshape(1, hd)
    knw = k_norm_w.reshape(1, hd).astype(jnp.float32)

    n_q_tiles = S // tile_q
    n_kv_tiles = S // tile_kv

    # ---------------- stage 1: QKV projection + RMSNorm + RoPE ---------------
    qkv_kernel = make_qkv_rope_kernel(nq, nk, hd)
    q_h, k_h, v_h = pl.pallas_call(
        qkv_kernel,
        out_shape=(
            jax.ShapeDtypeStruct((B, nq, S, hd), jnp.bfloat16),
            jax.ShapeDtypeStruct((B, nk, S, hd), jnp.bfloat16),
            jax.ShapeDtypeStruct((B, nk, S, hd), jnp.bfloat16),
        ),
        grid_spec=pltpu.PrefetchScalarGridSpec(
            num_scalar_prefetch=0,
            grid=(B, n_q_tiles),
            in_specs=[
                pl.BlockSpec((1, tile_q, D), lambda b, i: (b, i, 0)),
                _const_weight_spec((D, total), lambda b, i: (0, 0)),
                pl.BlockSpec((1, hd), lambda b, i: (0, 0)),
                pl.BlockSpec((1, hd), lambda b, i: (0, 0)),
                pl.BlockSpec((tile_q, hd), lambda b, i: (i, 0)),
                pl.BlockSpec((tile_q, hd), lambda b, i: (i, 0)),
            ],
            out_specs=[
                pl.BlockSpec((1, nq, tile_q, hd), lambda b, i: (b, 0, i, 0)),
                pl.BlockSpec((1, nk, tile_q, hd), lambda b, i: (b, 0, i, 0)),
                pl.BlockSpec((1, nk, tile_q, hd), lambda b, i: (b, 0, i, 0)),
            ],
            scratch_shapes=[pltpu.VMEM((tile_q, total), jnp.float32)],
        ),
        compiler_params=pltpu.CompilerParams(
            dimension_semantics=("parallel", "parallel"),
            vmem_limit_bytes=vmem_limit),
    )(x, w_qkv_b, qnw, knw, cos_f, sin_signed)

    # ------------- stage 2: flash attention + fused output projection --------
    attn_kernel = make_flash_outproj_kernel(ng, hd, D, tile_q, exp_dtype)
    out = pl.pallas_call(
        attn_kernel,
        out_shape=jax.ShapeDtypeStruct((B, S, D), x.dtype),
        grid_spec=pltpu.PrefetchScalarGridSpec(
            num_scalar_prefetch=0,
            grid=(B, n_q_tiles, nk, n_kv_tiles),
            in_specs=[
                pl.BlockSpec((1, ng, tile_q, hd),
                             lambda b, qi, h, ki: (b, h, qi, 0)),
                pl.BlockSpec((1, 1, tile_kv, hd),
                             lambda b, qi, h, ki: (b, h, ki, 0)),
                pl.BlockSpec((1, 1, tile_kv, hd),
                             lambda b, qi, h, ki: (b, h, ki, 0)),
                # Resident output-projection weight: fetched once per kernel.
                _const_weight_spec((nk, ng * hd, D),
                                   lambda b, qi, h, ki: (0, 0, 0)),
            ],
            out_specs=pl.BlockSpec((1, tile_q, D),
                                   lambda b, qi, h, ki: (b, qi, 0)),
            scratch_shapes=[
                pltpu.VMEM((ng * tile_q, 1), jnp.float32),    # m (running max)
                pltpu.VMEM((ng * tile_q, 1), jnp.float32),    # l (running sum)
                pltpu.VMEM((ng * tile_q, hd), jnp.float32),   # attn accumulator
                pltpu.VMEM((tile_q, D), jnp.float32),         # out-proj accum
            ],
        ),
        compiler_params=pltpu.CompilerParams(
            dimension_semantics=("parallel", "parallel",
                                 "arbitrary", "arbitrary"),
            vmem_limit_bytes=vmem_limit),
    )(q_h, k_h, v_h, w_out_b)

    return out


# ---------------- pure-JAX reference (mirrors the torch forward, f32) --------
def reference(x, w_qkv, w_out, q_norm_w, k_norm_w, cos, sin,
              num_q_heads, num_k_heads, head_dim, eps=1e-6):
    B, S, D = x.shape
    num_groups = num_q_heads // num_k_heads
    qkv = x @ w_qkv                                     # (B, S, total)
    qkv = qkv.reshape(B, S, num_q_heads + 2 * num_k_heads, head_dim)
    qkv = jnp.transpose(qkv, (0, 2, 1, 3))              # (B, H, S, hd)
    q = qkv[:, :num_q_heads]
    k = qkv[:, num_q_heads:num_q_heads + num_k_heads]
    v = qkv[:, num_q_heads + num_k_heads:]

    def rmsn(t, w):
        var = jnp.mean(t * t, axis=-1, keepdims=True)
        return t * lax.rsqrt(var + eps) * w

    q = rmsn(q, q_norm_w)
    k = rmsn(k, k_norm_w)

    def rope(t):
        half = head_dim // 2
        rot = jnp.concatenate([-t[..., half:], t[..., :half]], axis=-1)
        return t * cos[None, None] + rot * sin[None, None]

    q = rope(q)
    k = rope(k)
    k = jnp.repeat(k, num_groups, axis=1)
    v = jnp.repeat(v, num_groups, axis=1)

    s = jnp.einsum("bhqd,bhkd->bhqk", q, k) / math.sqrt(head_dim)
    p = jax.nn.softmax(s, axis=-1)
    o = jnp.einsum("bhqk,bhkd->bhqd", p, v)
    o = jnp.transpose(o, (0, 2, 1, 3)).reshape(B, S, num_q_heads * head_dim)
    return o @ w_out


if __name__ == "__main__":
    # Small OpenELM-style config (TPU-friendly: head_dim = 128, lane-aligned)
    model_dim = 128
    head_dim = 128
    num_q_heads = 4
    num_k_heads = 2          # GQA: num_groups = 2
    B, S = 2, 256
    rope_freq_constant = 10000

    key = jax.random.PRNGKey(0)
    k1, k2, k3, k4, k5 = jax.random.split(key, 5)
    total = (num_q_heads + 2 * num_k_heads) * head_dim

    x = jax.random.normal(k1, (B, S, model_dim), jnp.float32)
    w_qkv = jax.random.normal(k2, (model_dim, total), jnp.float32) * 0.05
    w_out = jax.random.normal(k3, (num_q_heads * head_dim, model_dim),
                              jnp.float32) * 0.05
    q_norm_w = 1.0 + 0.1 * jax.random.normal(k4, (head_dim,), jnp.float32)
    k_norm_w = 1.0 + 0.1 * jax.random.normal(k5, (head_dim,), jnp.float32)

    # RoPE sin/cos tables (rotary-embedding buffers), key_len == seq_len
    inv_freq = 1.0 / (rope_freq_constant **
                      (jnp.arange(0, head_dim, 2, dtype=jnp.float32) / head_dim))
    pos = jnp.arange(S, dtype=jnp.float32)
    theta = jnp.einsum("i,j->ij", pos, inv_freq)
    emb = jnp.concatenate([theta, theta], axis=-1)      # (S, head_dim)
    cos = jnp.cos(emb)
    sin = jnp.sin(emb)

    out = openelm_attention(x, w_qkv, w_out, q_norm_w, k_norm_w, cos, sin,
                            num_q_heads, num_k_heads, head_dim,
                            tile_q=128, tile_kv=256)
    out = jax.block_until_ready(out)

    ref = reference(x, w_qkv, w_out, q_norm_w, k_norm_w, cos, sin,
                    num_q_heads, num_k_heads, head_dim)
    assert out.shape == (B, S, model_dim)
    max_err = float(jnp.max(jnp.abs(out - ref)))
    # bf16 MXU operands (and bf16 exp on v6e/v7x) vs f32 reference.
    assert jnp.allclose(out, ref, atol=5e-2, rtol=5e-2), (
        f"mismatch vs reference, max abs err={max_err}")
    print("KERNEL_OK")
</pallas_src>

<mosaic_0001>
module attributes {stable_mosaic.version = 11 : i64} {
  func.func @kernel(%arg0: i32, %arg1: i32, %arg2: memref<1x128x128xf32, #tpu.memory_space<vmem>>, %arg3: memref<128x1024xbf16, #tpu.memory_space<vmem>>, %arg4: memref<1x128xf32, #tpu.memory_space<vmem>>, %arg5: memref<1x128xf32, #tpu.memory_space<vmem>>, %arg6: memref<128x128xf32, #tpu.memory_space<vmem>>, %arg7: memref<128x128xf32, #tpu.memory_space<vmem>>, %arg8: memref<1x4x128x128xbf16, #tpu.memory_space<vmem>>, %arg9: memref<1x2x128x128xbf16, #tpu.memory_space<vmem>>, %arg10: memref<1x2x128x128xbf16, #tpu.memory_space<vmem>>, %arg11: memref<128x1024xf32, #tpu.memory_space<vmem>>) attributes {dimension_semantics = [#tpu.dimension_semantics<parallel>, #tpu.dimension_semantics<parallel>], iteration_bounds = array<i64: 2, 2>, scalar_prefetch = 0 : i64, scratch_operands = 1 : i64, tpu.core_type = #tpu.core_type<tc>, window_params = [{transform_indices = @transform_0, window_bounds = array<i64: 1, 128, 128>}, {pipeline_mode = #tpu.pipeline_mode<synchronous>, transform_indices = @transform_1, window_bounds = array<i64: 128, 1024>}, {pipeline_mode = #tpu.pipeline_mode<synchronous>, transform_indices = @transform_2, window_bounds = array<i64: 1, 128>}, {pipeline_mode = #tpu.pipeline_mode<synchronous>, transform_indices = @transform_3, window_bounds = array<i64: 1, 128>}, {transform_indices = @transform_4, window_bounds = array<i64: 128, 128>}, {transform_indices = @transform_5, window_bounds = array<i64: 128, 128>}, {transform_indices = @transform_6, window_bounds = array<i64: 1, 4, 128, 128>}, {transform_indices = @transform_7, window_bounds = array<i64: 1, 2, 128, 128>}, {transform_indices = @transform_8, window_bounds = array<i64: 1, 2, 128, 128>}]} {
    %c0 = arith.constant 0 : index
    %c0_0 = arith.constant 0 : index
    %c0_1 = arith.constant 0 : index
    %0 = vector.load %arg2[%c0, %c0_0, %c0_1] : memref<1x128x128xf32, #tpu.memory_space<vmem>>, vector<1x128x128xf32>
    %1 = vector.shape_cast %0 : vector<1x128x128xf32> to vector<128x128xf32>
    %2 = arith.truncf %1 : vector<128x128xf32> to vector<128x128xbf16>
    %c0_2 = arith.constant 0 : index
    %c0_3 = arith.constant 0 : index
    %3 = vector.load %arg6[%c0_2, %c0_3] : memref<128x128xf32, #tpu.memory_space<vmem>>, vector<128x128xf32>
    %c0_4 = arith.constant 0 : index
    %c0_5 = arith.constant 0 : index
    %4 = vector.load %arg7[%c0_4, %c0_5] : memref<128x128xf32, #tpu.memory_space<vmem>>, vector<128x128xf32>
    %c0_6 = arith.constant 0 : index
    %c0_7 = arith.constant 0 : index
    %5 = vector.load %arg4[%c0_6, %c0_7] : memref<1x128xf32, #tpu.memory_space<vmem>>, vector<1x128xf32>
    %c0_8 = arith.constant 0 : index
    %c0_9 = arith.constant 0 : index
    %6 = vector.load %arg5[%c0_8, %c0_9] : memref<1x128xf32, #tpu.memory_space<vmem>>, vector<1x128xf32>
    %c0_10 = arith.constant 0 : index
    %c0_11 = arith.constant 0 : index
    %7 = vector.load %arg3[%c0_10, %c0_11] : memref<128x1024xbf16, #tpu.memory_space<vmem>>, vector<128x1024xbf16>
    %cst = arith.constant dense<0.000000e+00> : vector<128x1024xf32>
    %8 = tpu.matmul %2, %7, %cst {dimension_numbers = #tpu.dot_dimension_numbers<[1], [0], [0], [1], [0, 0, 1, 1], [], []>} : vector<128x128xbf16>, vector<128x1024xbf16>, vector<128x1024xf32> -> vector<128x1024xf32>
    %c0_12 = arith.constant 0 : index
    %c0_13 = arith.constant 0 : index
    %9 = vector.load %arg11[%c0_12, %c0_13] : memref<128x1024xf32, #tpu.memory_space<vmem>>, vector<128x1024xf32>
    tpu.vector_store %arg11[%c0_12, %c0_13], %8 {strides = array<i32>} : memref<128x1024xf32, #tpu.memory_space<vmem>>, vector<128x1024xf32>,
    %c0_14 = arith.constant 0 : index
    %c0_15 = arith.constant 0 : index
    %10 = vector.load %arg11[%c0_14, %c0_15] : memref<128x1024xf32, #tpu.memory_space<vmem>>, vector<128x128xf32>
    %11 = arith.mulf %10, %10 : vector<128x128xf32>
    %cst_16 = arith.constant dense<0.000000e+00> : vector<128xf32>
    %12 = vector.multi_reduction <add>, %11, %cst_16 [1] : vector<128x128xf32> to vector<128xf32>
    %13 = vector.shape_cast %12 : vector<128xf32> to vector<128x1xf32>
    %cst_17 = arith.constant 1.280000e+02 : f32
    %14 = vector.broadcast %cst_17 : f32 to vector<128x1xf32>
    %15 = arith.divf %13, %14 : vector<128x1xf32>
    %cst_18 = arith.constant 9.99999997E-7 : f32
    %16 = vector.broadcast %cst_18 : f32 to vector<128x1xf32>
    %17 = arith.addf %15, %16 : vector<128x1xf32>
    %18 = math.rsqrt %17 : vector<128x1xf32>
    %19 = vector.broadcast %18 : vector<128x1xf32> to vector<128x128xf32>
    %20 = arith.mulf %10, %19 : vector<128x128xf32>
    %21 = vector.broadcast %5 : vector<1x128xf32> to vector<128x128xf32>
    %22 = arith.mulf %20, %21 : vector<128x128xf32>
    %23 = arith.mulf %22, %3 : vector<128x128xf32>
    %c64_i32 = arith.constant 64 : i32
    %24 = tpu.dynamic_rotate %22 by %c64_i32 dim 1 : vector<128x128xf32>, i32 -> vector<128x128xf32>
    %25 = arith.mulf %24, %4 : vector<128x128xf32>
    %26 = arith.addf %23, %25 : vector<128x128xf32>
    %27 = arith.truncf %26 : vector<128x128xf32> to vector<128x128xbf16>
    %c0_19 = arith.constant 0 : index
    %c0_20 = arith.constant 0 : index
    %c0_21 = arith.constant 0 : index
    %c0_22 = arith.constant 0 : index
    %28 = vector.load %arg8[%c0_19, %c0_20, %c0_21, %c0_22] : memref<1x4x128x128xbf16, #tpu.memory_space<vmem>>, vector<1x1x128x128xbf16>
    %29 = vector.shape_cast %28 : vector<1x1x128x128xbf16> to vector<128x128xbf16>
    %30 = vector.shape_cast %27 : vector<128x128xbf16> to vector<1x1x128x128xbf16>
    tpu.vector_store %arg8[%c0_19, %c0_20, %c0_21, %c0_22], %30 {strides = array<i32>} : memref<1x4x128x128xbf16, #tpu.memory_space<vmem>>, vector<1x1x128x128xbf16>,
    %c0_23 = arith.constant 0 : index
    %c128 = arith.constant 128 : index
    %31 = vector.load %arg11[%c0_23, %c128] : memref<128x1024xf32, #tpu.memory_space<vmem>>, vector<128x128xf32>
    %32 = arith.mulf %31, %31 : vector<128x128xf32>
    %cst_24 = arith.constant dense<0.000000e+00> : vector<128xf32>
    %33 = vector.multi_reduction <add>, %32, %cst_24 [1] : vector<128x128xf32> to vector<128xf32>
    %34 = vector.shape_cast %33 : vector<128xf32> to vector<128x1xf32>
    %cst_25 = arith.constant 1.280000e+02 : f32
    %35 = vector.broadcast %cst_25 : f32 to vector<128x1xf32>
    %36 = arith.divf %34, %35 : vector<128x1xf32>
    %cst_26 = arith.constant 9.99999997E-7 : f32
    %37 = vector.broadcast %cst_26 : f32 to vector<128x1xf32>
    %38 = arith.addf %36, %37 : vector<128x1xf32>
    %39 = math.rsqrt %38 : vector<128x1xf32>
    %40 = vector.broadcast %39 : vector<128x1xf32> to vector<128x128xf32>
    %41 = arith.mulf %31, %40 : vector<128x128xf32>
    %42 = vector.broadcast %5 : vector<1x128xf32> to vector<128x128xf32>
    %43 = arith.mulf %41, %42 : vector<128x128xf32>
    %44 = arith.mulf %43, %3 : vector<128x128xf32>
    %c64_i32_27 = arith.constant 64 : i32
    %45 = tpu.dynamic_rotate %43 by %c64_i32_27 dim 1 : vector<128x128xf32>, i32 -> vector<128x128xf32>
    %46 = arith.mulf %45, %4 : vector<128x128xf32>
    %47 = arith.addf %44, %46 : vector<128x128xf32>
    %48 = arith.truncf %47 : vector<128x128xf32> to vector<128x128xbf16>
    %c0_28 = arith.constant 0 : index
    %c1 = arith.constant 1 : index
    %c0_29 = arith.constant 0 : index
    %c0_30 = arith.constant 0 : index
    %49 = vector.load %arg8[%c0_28, %c1, %c0_29, %c0_30] : memref<1x4x128x128xbf16, #tpu.memory_space<vmem>>, vector<1x1x128x128xbf16>
    %50 = vector.shape_cast %49 : vector<1x1x128x128xbf16> to vector<128x128xbf16>
    %51 = vector.shape_cast %48 : vector<128x128xbf16> to vector<1x1x128x128xbf16>
    tpu.vector_store %arg8[%c0_28, %c1, %c0_29, %c0_30], %51 {strides = array<i32>} : memref<1x4x128x128xbf16, #tpu.memory_space<vmem>>, vector<1x1x128x128xbf16>,
    %c0_31 = arith.constant 0 : index
    %c256 = arith.constant 256 : index
    %52 = vector.load %arg11[%c0_31, %c256] : memref<128x1024xf32, #tpu.memory_space<vmem>>, vector<128x128xf32>
    %53 = arith.mulf %52, %52 : vector<128x128xf32>
    %cst_32 = arith.constant dense<0.000000e+00> : vector<128xf32>
    %54 = vector.multi_reduction <add>, %53, %cst_32 [1] : vector<128x128xf32> to vector<128xf32>
    %55 = vector.shape_cast %54 : vector<128xf32> to vector<128x1xf32>
    %cst_33 = arith.constant 1.280000e+02 : f32
    %56 = vector.broadcast %cst_33 : f32 to vector<128x1xf32>
    %57 = arith.divf %55, %56 : vector<128x1xf32>
    %cst_34 = arith.constant 9.99999997E-7 : f32
    %58 = vector.broadcast %cst_34 : f32 to vector<128x1xf32>
    %59 = arith.addf %57, %58 : vector<128x1xf32>
    %60 = math.rsqrt %59 : vector<128x1xf32>
    %61 = vector.broadcast %60 : vector<128x1xf32> to vector<128x128xf32>
    %62 = arith.mulf %52, %61 : vector<128x128xf32>
    %63 = vector.broadcast %5 : vector<1x128xf32> to vector<128x128xf32>
    %64 = arith.mulf %62, %63 : vector<128x128xf32>
    %65 = arith.mulf %64, %3 : vector<128x128xf32>
    %c64_i32_35 = arith.constant 64 : i32
    %66 = tpu.dynamic_rotate %64 by %c64_i32_35 dim 1 : vector<128x128xf32>, i32 -> vector<128x128xf32>
    %67 = arith.mulf %66, %4 : vector<128x128xf32>
    %68 = arith.addf %65, %67 : vector<128x128xf32>
    %69 = arith.truncf %68 : vector<128x128xf32> to vector<128x128xbf16>
    %c0_36 = arith.constant 0 : index
    %c2 = arith.constant 2 : index
    %c0_37 = arith.constant 0 : index
    %c0_38 = arith.constant 0 : index
    %70 = vector.load %arg8[%c0_36, %c2, %c0_37, %c0_38] : memref<1x4x128x128xbf16, #tpu.memory_space<vmem>>, vector<1x1x128x128xbf16>
    %71 = vector.shape_cast %70 : vector<1x1x128x128xbf16> to vector<128x128xbf16>
    %72 = vector.shape_cast %69 : vector<128x128xbf16> to vector<1x1x128x128xbf16>
    tpu.vector_store %arg8[%c0_36, %c2, %c0_37, %c0_38], %72 {strides = array<i32>} : memref<1x4x128x128xbf16, #tpu.memory_space<vmem>>, vector<1x1x128x128xbf16>,
    %c0_39 = arith.constant 0 : index
    %c384 = arith.constant 384 : index
    %73 = vector.load %arg11[%c0_39, %c384] : memref<128x1024xf32, #tpu.memory_space<vmem>>, vector<128x128xf32>
    %74 = arith.mulf %73, %73 : vector<128x128xf32>
    %cst_40 = arith.constant dense<0.000000e+00> : vector<128xf32>
    %75 = vector.multi_reduction <add>, %74, %cst_40 [1] : vector<128x128xf32> to vector<128xf32>
    %76 = vector.shape_cast %75 : vector<128xf32> to vector<128x1xf32>
    %cst_41 = arith.constant 1.280000e+02 : f32
    %77 = vector.broadcast %cst_41 : f32 to vector<128x1xf32>
    %78 = arith.divf %76, %77 : vector<128x1xf32>
    %cst_42 = arith.constant 9.99999997E-7 : f32
    %79 = vector.broadcast %cst_42 : f32 to vector<128x1xf32>
    %80 = arith.addf %78, %79 : vector<128x1xf32>
    %81 = math.rsqrt %80 : vector<128x1xf32>
    %82 = vector.broadcast %81 : vector<128x1xf32> to vector<128x128xf32>
    %83 = arith.mulf %73, %82 : vector<128x128xf32>
    %84 = vector.broadcast %5 : vector<1x128xf32> to vector<128x128xf32>
    %85 = arith.mulf %83, %84 : vector<128x128xf32>
    %86 = arith.mulf %85, %3 : vector<128x128xf32>
    %c64_i32_43 = arith.constant 64 : i32
    %87 = tpu.dynamic_rotate %85 by %c64_i32_43 dim 1 : vector<128x128xf32>, i32 -> vector<128x128xf32>
    %88 = arith.mulf %87, %4 : vector<128x128xf32>
    %89 = arith.addf %86, %88 : vector<128x128xf32>
    %90 = arith.truncf %89 : vector<128x128xf32> to vector<128x128xbf16>
    %c0_44 = arith.constant 0 : index
    %c3 = arith.constant 3 : index
    %c0_45 = arith.constant 0 : index
    %c0_46 = arith.constant 0 : index
    %91 = vector.load %arg8[%c0_44, %c3, %c0_45, %c0_46] : memref<1x4x128x128xbf16, #tpu.memory_space<vmem>>, vector<1x1x128x128xbf16>
    %92 = vector.shape_cast %91 : vector<1x1x128x128xbf16> to vector<128x128xbf16>
    %93 = vector.shape_cast %90 : vector<128x128xbf16> to vector<1x1x128x128xbf16>
    tpu.vector_store %arg8[%c0_44, %c3, %c0_45, %c0_46], %93 {strides = array<i32>} : memref<1x4x128x128xbf16, #tpu.memory_space<vmem>>, vector<1x1x128x128xbf16>,
    %c0_47 = arith.constant 0 : index
    %c512 = arith.constant 512 : index
    %94 = vector.load %arg11[%c0_47, %c512] : memref<128x1024xf32, #tpu.memory_space<vmem>>, vector<128x128xf32>
    %95 = arith.mulf %94, %94 : vector<128x128xf32>
    %cst_48 = arith.constant dense<0.000000e+00> : vector<128xf32>
    %96 = vector.multi_reduction <add>, %95, %cst_48 [1] : vector<128x128xf32> to vector<128xf32>
    %97 = vector.shape_cast %96 : vector<128xf32> to vector<128x1xf32>
    %cst_49 = arith.constant 1.280000e+02 : f32
    %98 = vector.broadcast %cst_49 : f32 to vector<128x1xf32>
    %99 = arith.divf %97, %98 : vector<128x1xf32>
    %cst_50 = arith.constant 9.99999997E-7 : f32
    %100 = vector.broadcast %cst_50 : f32 to vector<128x1xf32>
    %101 = arith.addf %99, %100 : vector<128x1xf32>
    %102 = math.rsqrt %101 : vector<128x1xf32>
    %103 = vector.broadcast %102 : vector<128x1xf32> to vector<128x128xf32>
    %104 = arith.mulf %94, %103 : vector<128x128xf32>
    %105 = vector.broadcast %6 : vector<1x128xf32> to vector<128x128xf32>
    %106 = arith.mulf %104, %105 : vector<128x128xf32>
    %107 = arith.mulf %106, %3 : vector<128x128xf32>
    %c64_i32_51 = arith.constant 64 : i32
    %108 = tpu.dynamic_rotate %106 by %c64_i32_51 dim 1 : vector<128x128xf32>, i32 -> vector<128x128xf32>
    %109 = arith.mulf %108, %4 : vector<128x128xf32>
    %110 = arith.addf %107, %109 : vector<128x128xf32>
    %111 = arith.truncf %110 : vector<128x128xf32> to vector<128x128xbf16>
    %c0_52 = arith.constant 0 : index
    %c0_53 = arith.constant 0 : index
    %c0_54 = arith.constant 0 : index
    %c0_55 = arith.constant 0 : index
    %112 = vector.load %arg9[%c0_52, %c0_53, %c0_54, %c0_55] : memref<1x2x128x128xbf16, #tpu.memory_space<vmem>>, vector<1x1x128x128xbf16>
    %113 = vector.shape_cast %112 : vector<1x1x128x128xbf16> to vector<128x128xbf16>
    %114 = vector.shape_cast %111 : vector<128x128xbf16> to vector<1x1x128x128xbf16>
    tpu.vector_store %arg9[%c0_52, %c0_53, %c0_54, %c0_55], %114 {strides = array<i32>} : memref<1x2x128x128xbf16, #tpu.memory_space<vmem>>, vector<1x1x128x128xbf16>,
    %c0_56 = arith.constant 0 : index
    %c768 = arith.constant 768 : index
    %115 = vector.load %arg11[%c0_56, %c768] : memref<128x1024xf32, #tpu.memory_space<vmem>>, vector<128x128xf32>
    %116 = arith.truncf %115 : vector<128x128xf32> to vector<128x128xbf16>
    %c0_57 = arith.constant 0 : index
    %c0_58 = arith.constant 0 : index
    %c0_59 = arith.constant 0 : index
    %c0_60 = arith.constant 0 : index
    %117 = vector.load %arg10[%c0_57, %c0_58, %c0_59, %c0_60] : memref<1x2x128x128xbf16, #tpu.memory_space<vmem>>, vector<1x1x128x128xbf16>
    %118 = vector.shape_cast %117 : vector<1x1x128x128xbf16> to vector<128x128xbf16>
    %119 = vector.shape_cast %116 : vector<128x128xbf16> to vector<1x1x128x128xbf16>
    tpu.vector_store %arg10[%c0_57, %c0_58, %c0_59, %c0_60], %119 {strides = array<i32>} : memref<1x2x128x128xbf16, #tpu.memory_space<vmem>>, vector<1x1x128x128xbf16>,
    %c0_61 = arith.constant 0 : index
    %c640 = arith.constant 640 : index
    %120 = vector.load %arg11[%c0_61, %c640] : memref<128x1024xf32, #tpu.memory_space<vmem>>, vector<128x128xf32>
    %121 = arith.mulf %120, %120 : vector<128x128xf32>
    %cst_62 = arith.constant dense<0.000000e+00> : vector<128xf32>
    %122 = vector.multi_reduction <add>, %121, %cst_62 [1] : vector<128x128xf32> to vector<128xf32>
    %123 = vector.shape_cast %122 : vector<128xf32> to vector<128x1xf32>
    %cst_63 = arith.constant 1.280000e+02 : f32
    %124 = vector.broadcast %cst_63 : f32 to vector<128x1xf32>
    %125 = arith.divf %123, %124 : vector<128x1xf32>
    %cst_64 = arith.constant 9.99999997E-7 : f32
    %126 = vector.broadcast %cst_64 : f32 to vector<128x1xf32>
    %127 = arith.addf %125, %126 : vector<128x1xf32>
    %128 = math.rsqrt %127 : vector<128x1xf32>
    %129 = vector.broadcast %128 : vector<128x1xf32> to vector<128x128xf32>
    %130 = arith.mulf %120, %129 : vector<128x128xf32>
    %131 = vector.broadcast %6 : vector<1x128xf32> to vector<128x128xf32>
    %132 = arith.mulf %130, %131 : vector<128x128xf32>
    %133 = arith.mulf %132, %3 : vector<128x128xf32>
    %c64_i32_65 = arith.constant 64 : i32
    %134 = tpu.dynamic_rotate %132 by %c64_i32_65 dim 1 : vector<128x128xf32>, i32 -> vector<128x128xf32>
    %135 = arith.mulf %134, %4 : vector<128x128xf32>
    %136 = arith.addf %133, %135 : vector<128x128xf32>
    %137 = arith.truncf %136 : vector<128x128xf32> to vector<128x128xbf16>
    %c0_66 = arith.constant 0 : index
    %c1_67 = arith.constant 1 : index
    %c0_68 = arith.constant 0 : index
    %c0_69 = arith.constant 0 : index
    %138 = vector.load %arg9[%c0_66, %c1_67, %c0_68, %c0_69] : memref<1x2x128x128xbf16, #tpu.memory_space<vmem>>, vector<1x1x128x128xbf16>
    %139 = vector.shape_cast %138 : vector<1x1x128x128xbf16> to vector<128x128xbf16>
    %140 = vector.shape_cast %137 : vector<128x128xbf16> to vector<1x1x128x128xbf16>
    tpu.vector_store %arg9[%c0_66, %c1_67, %c0_68, %c0_69], %140 {strides = array<i32>} : memref<1x2x128x128xbf16, #tpu.memory_space<vmem>>, vector<1x1x128x128xbf16>,
    %c0_70 = arith.constant 0 : index
    %c896 = arith.constant 896 : index
    %141 = vector.load %arg11[%c0_70, %c896] : memref<128x1024xf32, #tpu.memory_space<vmem>>, vector<128x128xf32>
    %142 = arith.truncf %141 : vector<128x128xf32> to vector<128x128xbf16>
    %c0_71 = arith.constant 0 : index
    %c1_72 = arith.constant 1 : index
    %c0_73 = arith.constant 0 : index
    %c0_74 = arith.constant 0 : index
    %143 = vector.load %arg10[%c0_71, %c1_72, %c0_73, %c0_74] : memref<1x2x128x128xbf16, #tpu.memory_space<vmem>>, vector<1x1x128x128xbf16>
    %144 = vector.shape_cast %143 : vector<1x1x128x128xbf16> to vector<128x128xbf16>
    %145 = vector.shape_cast %142 : vector<128x128xbf16> to vector<1x1x128x128xbf16>
    tpu.vector_store %arg10[%c0_71, %c1_72, %c0_73, %c0_74], %145 {strides = array<i32>} : memref<1x2x128x128xbf16, #tpu.memory_space<vmem>>, vector<1x1x128x128xbf16>,
    return
  }
  func.func @transform_0(%arg0: i32, %arg1: i32) -> (i32, i32, i32) {
    %c0_i32 = arith.constant 0 : i32
    %c0_i32_0 = arith.constant 0 : i32
    return %arg0, %arg1, %c0_i32 : i32, i32, i32
  }
  func.func @transform_1(%arg0: i32, %arg1: i32) -> (i32, i32) {
    %c0_i32 = arith.constant 0 : i32
    %c0_i32_0 = arith.constant 0 : i32
    %c0_i32_1 = arith.constant 0 : i32
    return %c0_i32, %c0_i32_0 : i32, i32
  }
  func.func @transform_2(%arg0: i32, %arg1: i32) -> (i32, i32) {
    %c0_i32 = arith.constant 0 : i32
    %c0_i32_0 = arith.constant 0 : i32
    %c0_i32_1 = arith.constant 0 : i32
    return %c0_i32, %c0_i32_0 : i32, i32
  }
  func.func @transform_3(%arg0: i32, %arg1: i32) -> (i32, i32) {
    %c0_i32 = arith.constant 0 : i32
    %c0_i32_0 = arith.constant 0 : i32
    %c0_i32_1 = arith.constant 0 : i32
    return %c0_i32, %c0_i32_0 : i32, i32
  }
  func.func @transform_4(%arg0: i32, %arg1: i32) -> (i32, i32) {
    %c0_i32 = arith.constant 0 : i32
    %c0_i32_0 = arith.constant 0 : i32
    return %arg1, %c0_i32 : i32, i32
  }
  func.func @transform_5(%arg0: i32, %arg1: i32) -> (i32, i32) {
    %c0_i32 = arith.constant 0 : i32
    %c0_i32_0 = arith.constant 0 : i32
    return %arg1, %c0_i32 : i32, i32
  }
  func.func @transform_6(%arg0: i32, %arg1: i32) -> (i32, i32, i32, i32) {
    %c0_i32 = arith.constant 0 : i32
    %c0_i32_0 = arith.constant 0 : i32
    %c0_i32_1 = arith.constant 0 : i32
    return %arg0, %c0_i32, %arg1, %c0_i32_0 : i32, i32, i32, i32
  }
  func.func @transform_7(%arg0: i32, %arg1: i32) -> (i32, i32, i32, i32) {
    %c0_i32 = arith.constant 0 : i32
    %c0_i32_0 = arith.constant 0 : i32
    %c0_i32_1 = arith.constant 0 : i32
    return %arg0, %c0_i32, %arg1, %c0_i32_0 : i32, i32, i32, i32
  }
  func.func @transform_8(%arg0: i32, %arg1: i32) -> (i32, i32, i32, i32) {
    %c0_i32 = arith.constant 0 : i32
    %c0_i32_0 = arith.constant 0 : i32
    %c0_i32_1 = arith.constant 0 : i32
    return %arg0, %c0_i32, %arg1, %c0_i32_0 : i32, i32, i32, i32
  }
}

</mosaic_0001>

<llo_original>
// kernel: tpu_custom_call.1
$region0: #{tpu_custom_call.1}
  #allocation0 [shape = 'u32[]', space=smem, size = 0x4, offset = 0x4, fixed_abs, tag = 'smem constant byte address 0x4 - core index']
  #allocation1 [shape = 'u32[144,128]{1,0:T(1,128)}', space=vmem, size = 0x12000, scoped, tag = 'internal scratch']
  #allocation2 [shape = 'f32[128,1024]{1,0:T(8,128)}', space=vmem, size = 0x80000, scoped, tag = 'scratch operand']
  #allocation17 [shape = 's32[]', space=sflag, size = 0x4, offset = 0, fixed_abs, tag = 'sflag constant byte address 0x0 - dummy sync flag']
  #allocation19 [shape = 's32[]', space=sflag, size = 0x4, offset = 0, fixed_abs, tag = 'sflag constant byte address 0x0 - dummy sync flag']
  #allocation21 [shape = 's32[]', space=sflag, size = 0x4, offset = 0, fixed_abs, tag = 'sflag constant byte address 0x0 - dummy sync flag']
  %s0 = inlined_call_operand.hbm [shape: f32[2,256,128], index: 0, kind: input, shape index: {}]
  %s1 = inlined_call_operand.hbm [shape: bf16[128,1024], index: 1, kind: input, shape index: {}]
  %s2 = inlined_call_operand.hbm [shape: f32[1,128], index: 2, kind: input, shape index: {}]
  %s3 = inlined_call_operand.hbm [shape: f32[1,128], index: 3, kind: input, shape index: {}]
  %s4 = inlined_call_operand.hbm [shape: f32[256,128], index: 4, kind: input, shape index: {}]
  %s5 = inlined_call_operand.hbm [shape: f32[256,128], index: 5, kind: input, shape index: {}]
  %s6 = inlined_call_operand.hbm [shape: bf16[2,4,256,128], index: 6, kind: output, shape index: {0}]
  %s7 = inlined_call_operand.hbm [shape: bf16[2,2,256,128], index: 7, kind: output, shape index: {1}]
  %s8 = inlined_call_operand.hbm [shape: bf16[2,2,256,128], index: 8, kind: output, shape index: {2}]
  %9 = xla_tuple %s6, %s7, %s8
  %s10 = sld [smem:[#allocation0]]
  $region97: #{tpu_custom_call.1} parent=0
    _
  %s12 = ssub.s32 1, %s10
  %s13 = scalar_select 0, %s12, %s10
  $region1: #{tpu_custom_call.1} parent=0
    #allocation3 [shape = 'u8[131072]{0}', space=vmem, size = 0x20000, scoped, tag = 'input window, operand 0']
    #allocation4 [shape = 's32[2]{0}', space=sflag, size = 0x8, scoped, tag = 'scoped memory for tpu_custom_call.1']
    #allocation5 [shape = 's32[2]{0}', space=sflag, size = 0x8, scoped, tag = 'scoped memory for tpu_custom_call.1']
    #allocation6 [shape = 'u8[262144]{0}', space=vmem, size = 0x40000, scoped, tag = 'input window, operand 1, single buffered']
    #allocation7 [shape = 's32[1]{0}', space=sflag, size = 0x4, scoped, tag = 'scoped memory for tpu_custom_call.1']
    #allocation8 [shape = 'u8[512]{0}', space=vmem, size = 0x400, scoped, tag = 'input window, operand 2, single buffered']
    #allocation9 [shape = 'u8[512]{0}', space=vmem, size = 0x400, scoped, tag = 'input window, operand 3, single buffered']
    #allocation10 [shape = 's32[1]{0}', space=sflag, size = 0x4, scoped, tag = 'scoped memory for tpu_custom_call.1']
    #allocation11 [shape = 'u8[131072]{0}', space=vmem, size = 0x20000, scoped, tag = 'input window, operand 4']
    #allocation12 [shape = 'u8[131072]{0}', space=vmem, size = 0x20000, scoped, tag = 'input window, operand 5']
    #allocation13 [shape = 'u8[262144]{0}', space=vmem, size = 0x40000, scoped, tag = 'output window, operand 0']
    #allocation14 [shape = 'u8[131072]{0}', space=vmem, size = 0x20000, scoped, tag = 'output window, operand 1']
    #allocation15 [shape = 's32[2]{0}', space=sflag, size = 0x8, scoped, tag = 'scoped memory for tpu_custom_call.1']
    #allocation16 [shape = 'u8[131072]{0}', space=vmem, size = 0x20000, scoped, tag = 'output window, operand 2']
    %14 = vsyncpa [#allocation4], 0
    %s15 = scalar_lea.sflag [#allocation4], 1
    %16 = vsyncpa %s15, 0
    %17 = vsyncpa [#allocation7], 0
    %18 = vsyncpa [#allocation10], 0
    %19 = vsyncpa [#allocation5], 0
    %s20 = scalar_lea.sflag [#allocation5], 1
    %21 = vsyncpa %s20, 0
    %22 = vsyncpa [#allocation15], 0
    %s23 = scalar_lea.sflag [#allocation15], 1
    %24 = vsyncpa %s23, 0
    loop: start=0, step=1, limit=6
    $region2: #{tpu_custom_call.1} parent=1 // loop_pre_header
      _
    $region3: #{tpu_custom_call.1} parent=1 // loop_header
      %s26 = sphi 0, %s30
      %p27 = scmp.ge.s32.totalorder %s26, 6
      %s33 = sphi 0, %s45
      %s34 = sphi 0, %s41
      %s35 = sphi 0, %s33
      %s36 = sphi 0, %s34
      %s37 = sphi 0, %s35
      %s38 = sphi 0, %s36
      %s50 = sphi 0, %s52
      %s53 = sphi 0, %s50
      %s54 = sphi 0, %s53
      %s70 = sphi 0, %s54
      %s74 = sphi 0, %s74
      %s76 = sphi 0, %s74
      %s77 = sphi 0, %s76
      %s91 = sphi 0, %s77
      %s95 = sphi 0, %s95
      %s97 = sphi 0, %s95
      %s98 = sphi 0, %s97
      %s112 = sphi 0, %s98
      %s116 = sphi 0, %s116
      %s118 = sphi 0, %s116
      %s119 = sphi 0, %s118
      %s133 = sphi 0, %s119
      %s139 = sphi 0, %s141
      %s142 = sphi 0, %s139
      %s143 = sphi 0, %s142
      %s159 = sphi 0, %s143
      %s165 = sphi 0, %s167
      %s168 = sphi 0, %s165
      %s169 = sphi 0, %s168
      %s185 = sphi 0, %s169
      %s193 = sphi 0, %s195
      %s196 = sphi 0, %s193
      %s197 = sphi 0, %s196
      %s213 = sphi 0, %s197
      %s221 = sphi 0, %s223
      %s224 = sphi 0, %s221
      %s225 = sphi 0, %s224
      %s241 = sphi 0, %s225
      %s249 = sphi 0, %s251
      %s252 = sphi 0, %s249
      %s253 = sphi 0, %s252
      %s269 = sphi 0, %s253
    $region4: #{tpu_custom_call.1} parent=1 // loop_header_branch
      %29 = sbr.rel (%p27) target = $region8
    $region5: #{tpu_custom_call.1} parent=1 // loop_body
      %s31 = ssub.s32 %s26, 1
      %s32 = ssub.s32 %s26, 2
      %s39 = sadd.s32 1, %s34
      %p40 = scmp.ge.s32.totalorder %s39, 2
      %s41 = scalar_select %p40, 0, %s39
      %s42 = sadd.s32 1, %s33
      %s43 = scalar_select %p40, %s42, %s33
      %p44 = scmp.ge.s32.totalorder %s43, 2
      %s45 = scalar_select %p44, 0, %s43
      %s46 = ssub.s32 %s33, %s45
      %s47 = ssub.s32 %s34, %s41
      %s48 = sor.u32 %s46, %s47
      %p49 = scmp.eq.s32.totalorder %s48, 0
      %s51 = sadd.s32 %s50, 1
      %s52 = scalar_select %p49, %s50, %s51
      %p55 = pneg %p49
      %p56 = scmp.eq.s32.totalorder %s26, 3
      %p57 = por %p55, %p56
      %p58 = scmp.ne.s32.totalorder %s50, %s53
      %p59 = scmp.eq.s32.totalorder %s26, 0
      %p60 = por %p58, %p59
      %p61 = scmp.ne.s32.totalorder %s50, %s53
      %p62 = scmp.eq.s32.totalorder %s31, 3
      %p63 = por %p61, %p62
      %p64 = scmp.ne.s32.totalorder %s53, %s54
      %p65 = scmp.eq.s32.totalorder %s31, 0
      %p66 = por %p64, %p65
      %p67 = scmp.ne.s32.totalorder %s53, %s54
      %p68 = scmp.eq.s32.totalorder %s32, 3
      %p69 = por %p67, %p68
      %p71 = scmp.ne.s32.totalorder %s54, %s70
      %p72 = scmp.eq.s32.totalorder %s32, 0
      %p73 = por %p71, %p72
      %s75 = sadd.s32 %s74, 1
      %p78 = scmp.eq.s32.totalorder %s26, 3
      %p79 = scmp.ne.s32.totalorder %s74, %s76
      %p80 = scmp.eq.s32.totalorder %s26, 0
      %p81 = por %p79, %p80
      %p82 = scmp.ne.s32.totalorder %s74, %s76
      %p83 = scmp.eq.s32.totalorder %s31, 3
      %p84 = por %p82, %p83
      %p85 = scmp.ne.s32.totalorder %s76, %s77
      %p86 = scmp.eq.s32.totalorder %s31, 0
      %p87 = por %p85, %p86
      %p88 = scmp.ne.s32.totalorder %s76, %s77
      %p89 = scmp.eq.s32.totalorder %s32, 3
      %p90 = por %p88, %p89
      %p92 = scmp.ne.s32.totalorder %s77, %s91
      %p93 = scmp.eq.s32.totalorder %s32, 0
      %p94 = por %p92, %p93
      %s96 = sadd.s32 %s95, 1
      %p99 = scmp.eq.s32.totalorder %s26, 3
      %p100 = scmp.ne.s32.totalorder %s95, %s97
      %p101 = scmp.eq.s32.totalorder %s26, 0
      %p102 = por %p100, %p101
      %p103 = scmp.ne.s32.totalorder %s95, %s97
      %p104 = scmp.eq.s32.totalorder %s31, 3
      %p105 = por %p103, %p104
      %p106 = scmp.ne.s32.totalorder %s97, %s98
      %p107 = scmp.eq.s32.totalorder %s31, 0
      %p108 = por %p106, %p107
      %p109 = scmp.ne.s32.totalorder %s97, %s98
      %p110 = scmp.eq.s32.totalorder %s32, 3
      %p111 = por %p109, %p110
      %p113 = scmp.ne.s32.totalorder %s98, %s112
      %p114 = scmp.eq.s32.totalorder %s32, 0
      %p115 = por %p113, %p114
      %s117 = sadd.s32 %s116, 1
      %p120 = scmp.eq.s32.totalorder %s26, 3
      %p121 = scmp.ne.s32.totalorder %s116, %s118
      %p122 = scmp.eq.s32.totalorder %s26, 0
      %p123 = por %p121, %p122
      %p124 = scmp.ne.s32.totalorder %s116, %s118
      %p125 = scmp.eq.s32.totalorder %s31, 3
      %p126 = por %p124, %p125
      %p127 = scmp.ne.s32.totalorder %s118, %s119
      %p128 = scmp.eq.s32.totalorder %s31, 0
      %p129 = por %p127, %p128
      %p130 = scmp.ne.s32.totalorder %s118, %s119
      %p131 = scmp.eq.s32.totalorder %s32, 3
      %p132 = por %p130, %p131
      %p134 = scmp.ne.s32.totalorder %s119, %s133
      %p135 = scmp.eq.s32.totalorder %s32, 0
      %p136 = por %p134, %p135
      %s137 = ssub.s32 %s34, %s41
      %p138 = scmp.eq.s32.totalorder %s137, 0
      %s140 = sadd.s32 %s139, 1
      %s141 = scalar_select %p138, %s139, %s140
      %p144 = pneg %p138
      %p145 = scmp.eq.s32.totalorder %s26, 3
      %p146 = por %p144, %p145
      %p147 = scmp.ne.s32.totalorder %s139, %s142
      %p148 = scmp.eq.s32.totalorder %s26, 0
      %p149 = por %p147, %p148
      %p150 = scmp.ne.s32.totalorder %s139, %s142
      %p151 = scmp.eq.s32.totalorder %s31, 3
      %p152 = por %p150, %p151
      %p153 = scmp.ne.s32.totalorder %s142, %s143
      %p154 = scmp.eq.s32.totalorder %s31, 0
      %p155 = por %p153, %p154
      %p156 = scmp.ne.s32.totalorder %s142, %s143
      %p157 = scmp.eq.s32.totalorder %s32, 3
      %p158 = por %p156, %p157
      %p160 = scmp.ne.s32.totalorder %s143, %s159
      %p161 = scmp.eq.s32.totalorder %s32, 0
      %p162 = por %p160, %p161
      %s163 = ssub.s32 %s34, %s41
      %p164 = scmp.eq.s32.totalorder %s163, 0
      %s166 = sadd.s32 %s165, 1
      %s167 = scalar_select %p164, %s165, %s166
      %p170 = pneg %p164
      %p171 = scmp.eq.s32.totalorder %s26, 3
      %p172 = por %p170, %p171
      %p173 = scmp.ne.s32.totalorder %s165, %s168
      %p174 = scmp.eq.s32.totalorder %s26, 0
      %p175 = por %p173, %p174
      %p176 = scmp.ne.s32.totalorder %s165, %s168
      %p177 = scmp.eq.s32.totalorder %s31, 3
      %p178 = por %p176, %p177
      %p179 = scmp.ne.s32.totalorder %s168, %s169
      %p180 = scmp.eq.s32.totalorder %s31, 0
      %p181 = por %p179, %p180
      %p182 = scmp.ne.s32.totalorder %s168, %s169
      %p183 = scmp.eq.s32.totalorder %s32, 3
      %p184 = por %p182, %p183
      %p186 = scmp.ne.s32.totalorder %s169, %s185
      %p187 = scmp.eq.s32.totalorder %s32, 0
      %p188 = por %p186, %p187
      %s189 = ssub.s32 %s33, %s45
      %s190 = ssub.s32 %s34, %s41
      %s191 = sor.u32 %s189, %s190
      %p192 = scmp.eq.s32.totalorder %s191, 0
      %s194 = sadd.s32 %s193, 1
      %s195 = scalar_select %p192, %s193, %s194
      %p198 = pneg %p192
      %p199 = scmp.eq.s32.totalorder %s26, 3
      %p200 = por %p198, %p199
      %p201 = scmp.ne.s32.totalorder %s193, %s196
      %p202 = scmp.eq.s32.totalorder %s26, 0
      %p203 = por %p201, %p202
      %p204 = scmp.ne.s32.totalorder %s193, %s196
      %p205 = scmp.eq.s32.totalorder %s31, 3
      %p206 = por %p204, %p205
      %p207 = scmp.ne.s32.totalorder %s196, %s197
      %p208 = scmp.eq.s32.totalorder %s31, 0
      %p209 = por %p207, %p208
      %p210 = scmp.ne.s32.totalorder %s196, %s197
      %p211 = scmp.eq.s32.totalorder %s32, 3
      %p212 = por %p210, %p211
      %p214 = scmp.ne.s32.totalorder %s197, %s213
      %p215 = scmp.eq.s32.totalorder %s32, 0
      %p216 = por %p214, %p215
      %s217 = ssub.s32 %s33, %s45
      %s218 = ssub.s32 %s34, %s41
      %s219 = sor.u32 %s217, %s218
      %p220 = scmp.eq.s32.totalorder %s219, 0
      %s222 = sadd.s32 %s221, 1
      %s223 = scalar_select %p220, %s221, %s222
      %p226 = pneg %p220
      %p227 = scmp.eq.s32.totalorder %s26, 3
      %p228 = por %p226, %p227
      %p229 = scmp.ne.s32.totalorder %s221, %s224
      %p230 = scmp.eq.s32.totalorder %s26, 0
      %p231 = por %p229, %p230
      %p232 = scmp.ne.s32.totalorder %s221, %s224
      %p233 = scmp.eq.s32.totalorder %s31, 3
      %p234 = por %p232, %p233
      %p235 = scmp.ne.s32.totalorder %s224, %s225
      %p236 = scmp.eq.s32.totalorder %s31, 0
      %p237 = por %p235, %p236
      %p238 = scmp.ne.s32.totalorder %s224, %s225
      %p239 = scmp.eq.s32.totalorder %s32, 3
      %p240 = por %p238, %p239
      %p242 = scmp.ne.s32.totalorder %s225, %s241
      %p243 = scmp.eq.s32.totalorder %s32, 0
      %p244 = por %p242, %p243
      %s245 = ssub.s32 %s33, %s45
      %s246 = ssub.s32 %s34, %s41
      %s247 = sor.u32 %s245, %s246
      %p248 = scmp.eq.s32.totalorder %s247, 0
      %s250 = sadd.s32 %s249, 1
      %s251 = scalar_select %p248, %s249, %s250
      %p254 = pneg %p248
      %p255 = scmp.eq.s32.totalorder %s26, 3
      %p256 = por %p254, %p255
      %p257 = scmp.ne.s32.totalorder %s249, %s252
      %p258 = scmp.eq.s32.totalorder %s26, 0
      %p259 = por %p257, %p258
      %p260 = scmp.ne.s32.totalorder %s249, %s252
      %p261 = scmp.eq.s32.totalorder %s31, 3
      %p262 = por %p260, %p261
      %p263 = scmp.ne.s32.totalorder %s252, %s253
      %p264 = scmp.eq.s32.totalorder %s31, 0
      %p265 = por %p263, %p264
      %p266 = scmp.ne.s32.totalorder %s252, %s253
      %p267 = scmp.eq.s32.totalorder %s32, 3
      %p268 = por %p266, %p267
      %p270 = scmp.ne.s32.totalorder %s253, %s269
      %p271 = scmp.eq.s32.totalorder %s32, 0
      %p272 = por %p270, %p271
      %p273 = scmp.le.s32.totalorder 1, %s26
      %p274 = scmp.lt.s32.totalorder %s26, 5
      %p275 = pnand %p273, %p274
      %p276 = pneg %p275
      // Predicated region
      $region9: #{tpu_custom_call.1} parent=5 // pred_check
        _
      $region10: #{tpu_custom_call.1} parent=5 // pred_check_branch
        %278 = sbr.rel (%p275) target = $region12
      $region11: #{tpu_custom_call.1} parent=5 // pred_region
        %s279 = ssub.s32 %s26, 1
        // Predicated region
        $region13: #{tpu_custom_call.1} parent=11 // pred_check
          %p280 = pneg %p87
        $region14: #{tpu_custom_call.1} parent=11 // pred_check_branch
          %282 = sbr.rel (%p280) target = $region16
        $region15: #{tpu_custom_call.1} parent=11 // pred_region
          %s284 = ssub.s32 8192, 8192
          %285 = vsyncadd [#allocation7], %s284
          %s286 = sshll.u32 [#allocation6], 4
          %s287 = int_to_ptr.vmem [resolvable:$true] %s286
          %292 = dma.hbm_to_vmem [thread:$0]  %s1, 8192, %s287, [#allocation7], 512, 512, 32
        $region16: #{tpu_custom_call.1} parent=11 // pred_fallthru
          _
        // Predicated region
        $region17: #{tpu_custom_call.1} parent=11 // pred_check
          %p293 = pneg %p108
        $region18: #{tpu_custom_call.1} parent=11 // pred_check_branch
          %295 = sbr.rel (%p293) target = $region20
        $region19: #{tpu_custom_call.1} parent=11 // pred_region
          %s297 = ssub.s32 16, 16
          %298 = vsyncadd [#allocation7], %s297
          %s300 = sshll.u32 [#allocation8], 4
          %s301 = int_to_ptr.vmem [resolvable:$true] %s300
          %303 = dma.hbm_to_vmem [thread:$0]  %s2, 16, %s301, [#allocation7]
        $region20: #{tpu_custom_call.1} parent=11 // pred_fallthru
          _
        // Predicated region
        $region21: #{tpu_custom_call.1} parent=11 // pred_check
          %p304 = pneg %p129
        $region22: #{tpu_custom_call.1} parent=11 // pred_check_branch
          %306 = sbr.rel (%p304) target = $region24
        $region23: #{tpu_custom_call.1} parent=11 // pred_region
          %s308 = ssub.s32 16, 16
          %309 = vsyncadd [#allocation10], %s308
          %s311 = sshll.u32 [#allocation9], 4
          %s312 = int_to_ptr.vmem [resolvable:$true] %s311
          %314 = dma.hbm_to_vmem [thread:$0]  %s3, 16, %s312, [#allocation10]
        $region24: #{tpu_custom_call.1} parent=11 // pred_fallthru
          _
      $region12: #{tpu_custom_call.1} parent=5 // pred_fallthru
        _
      %p315 = scmp.lt.s32.totalorder %s26, 4
      // Predicated region
      $region25: #{tpu_custom_call.1} parent=5 // pred_check
        %p316 = pneg %p315
      $region26: #{tpu_custom_call.1} parent=5 // pred_check_branch
        %318 = sbr.rel (%p316) target = $region28
      $region27: #{tpu_custom_call.1} parent=5 // pred_region
        // Predicated region
        $region29: #{tpu_custom_call.1} parent=27 // pred_check
          %p319 = pneg %p60
        $region30: #{tpu_custom_call.1} parent=27 // pred_check_branch
          %321 = sbr.rel (%p319) target = $region32
        $region31: #{tpu_custom_call.1} parent=27 // pred_region
          %s322 = sand.u32 %s26, 1
          %s323 = scalar_lea.sflag [#allocation4], %s322
          %s324 = sand.u32 %s50, 1
          %s325 = smul.addr %s324, 128
          %s326 = scalar_lea.vmem [#allocation3], %s325
          %s327 = smul.u32 16, %s34
          %s329 = ssub.s32 2048, 2048
          %330 = vsyncadd %s323, %s329
          %s331 = smul.addr %s33, 32
          %s332 = sadd.s32 %s327, %s331
          %s333 = smul.addr %s332, 128
          %s334 = scalar_lea.hbm %s0, %s333
          %s335 = sshll.u32 %s326, 4
          %s336 = int_to_ptr.vmem [resolvable:$true] %s335
          %341 = dma.hbm_to_vmem [thread:$0]  %s334, 2048, %s336, %s323, 128, 128, 8
        $region32: #{tpu_custom_call.1} parent=27 // pred_fallthru
          _
        // Predicated region
        $region33: #{tpu_custom_call.1} parent=27 // pred_check
          %p342 = pneg %p149
        $region34: #{tpu_custom_call.1} parent=27 // pred_check_branch
          %344 = sbr.rel (%p342) target = $region36
        $region35: #{tpu_custom_call.1} parent=27 // pred_region
          %s345 = sand.u32 %s26, 1
          %s346 = scalar_lea.sflag [#allocation4], %s345
          %s347 = sand.u32 %s139, 1
          %s348 = smul.addr %s347, 128
          %s349 = scalar_lea.vmem [#allocation11], %s348
          %s350 = smul.u32 16, %s34
          %s352 = ssub.s32 2048, 2048
          %353 = vsyncadd %s346, %s352
          %s354 = smul.addr %s350, 128
          %s355 = scalar_lea.hbm %s4, %s354
          %s356 = sshll.u32 %s349, 4
          %s357 = int_to_ptr.vmem [resolvable:$true] %s356
          %362 = dma.hbm_to_vmem [thread:$0]  %s355, 2048, %s357, %s346, 128, 128, 8
        $region36: #{tpu_custom_call.1} parent=27 // pred_fallthru
          _
        // Predicated region
        $region37: #{tpu_custom_call.1} parent=27 // pred_check
          %p363 = pneg %p175
        $region38: #{tpu_custom_call.1} parent=27 // pred_check_branch
          %365 = sbr.rel (%p363) target = $region40
        $region39: #{tpu_custom_call.1} parent=27 // pred_region
          %s366 = sand.u32 %s26, 1
          %s367 = scalar_lea.sflag [#allocation4], %s366
          %s368 = sand.u32 %s165, 1
          %s369 = smul.addr %s368, 128
          %s370 = scalar_lea.vmem [#allocation12], %s369
          %s371 = smul.u32 16, %s34
          %s373 = ssub.s32 2048, 2048
          %374 = vsyncadd %s367, %s373
          %s375 = smul.addr %s371, 128
          %s376 = scalar_lea.hbm %s5, %s375
          %s377 = sshll.u32 %s370, 4
          %s378 = int_to_ptr.vmem [resolvable:$true] %s377
          %383 = dma.hbm_to_vmem [thread:$0]  %s376, 2048, %s378, %s367, 128, 128, 8
        $region40: #{tpu_custom_call.1} parent=27 // pred_fallthru
          _
      $region28: #{tpu_custom_call.1} parent=5 // pred_fallthru
        _
      %p384 = scmp.le.s32.totalorder 1, %s26
      %p385 = scmp.lt.s32.totalorder %s26, 5
      %p386 = pnand %p384, %p385
      %p387 = pneg %p386
      // Predicated region
      $region41: #{tpu_custom_call.1} parent=5 // pred_check
        _
      $region42: #{tpu_custom_call.1} parent=5 // pred_check_branch
        %389 = sbr.rel (%p386) target = $region44
      $region43: #{tpu_custom_call.1} parent=5 // pred_region
        %s390 = ssub.s32 %s26, 1
        %s391 = sand.u32 %s31, 1
        %s392 = scalar_lea.sflag [#allocation4], %s391
        %s393 = sand.u32 %s53, 1
        %s394 = smul.addr %s393, 128
        %s395 = scalar_lea.vmem [#allocation3], %s394
        // Predicated region
        $region45: #{tpu_custom_call.1} parent=43 // pred_check
          %p396 = pneg %p66
        $region46: #{tpu_custom_call.1} parent=43 // pred_check_branch
          %398 = sbr.rel (%p396) target = $region48
        $region47: #{tpu_custom_call.1} parent=43 // pred_region
          %399 = dma.done %s392, 2048
        $region48: #{tpu_custom_call.1} parent=43 // pred_fallthru
          _
        // Predicated region
        $region49: #{tpu_custom_call.1} parent=43 // pred_check
          %p400 = pneg %p87
        $region50: #{tpu_custom_call.1} parent=43 // pred_check_branch
          %402 = sbr.rel (%p400) target = $region52
        $region51: #{tpu_custom_call.1} parent=43 // pred_region
          %403 = dma.done [#allocation7], 8192
        $region52: #{tpu_custom_call.1} parent=43 // pred_fallthru
          _
        // Predicated region
        $region53: #{tpu_custom_call.1} parent=43 // pred_check
          %p404 = pneg %p108
        $region54: #{tpu_custom_call.1} parent=43 // pred_check_branch
          %406 = sbr.rel (%p404) target = $region56
        $region55: #{tpu_custom_call.1} parent=43 // pred_region
          %407 = dma.done [#allocation7], 16
        $region56: #{tpu_custom_call.1} parent=43 // pred_fallthru
          _
        // Predicated region
        $region57: #{tpu_custom_call.1} parent=43 // pred_check
          %p408 = pneg %p129
        $region58: #{tpu_custom_call.1} parent=43 // pred_check_branch
          %410 = sbr.rel (%p408) target = $region60
        $region59: #{tpu_custom_call.1} parent=43 // pred_region
          %411 = dma.done [#allocation10], 16
        $region60: #{tpu_custom_call.1} parent=43 // pred_fallthru
          _
        %s412 = sand.u32 %s31, 1
        %s413 = scalar_lea.sflag [#allocation4], %s412
        %s414 = sand.u32 %s142, 1
        %s415 = smul.addr %s414, 128
        %s416 = scalar_lea.vmem [#allocation11], %s415
        // Predicated region
        $region61: #{tpu_custom_call.1} parent=43 // pred_check
          %p417 = pneg %p155
        $region62: #{tpu_custom_call.1} parent=43 // pred_check_branch
          %419 = sbr.rel (%p417) target = $region64
        $region63: #{tpu_custom_call.1} parent=43 // pred_region
          %420 = dma.done %s413, 2048
        $region64: #{tpu_custom_call.1} parent=43 // pred_fallthru
          _
        %s421 = sand.u32 %s31, 1
        %s422 = scalar_lea.sflag [#allocation4], %s421
        %s423 = sand.u32 %s168, 1
        %s424 = smul.addr %s423, 128
        %s425 = scalar_lea.vmem [#allocation12], %s424
        // Predicated region
        $region65: #{tpu_custom_call.1} parent=43 // pred_check
          %p426 = pneg %p181
        $region66: #{tpu_custom_call.1} parent=43 // pred_check_branch
          %428 = sbr.rel (%p426) target = $region68
        $region67: #{tpu_custom_call.1} parent=43 // pred_region
          %429 = dma.done %s422, 2048
        $region68: #{tpu_custom_call.1} parent=43 // pred_fallthru
          _
        %s430 = sand.u32 %s31, 1
        %s431 = scalar_lea.sflag [#allocation4], %s430
        %s432 = sand.u32 %s53, 1
        %s433 = smul.addr %s432, 128
        %s434 = scalar_lea.vmem [#allocation3], %s433
        %p435 = pneg %p66
        %p436 = pneg %p63
        %p437 = pneg %p87
        %p438 = pneg %p84
        %p439 = pneg %p108
        %p440 = pneg %p105
        %p441 = pneg %p129
        %p442 = pneg %p126
        %s443 = sand.u32 %s31, 1
        %s444 = scalar_lea.sflag [#allocation4], %s443
        %s445 = sand.u32 %s142, 1
        %s446 = smul.addr %s445, 128
        %s447 = scalar_lea.vmem [#allocation11], %s446
        %p448 = pneg %p155
        %p449 = pneg %p152
        %s450 = sand.u32 %s31, 1
        %s451 = scalar_lea.sflag [#allocation4], %s450
        %s452 = sand.u32 %s168, 1
        %s453 = smul.addr %s452, 128
        %s454 = scalar_lea.vmem [#allocation12], %s453
        %p455 = pneg %p181
        %p456 = pneg %p178
        %p457 = pneg %p209
        %p458 = pneg %p206
        %s459 = sand.u32 %s196, 1
        %s460 = scalar_lea.sflag [#allocation5], %s459
        %s461 = sand.u32 %s196, 1
        %s462 = smul.addr %s461, 256
        %s463 = scalar_lea.vmem [#allocation13], %s462
        %p464 = pneg %p237
        %p465 = pneg %p234
        %s466 = sand.u32 %s31, 1
        %s467 = scalar_lea.sflag [#allocation15], %s466
        %s468 = sand.u32 %s224, 1
        %s469 = smul.addr %s468, 128
        %s470 = scalar_lea.vmem [#allocation14], %s469
        %p471 = pneg %p265
        %p472 = pneg %p262
        %s473 = sand.u32 %s31, 1
        %s474 = scalar_lea.sflag [#allocation15], %s473
        %s475 = sand.u32 %s252, 1
        %s476 = smul.addr %s475, 128
        %s477 = scalar_lea.vmem [#allocation16], %s476
        %s478 = smul.u32 16, %s36
        %s479 = smul.u32 16, %s36
        %s480 = smul.u32 16, %s36
        %s481 = smul.u32 16, %s36
        %s482 = smul.u32 16, %s36
        %s483 = smul.u32 16, %s36
        %v485 = vld [vmem:[%s395] sm:$0xff]
        %v486 = vld [vmem:[%s395 + $0x8] sm:$0xff]
        %v487 = vld [vmem:[%s395 + $0x10] sm:$0xff]
        %v488 = vld [vmem:[%s395 + $0x18] sm:$0xff]
        %v489 = vld [vmem:[%s395 + $0x20] sm:$0xff]
        %v490 = vld [vmem:[%s395 + $0x28] sm:$0xff]
        %v491 = vld [vmem:[%s395 + $0x30] sm:$0xff]
        %v492 = vld [vmem:[%s395 + $0x38] sm:$0xff]
        %v493 = vld [vmem:[%s395 + $0x40] sm:$0xff]
        %v494 = vld [vmem:[%s395 + $0x48] sm:$0xff]
        %v495 = vld [vmem:[%s395 + $0x50] sm:$0xff]
        %v496 = vld [vmem:[%s395 + $0x58] sm:$0xff]
        %v497 = vld [vmem:[%s395 + $0x60] sm:$0xff]
        %v498 = vld [vmem:[%s395 + $0x68] sm:$0xff]
        %v499 = vld [vmem:[%s395 + $0x70] sm:$0xff]
        %v500 = vld [vmem:[%s395 + $0x78] sm:$0xff]
        %v501 = vpack.c.bf16 %v486, %v485
        %v502 = vpack.c.bf16 %v488, %v487
        %v503 = vpack.c.bf16 %v490, %v489
        %v504 = vpack.c.bf16 %v492, %v491
        %v505 = vpack.c.bf16 %v494, %v493
        %v506 = vpack.c.bf16 %v496, %v495
        %v507 = vpack.c.bf16 %v498, %v497
        %v508 = vpack.c.bf16 %v500, %v499
        %v509 = vld [vmem:[%s416] sm:$0xff]
        %v510 = vld [vmem:[%s416 + $0x8] sm:$0xff]
        %v511 = vld [vmem:[%s416 + $0x10] sm:$0xff]
        %v512 = vld [vmem:[%s416 + $0x18] sm:$0xff]
        %v513 = vld [vmem:[%s416 + $0x20] sm:$0xff]
        %v514 = vld [vmem:[%s416 + $0x28] sm:$0xff]
        %v515 = vld [vmem:[%s416 + $0x30] sm:$0xff]
        %v516 = vld [vmem:[%s416 + $0x38] sm:$0xff]
        %v517 = vld [vmem:[%s416 + $0x40] sm:$0xff]
        %v518 = vld [vmem:[%s416 + $0x48] sm:$0xff]
        %v519 = vld [vmem:[%s416 + $0x50] sm:$0xff]
        %v520 = vld [vmem:[%s416 + $0x58] sm:$0xff]
        %v521 = vld [vmem:[%s416 + $0x60] sm:$0xff]
        %v522 = vld [vmem:[%s416 + $0x68] sm:$0xff]
        %v523 = vld [vmem:[%s416 + $0x70] sm:$0xff]
        %v524 = vld [vmem:[%s416 + $0x78] sm:$0xff]
        %v525 = vld [vmem:[%s425] sm:$0xff]
        %v526 = vld [vmem:[%s425 + $0x8] sm:$0xff]
        %v527 = vld [vmem:[%s425 + $0x10] sm:$0xff]
        %v528 = vld [vmem:[%s425 + $0x18] sm:$0xff]
        %v529 = vld [vmem:[%s425 + $0x20] sm:$0xff]
        %v530 = vld [vmem:[%s425 + $0x28] sm:$0xff]
        %v531 = vld [vmem:[%s425 + $0x30] sm:$0xff]
        %v532 = vld [vmem:[%s425 + $0x38] sm:$0xff]
        %v533 = vld [vmem:[%s425 + $0x40] sm:$0xff]
        %v534 = vld [vmem:[%s425 + $0x48] sm:$0xff]
        %v535 = vld [vmem:[%s425 + $0x50] sm:$0xff]
        %v536 = vld [vmem:[%s425 + $0x58] sm:$0xff]
        %v537 = vld [vmem:[%s425 + $0x60] sm:$0xff]
        %v538 = vld [vmem:[%s425 + $0x68] sm:$0xff]
        %v539 = vld [vmem:[%s425 + $0x70] sm:$0xff]
        %v540 = vld [vmem:[%s425 + $0x78] sm:$0xff]
        %v541 = vld [vmem:[#allocation8] sm:$0x1]
        %v542 = vld [vmem:[#allocation9] sm:$0x1]
        %v543 = vld [vmem:[#allocation6] sm:$0xff]
        %v544 = vld [vmem:[#allocation6 + $0x8] sm:$0xff]
        %v545 = vld [vmem:[#allocation6 + $0x10] sm:$0xff]
        %v546 = vld [vmem:[#allocation6 + $0x18] sm:$0xff]
        %v547 = vld [vmem:[#allocation6 + $0x20] sm:$0xff]
        %v548 = vld [vmem:[#allocation6 + $0x28] sm:$0xff]
        %v549 = vld [vmem:[#allocation6 + $0x30] sm:$0xff]
        %v550 = vld [vmem:[#allocation6 + $0x38] sm:$0xff]
        %v551 = vld [vmem:[#allocation6 + $0x40] sm:$0xff]
        %v552 = vld [vmem:[#allocation6 + $0x48] sm:$0xff]
        %v553 = vld [vmem:[#allocation6 + $0x50] sm:$0xff]
        %v554 = vld [vmem:[#allocation6 + $0x58] sm:$0xff]
        %v555 = vld [vmem:[#allocation6 + $0x60] sm:$0xff]
        %v556 = vld [vmem:[#allocation6 + $0x68] sm:$0xff]
        %v557 = vld [vmem:[#allocation6 + $0x70] sm:$0xff]
        %v558 = vld [vmem:[#allocation6 + $0x78] sm:$0xff]
        %v559 = vld [vmem:[#allocation6 + $0x80] sm:$0xff]
        %v560 = vld [vmem:[#allocation6 + $0x88] sm:$0xff]
        %v561 = vld [vmem:[#allocation6 + $0x90] sm:$0xff]
        %v562 = vld [vmem:[#allocation6 + $0x98] sm:$0xff]
        %v563 = vld [vmem:[#allocation6 + $0xa0] sm:$0xff]
        %v564 = vld [vmem:[#allocation6 + $0xa8] sm:$0xff]
        %v565 = vld [vmem:[#allocation6 + $0xb0] sm:$0xff]
        %v566 = vld [vmem:[#allocation6 + $0xb8] sm:$0xff]
        %v567 = vld [vmem:[#allocation6 + $0xc0] sm:$0xff]
        %v568 = vld [vmem:[#allocation6 + $0xc8] sm:$0xff]
        %v569 = vld [vmem:[#allocation6 + $0xd0] sm:$0xff]
        %v570 = vld [vmem:[#allocation6 + $0xd8] sm:$0xff]
        %v571 = vld [vmem:[#allocation6 + $0xe0] sm:$0xff]
        %v572 = vld [vmem:[#allocation6 + $0xe8] sm:$0xff]
        %v573 = vld [vmem:[#allocation6 + $0xf0] sm:$0xff]
        %v574 = vld [vmem:[#allocation6 + $0xf8] sm:$0xff]
        %v575 = vld [vmem:[#allocation6 + $0x100] sm:$0xff]
        %v576 = vld [vmem:[#allocation6 + $0x108] sm:$0xff]
        %v577 = vld [vmem:[#allocation6 + $0x110] sm:$0xff]
        %v578 = vld [vmem:[#allocation6 + $0x118] sm:$0xff]
        %v579 = vld [vmem:[#allocation6 + $0x120] sm:$0xff]
        %v580 = vld [vmem:[#allocation6 + $0x128] sm:$0xff]
        %v581 = vld [vmem:[#allocation6 + $0x130] sm:$0xff]
        %v582 = vld [vmem:[#allocation6 + $0x138] sm:$0xff]
        %v583 = vld [vmem:[#allocation6 + $0x140] sm:$0xff]
        %v584 = vld [vmem:[#allocation6 + $0x148] sm:$0xff]
        %v585 = vld [vmem:[#allocation6 + $0x150] sm:$0xff]
        %v586 = vld [vmem:[#allocation6 + $0x158] sm:$0xff]
        %v587 = vld [vmem:[#allocation6 + $0x160] sm:$0xff]
        %v588 = vld [vmem:[#allocation6 + $0x168] sm:$0xff]
        %v589 = vld [vmem:[#allocation6 + $0x170] sm:$0xff]
        %v590 = vld [vmem:[#allocation6 + $0x178] sm:$0xff]
        %v591 = vld [vmem:[#allocation6 + $0x180] sm:$0xff]
        %v592 = vld [vmem:[#allocation6 + $0x188] sm:$0xff]
        %v593 = vld [vmem:[#allocation6 + $0x190] sm:$0xff]
        %v594 = vld [vmem:[#allocation6 + $0x198] sm:$0xff]
        %v595 = vld [vmem:[#allocation6 + $0x1a0] sm:$0xff]
        %v596 = vld [vmem:[#allocation6 + $0x1a8] sm:$0xff]
        %v597 = vld [vmem:[#allocation6 + $0x1b0] sm:$0xff]
        %v598 = vld [vmem:[#allocation6 + $0x1b8] sm:$0xff]
        %v599 = vld [vmem:[#allocation6 + $0x1c0] sm:$0xff]
        %v600 = vld [vmem:[#allocation6 + $0x1c8] sm:$0xff]
        %v601 = vld [vmem:[#allocation6 + $0x1d0] sm:$0xff]
        %v602 = vld [vmem:[#allocation6 + $0x1d8] sm:$0xff]
        %v603 = vld [vmem:[#allocation6 + $0x1e0] sm:$0xff]
        %v604 = vld [vmem:[#allocation6 + $0x1e8] sm:$0xff]
        %v605 = vld [vmem:[#allocation6 + $0x1f0] sm:$0xff]
        %v606 = vld [vmem:[#allocation6 + $0x1f8] sm:$0xff]
        %v671 = vunpack.c.l.b16 %v543
        %v672 = vunpack.c.h.b16 %v543
        %v673 = vunpack.c.l.b16 %v544
        %v674 = vunpack.c.h.b16 %v544
        %v675 = vunpack.c.l.b16 %v545
        %v676 = vunpack.c.h.b16 %v545
        %v677 = vunpack.c.l.b16 %v546
        %v678 = vunpack.c.h.b16 %v546
        %v679 = vunpack.c.l.b16 %v547
        %v680 = vunpack.c.h.b16 %v547
        %v681 = vunpack.c.l.b16 %v548
        %v682 = vunpack.c.h.b16 %v548
        %v683 = vunpack.c.l.b16 %v549
        %v684 = vunpack.c.h.b16 %v549
        %v685 = vunpack.c.l.b16 %v550
        %v686 = vunpack.c.h.b16 %v550
        %v687 = vunpack.c.l.b16 %v551
        %v688 = vunpack.c.h.b16 %v551
        %v689 = vunpack.c.l.b16 %v552
        %v690 = vunpack.c.h.b16 %v552
        %v691 = vunpack.c.l.b16 %v553
        %v692 = vunpack.c.h.b16 %v553
        %v693 = vunpack.c.l.b16 %v554
        %v694 = vunpack.c.h.b16 %v554
        %v695 = vunpack.c.l.b16 %v555
        %v696 = vunpack.c.h.b16 %v555
        %v697 = vunpack.c.l.b16 %v556
        %v698 = vunpack.c.h.b16 %v556
        %v699 = vunpack.c.l.b16 %v557
        %v700 = vunpack.c.h.b16 %v557
        %v701 = vunpack.c.l.b16 %v558
        %v702 = vunpack.c.h.b16 %v558
        %v703 = vunpack.c.l.b16 %v559
        %v704 = vunpack.c.h.b16 %v559
        %v705 = vunpack.c.l.b16 %v560
        %v706 = vunpack.c.h.b16 %v560
        %v707 = vunpack.c.l.b16 %v561
        %v708 = vunpack.c.h.b16 %v561
        %v709 = vunpack.c.l.b16 %v562
        %v710 = vunpack.c.h.b16 %v562
        %v711 = vunpack.c.l.b16 %v563
        %v712 = vunpack.c.h.b16 %v563
        %v713 = vunpack.c.l.b16 %v564
        %v714 = vunpack.c.h.b16 %v564
        %v715 = vunpack.c.l.b16 %v565
        %v716 = vunpack.c.h.b16 %v565
        %v717 = vunpack.c.l.b16 %v566
        %v718 = vunpack.c.h.b16 %v566
        %v719 = vunpack.c.l.b16 %v567
        %v720 = vunpack.c.h.b16 %v567
        %v721 = vunpack.c.l.b16 %v568
        %v722 = vunpack.c.h.b16 %v568
        %v723 = vunpack.c.l.b16 %v569
        %v724 = vunpack.c.h.b16 %v569
        %v725 = vunpack.c.l.b16 %v570
        %v726 = vunpack.c.h.b16 %v570
        %v727 = vunpack.c.l.b16 %v571
        %v728 = vunpack.c.h.b16 %v571
        %v729 = vunpack.c.l.b16 %v572
        %v730 = vunpack.c.h.b16 %v572
        %v731 = vunpack.c.l.b16 %v573
        %v732 = vunpack.c.h.b16 %v573
        %v733 = vunpack.c.l.b16 %v574
        %v734 = vunpack.c.h.b16 %v574
        %v735 = vunpack.c.l.b16 %v575
        %v736 = vunpack.c.h.b16 %v575
        %v737 = vunpack.c.l.b16 %v576
        %v738 = vunpack.c.h.b16 %v576
        %v739 = vunpack.c.l.b16 %v577
        %v740 = vunpack.c.h.b16 %v577
        %v741 = vunpack.c.l.b16 %v578
        %v742 = vunpack.c.h.b16 %v578
        %v743 = vunpack.c.l.b16 %v579
        %v744 = vunpack.c.h.b16 %v579
        %v745 = vunpack.c.l.b16 %v580
        %v746 = vunpack.c.h.b16 %v580
        %v747 = vunpack.c.l.b16 %v581
        %v748 = vunpack.c.h.b16 %v581
        %v749 = vunpack.c.l.b16 %v582
        %v750 = vunpack.c.h.b16 %v582
        %v751 = vunpack.c.l.b16 %v583
        %v752 = vunpack.c.h.b16 %v583
        %v753 = vunpack.c.l.b16 %v584
        %v754 = vunpack.c.h.b16 %v584
        %v755 = vunpack.c.l.b16 %v585
        %v756 = vunpack.c.h.b16 %v585
        %v757 = vunpack.c.l.b16 %v586
        %v758 = vunpack.c.h.b16 %v586
        %v759 = vunpack.c.l.b16 %v587
        %v760 = vunpack.c.h.b16 %v587
        %v761 = vunpack.c.l.b16 %v588
        %v762 = vunpack.c.h.b16 %v588
        %v763 = vunpack.c.l.b16 %v589
        %v764 = vunpack.c.h.b16 %v589
        %v765 = vunpack.c.l.b16 %v590
        %v766 = vunpack.c.h.b16 %v590
        %v767 = vunpack.c.l.b16 %v591
        %v768 = vunpack.c.h.b16 %v591
        %v769 = vunpack.c.l.b16 %v592
        %v770 = vunpack.c.h.b16 %v592
        %v771 = vunpack.c.l.b16 %v593
        %v772 = vunpack.c.h.b16 %v593
        %v773 = vunpack.c.l.b16 %v594
        %v774 = vunpack.c.h.b16 %v594
        %v775 = vunpack.c.l.b16 %v595
        %v776 = vunpack.c.h.b16 %v595
        %v777 = vunpack.c.l.b16 %v596
        %v778 = vunpack.c.h.b16 %v596
        %v779 = vunpack.c.l.b16 %v597
        %v780 = vunpack.c.h.b16 %v597
        %v781 = vunpack.c.l.b16 %v598
        %v782 = vunpack.c.h.b16 %v598
        %v783 = vunpack.c.l.b16 %v599
        %v784 = vunpack.c.h.b16 %v599
        %v785 = vunpack.c.l.b16 %v600
        %v786 = vunpack.c.h.b16 %v600
        %v787 = vunpack.c.l.b16 %v601
        %v788 = vunpack.c.h.b16 %v601
        %v789 = vunpack.c.l.b16 %v602
        %v790 = vunpack.c.h.b16 %v602
        %v791 = vunpack.c.l.b16 %v603
        %v792 = vunpack.c.h.b16 %v603
        %v793 = vunpack.c.l.b16 %v604
        %v794 = vunpack.c.h.b16 %v604
        %v795 = vunpack.c.l.b16 %v605
        %v796 = vunpack.c.h.b16 %v605
        %v797 = vunpack.c.l.b16 %v606
        %v798 = vunpack.c.h.b16 %v606
        %v799 = vpack.c.b16 %v679, %v671
        %v800 = vpack.c.b16 %v680, %v672
        %v801 = vpack.c.b16 %v681, %v673
        %v802 = vpack.c.b16 %v682, %v674
        %v803 = vpack.c.b16 %v683, %v675
        %v804 = vpack.c.b16 %v684, %v676
        %v805 = vpack.c.b16 %v685, %v677
        %v806 = vpack.c.b16 %v686, %v678
        %v807 = vpack.c.b16 %v695, %v687
        %v808 = vpack.c.b16 %v696, %v688
        %v809 = vpack.c.b16 %v697, %v689
        %v810 = vpack.c.b16 %v698, %v690
        %v811 = vpack.c.b16 %v699, %v691
        %v812 = vpack.c.b16 %v700, %v692
        %v813 = vpack.c.b16 %v701, %v693
        %v814 = vpack.c.b16 %v702, %v694
        %v815 = vpack.c.b16 %v711, %v703
        %v816 = vpack.c.b16 %v712, %v704
        %v817 = vpack.c.b16 %v713, %v705
        %v818 = vpack.c.b16 %v714, %v706
        %v819 = vpack.c.b16 %v715, %v707
        %v820 = vpack.c.b16 %v716, %v708
        %v821 = vpack.c.b16 %v717, %v709
        %v822 = vpack.c.b16 %v718, %v710
        %v823 = vpack.c.b16 %v727, %v719
        %v824 = vpack.c.b16 %v728, %v720
        %v825 = vpack.c.b16 %v729, %v721
        %v826 = vpack.c.b16 %v730, %v722
        %v827 = vpack.c.b16 %v731, %v723
        %v828 = vpack.c.b16 %v732, %v724
        %v829 = vpack.c.b16 %v733, %v725
        %v830 = vpack.c.b16 %v734, %v726
        %v831 = vpack.c.b16 %v743, %v735
        %v832 = vpack.c.b16 %v744, %v736
        %v833 = vpack.c.b16 %v745, %v737
        %v834 = vpack.c.b16 %v746, %v738
        %v835 = vpack.c.b16 %v747, %v739
        %v836 = vpack.c.b16 %v748, %v740
        %v837 = vpack.c.b16 %v749, %v741
        %v838 = vpack.c.b16 %v750, %v742
        %v839 = vpack.c.b16 %v759, %v751
        %v840 = vpack.c.b16 %v760, %v752
        %v841 = vpack.c.b16 %v761, %v753
        %v842 = vpack.c.b16 %v762, %v754
        %v843 = vpack.c.b16 %v763, %v755
        %v844 = vpack.c.b16 %v764, %v756
        %v845 = vpack.c.b16 %v765, %v757
        %v846 = vpack.c.b16 %v766, %v758
        %v847 = vpack.c.b16 %v775, %v767
        %v848 = vpack.c.b16 %v776, %v768
        %v849 = vpack.c.b16 %v777, %v769
        %v850 = vpack.c.b16 %v778, %v770
        %v851 = vpack.c.b16 %v779, %v771
        %v852 = vpack.c.b16 %v780, %v772
        %v853 = vpack.c.b16 %v781, %v773
        %v854 = vpack.c.b16 %v782, %v774
        %v855 = vpack.c.b16 %v791, %v783
        %v856 = vpack.c.b16 %v792, %v784
        %v857 = vpack.c.b16 %v793, %v785
        %v858 = vpack.c.b16 %v794, %v786
        %v859 = vpack.c.b16 %v795, %v787
        %v860 = vpack.c.b16 %v796, %v788
        %v861 = vpack.c.b16 %v797, %v789
        %v862 = vpack.c.b16 %v798, %v790
        %927 = vmatprep.subr.bf16.mxu0 %v800
        %928 = vmatpush1.bf16.msra.mxu0 %v799
        %929 = vmatprep.subr.bf16.mxu0 %v808
        %930 = vmatpush1.bf16.msra.mxu0 %v807
        %931 = vmatprep.subr.bf16.mxu0 %v816
        %932 = vmatpush1.bf16.msra.mxu0 %v815
        %933 = vmatprep.subr.bf16.mxu0 %v824
        %934 = vmatpush1.bf16.msra.mxu0 %v823
        %935 = vmatprep.subr.bf16.mxu0 %v832
        %936 = vmatpush1.bf16.msra.mxu0 %v831
        %937 = vmatprep.subr.bf16.mxu0 %v840
        %938 = vmatpush1.bf16.msra.mxu0 %v839
        %939 = vmatprep.subr.bf16.mxu0 %v848
        %940 = vmatpush1.bf16.msra.mxu0 %v847
        %941 = vmatprep.subr.bf16.mxu0 %v856
        %942 = vmatpush1.bf16.msra.mxu0 %v855
        %943 = vmatprep.subr.bf16.mxu0 0
        %944 = vmatpush1.bf16.msra.mxu0 0
        %945 = vmatprep.subr.bf16.mxu0 0
        %946 = vmatpush1.bf16.msra.mxu0 0
        %947 = vmatprep.subr.bf16.mxu0 0
        %948 = vmatpush1.bf16.msra.mxu0 0
        %949 = vmatprep.subr.bf16.mxu0 0
        %950 = vmatpush1.bf16.msra.mxu0 0
        %951 = vmatprep.subr.bf16.mxu0 0
        %952 = vmatpush1.bf16.msra.mxu0 0
        %953 = vmatprep.subr.bf16.mxu0 0
        %954 = vmatpush1.bf16.msra.mxu0 0
        %955 = vmatprep.subr.bf16.mxu0 0
        %956 = vmatpush1.bf16.msra.mxu0 0
        %957 = vmatprep.subr.bf16.mxu0 0
        %958 = vmatpush1.bf16.msra.mxu0 0
        %959 = vmatprep.mubr.bf16.mxu0 0
        %960 = vmatmul.mubr.bf16.gmra.mrb[0].mxu0 %v501
        %v961 = vpop.f32.mrb[0].mxu0
        %v962 = vadd.f32 0.0, %v961
        %v963 = vpop.f32.mrb[0].mxu0
        %v964 = vadd.f32 0.0, %v963
        %v965 = vpop.f32.mrb[0].mxu0
        %v966 = vadd.f32 0.0, %v965
        %v967 = vpop.f32.mrb[0].mxu0
        %v968 = vadd.f32 0.0, %v967
        %969 = vmatprep.mubr.bf16.mxu0 0
        %970 = vmatmul.mubr.bf16.gmra.mrb[0].mxu0 %v502
        %v971 = vpop.f32.mrb[0].mxu0
        %v972 = vadd.f32 0.0, %v971
        %v973 = vpop.f32.mrb[0].mxu0
        %v974 = vadd.f32 0.0, %v973
        %v975 = vpop.f32.mrb[0].mxu0
        %v976 = vadd.f32 0.0, %v975
        %v977 = vpop.f32.mrb[0].mxu0
        %v978 = vadd.f32 0.0, %v977
        %979 = vmatprep.mubr.bf16.mxu0 0
        %980 = vmatmul.mubr.bf16.gmra.mrb[0].mxu0 %v503
        %v981 = vpop.f32.mrb[0].mxu0
        %v982 = vadd.f32 0.0, %v981
        %v983 = vpop.f32.mrb[0].mxu0
        %v984 = vadd.f32 0.0, %v983
        %v985 = vpop.f32.mrb[0].mxu0
        %v986 = vadd.f32 0.0, %v985
        %v987 = vpop.f32.mrb[0].mxu0
        %v988 = vadd.f32 0.0, %v987
        %989 = vmatprep.mubr.bf16.mxu0 0
        %990 = vmatmul.mubr.bf16.gmra.mrb[0].mxu0 %v504
        %v991 = vpop.f32.mrb[0].mxu0
        %v992 = vadd.f32 0.0, %v991
        %v993 = vpop.f32.mrb[0].mxu0
        %v994 = vadd.f32 0.0, %v993
        %v995 = vpop.f32.mrb[0].mxu0
        %v996 = vadd.f32 0.0, %v995
        %v997 = vpop.f32.mrb[0].mxu0
        %v998 = vadd.f32 0.0, %v997
        %999 = vmatprep.mubr.bf16.mxu0 0
        %1000 = vmatmul.mubr.bf16.gmra.mrb[0].mxu0 %v505
        %v1001 = vpop.f32.mrb[0].mxu0
        %v1002 = vadd.f32 0.0, %v1001
        %v1003 = vpop.f32.mrb[0].mxu0
        %v1004 = vadd.f32 0.0, %v1003
        %v1005 = vpop.f32.mrb[0].mxu0
        %v1006 = vadd.f32 0.0, %v1005
        %v1007 = vpop.f32.mrb[0].mxu0
        %v1008 = vadd.f32 0.0, %v1007
        %1009 = vmatprep.mubr.bf16.mxu0 0
        %1010 = vmatmul.mubr.bf16.gmra.mrb[0].mxu0 %v506
        %v1011 = vpop.f32.mrb[0].mxu0
        %v1012 = vadd.f32 0.0, %v1011
        %v1013 = vpop.f32.mrb[0].mxu0
        %v1014 = vadd.f32 0.0, %v1013
        %v1015 = vpop.f32.mrb[0].mxu0
        %v1016 = vadd.f32 0.0, %v1015
        %v1017 = vpop.f32.mrb[0].mxu0
        %v1018 = vadd.f32 0.0, %v1017
        %1019 = vmatprep.mubr.bf16.mxu0 0
        %1020 = vmatmul.mubr.bf16.gmra.mrb[0].mxu0 %v507
        %v1021 = vpop.f32.mrb[0].mxu0
        %v1022 = vadd.f32 0.0, %v1021
        %v1023 = vpop.f32.mrb[0].mxu0
        %v1024 = vadd.f32 0.0, %v1023
        %v1025 = vpop.f32.mrb[0].mxu0
        %v1026 = vadd.f32 0.0, %v1025
        %v1027 = vpop.f32.mrb[0].mxu0
        %v1028 = vadd.f32 0.0, %v1027
        %1029 = vmatprep.mubr.bf16.mxu0 0
        %1030 = vmatmul.mubr.bf16.gmra.mrb[0].mxu0 %v508
        %v1031 = vpop.f32.mrb[0].mxu0
        %v1032 = vadd.f32 0.0, %v1031
        %v1033 = vpop.f32.mrb[0].mxu0
        %v1034 = vadd.f32 0.0, %v1033
        %v1035 = vpop.f32.mrb[0].mxu0
        %v1036 = vadd.f32 0.0, %v1035
        %v1037 = vpop.f32.mrb[0].mxu0
        %v1038 = vadd.f32 0.0, %v1037
        %1039 = vdwg.mxu0
        %1040 = vmatprep.subr.bf16.mxu0 %v802
        %1041 = vmatpush1.bf16.msra.mxu0 %v801
        %1042 = vmatprep.subr.bf16.mxu0 %v810
        %1043 = vmatpush1.bf16.msra.mxu0 %v809
        %1044 = vmatprep.subr.bf16.mxu0 %v818
        %1045 = vmatpush1.bf16.msra.mxu0 %v817
        %1046 = vmatprep.subr.bf16.mxu0 %v826
        %1047 = vmatpush1.bf16.msra.mxu0 %v825
        %1048 = vmatprep.subr.bf16.mxu0 %v834
        %1049 = vmatpush1.bf16.msra.mxu0 %v833
        %1050 = vmatprep.subr.bf16.mxu0 %v842
        %1051 = vmatpush1.bf16.msra.mxu0 %v841
        %1052 = vmatprep.subr.bf16.mxu0 %v850
        %1053 = vmatpush1.bf16.msra.mxu0 %v849
        %1054 = vmatprep.subr.bf16.mxu0 %v858
        %1055 = vmatpush1.bf16.msra.mxu0 %v857
        %1056 = vmatprep.subr.bf16.mxu0 0
        %1057 = vmatpush1.bf16.msra.mxu0 0
        %1058 = vmatprep.subr.bf16.mxu0 0
        %1059 = vmatpush1.bf16.msra.mxu0 0
        %1060 = vmatprep.subr.bf16.mxu0 0
        %1061 = vmatpush1.bf16.msra.mxu0 0
        %1062 = vmatprep.subr.bf16.mxu0 0
        %1063 = vmatpush1.bf16.msra.mxu0 0
        %1064 = vmatprep.subr.bf16.mxu0 0
        %1065 = vmatpush1.bf16.msra.mxu0 0
        %1066 = vmatprep.subr.bf16.mxu0 0
        %1067 = vmatpush1.bf16.msra.mxu0 0
        %1068 = vmatprep.subr.bf16.mxu0 0
        %1069 = vmatpush1.bf16.msra.mxu0 0
        %1070 = vmatprep.subr.bf16.mxu0 0
        %1071 = vmatpush1.bf16.msra.mxu0 0
        %1072 = vmatprep.mubr.bf16.mxu0 0
        %1073 = vmatmul.mubr.bf16.gmra.mrb[0].mxu0 %v501
        %v1074 = vpop.f32.mrb[0].mxu0
        %v1075 = vadd.f32 0.0, %v1074
        %v1076 = vpop.f32.mrb[0].mxu0
        %v1077 = vadd.f32 0.0, %v1076
        %v1078 = vpop.f32.mrb[0].mxu0
        %v1079 = vadd.f32 0.0, %v1078
        %v1080 = vpop.f32.mrb[0].mxu0
        %v1081 = vadd.f32 0.0, %v1080
        %1082 = vmatprep.mubr.bf16.mxu0 0
        %1083 = vmatmul.mubr.bf16.gmra.mrb[0].mxu0 %v502
        %v1084 = vpop.f32.mrb[0].mxu0
        %v1085 = vadd.f32 0.0, %v1084
        %v1086 = vpop.f32.mrb[0].mxu0
        %v1087 = vadd.f32 0.0, %v1086
        %v1088 = vpop.f32.mrb[0].mxu0
        %v1089 = vadd.f32 0.0, %v1088
        %v1090 = vpop.f32.mrb[0].mxu0
        %v1091 = vadd.f32 0.0, %v1090
        %1092 = vmatprep.mubr.bf16.mxu0 0
        %1093 = vmatmul.mubr.bf16.gmra.mrb[0].mxu0 %v503
        %v1094 = vpop.f32.mrb[0].mxu0
        %v1095 = vadd.f32 0.0, %v1094
        %v1096 = vpop.f32.mrb[0].mxu0
        %v1097 = vadd.f32 0.0, %v1096
        %v1098 = vpop.f32.mrb[0].mxu0
        %v1099 = vadd.f32 0.0, %v1098
        %v1100 = vpop.f32.mrb[0].mxu0
        %v1101 = vadd.f32 0.0, %v1100
        %1102 = vmatprep.mubr.bf16.mxu0 0
        %1103 = vmatmul.mubr.bf16.gmra.mrb[0].mxu0 %v504
        %v1104 = vpop.f32.mrb[0].mxu0
        %v1105 = vadd.f32 0.0, %v1104
        %v1106 = vpop.f32.mrb[0].mxu0
        %v1107 = vadd.f32 0.0, %v1106
        %v1108 = vpop.f32.mrb[0].mxu0
        %v1109 = vadd.f32 0.0, %v1108
        %v1110 = vpop.f32.mrb[0].mxu0
        %v1111 = vadd.f32 0.0, %v1110
        %1112 = vmatprep.mubr.bf16.mxu0 0
        %1113 = vmatmul.mubr.bf16.gmra.mrb[0].mxu0 %v505
        %v1114 = vpop.f32.mrb[0].mxu0
        %v1115 = vadd.f32 0.0, %v1114
        %v1116 = vpop.f32.mrb[0].mxu0
        %v1117 = vadd.f32 0.0, %v1116
        %v1118 = vpop.f32.mrb[0].mxu0
        %v1119 = vadd.f32 0.0, %v1118
        %v1120 = vpop.f32.mrb[0].mxu0
        %v1121 = vadd.f32 0.0, %v1120
        %1122 = vmatprep.mubr.bf16.mxu0 0
        %1123 = vmatmul.mubr.bf16.gmra.mrb[0].mxu0 %v506
        %v1124 = vpop.f32.mrb[0].mxu0
        %v1125 = vadd.f32 0.0, %v1124
        %v1126 = vpop.f32.mrb[0].mxu0
        %v1127 = vadd.f32 0.0, %v1126
        %v1128 = vpop.f32.mrb[0].mxu0
        %v1129 = vadd.f32 0.0, %v1128
        %v1130 = vpop.f32.mrb[0].mxu0
        %v1131 = vadd.f32 0.0, %v1130
        %1132 = vmatprep.mubr.bf16.mxu0 0
        %1133 = vmatmul.mubr.bf16.gmra.mrb[0].mxu0 %v507
        %v1134 = vpop.f32.mrb[0].mxu0
        %v1135 = vadd.f32 0.0, %v1134
        %v1136 = vpop.f32.mrb[0].mxu0
        %v1137 = vadd.f32 0.0, %v1136
        %v1138 = vpop.f32.mrb[0].mxu0
        %v1139 = vadd.f32 0.0, %v1138
        %v1140 = vpop.f32.mrb[0].mxu0
        %v1141 = vadd.f32 0.0, %v1140
        %1142 = vmatprep.mubr.bf16.mxu0 0
        %1143 = vmatmul.mubr.bf16.gmra.mrb[0].mxu0 %v508
        %v1144 = vpop.f32.mrb[0].mxu0
        %v1145 = vadd.f32 0.0, %v1144
        %v1146 = vpop.f32.mrb[0].mxu0
        %v1147 = vadd.f32 0.0, %v1146
        %v1148 = vpop.f32.mrb[0].mxu0
        %v1149 = vadd.f32 0.0, %v1148
        %v1150 = vpop.f32.mrb[0].mxu0
        %v1151 = vadd.f32 0.0, %v1150
        %1152 = vdwg.mxu0
        %1153 = vmatprep.subr.bf16.mxu0 %v804
        %1154 = vmatpush1.bf16.msra.mxu0 %v803
        %1155 = vmatprep.subr.bf16.mxu0 %v812
        %1156 = vmatpush1.bf16.msra.mxu0 %v811
        %1157 = vmatprep.subr.bf16.mxu0 %v820
        %1158 = vmatpush1.bf16.msra.mxu0 %v819
        %1159 = vmatprep.subr.bf16.mxu0 %v828
        %1160 = vmatpush1.bf16.msra.mxu0 %v827
        %1161 = vmatprep.subr.bf16.mxu0 %v836
        %1162 = vmatpush1.bf16.msra.mxu0 %v835
        %1163 = vmatprep.subr.bf16.mxu0 %v844
        %1164 = vmatpush1.bf16.msra.mxu0 %v843
        %1165 = vmatprep.subr.bf16.mxu0 %v852
        %1166 = vmatpush1.bf16.msra.mxu0 %v851
        %1167 = vmatprep.subr.bf16.mxu0 %v860
        %1168 = vmatpush1.bf16.msra.mxu0 %v859
        %1169 = vmatprep.subr.bf16.mxu0 0
        %1170 = vmatpush1.bf16.msra.mxu0 0
        %1171 = vmatprep.subr.bf16.mxu0 0
        %1172 = vmatpush1.bf16.msra.mxu0 0
        %1173 = vmatprep.subr.bf16.mxu0 0
        %1174 = vmatpush1.bf16.msra.mxu0 0
        %1175 = vmatprep.subr.bf16.mxu0 0
        %1176 = vmatpush1.bf16.msra.mxu0 0
        %1177 = vmatprep.subr.bf16.mxu0 0
        %1178 = vmatpush1.bf16.msra.mxu0 0
        %1179 = vmatprep.subr.bf16.mxu0 0
        %1180 = vmatpush1.bf16.msra.mxu0 0
        %1181 = vmatprep.subr.bf16.mxu0 0
        %1182 = vmatpush1.bf16.msra.mxu0 0
        %1183 = vmatprep.subr.bf16.mxu0 0
        %1184 = vmatpush1.bf16.msra.mxu0 0
        %1185 = vmatprep.mubr.bf16.mxu0 0
        %1186 = vmatmul.mubr.bf16.gmra.mrb[0].mxu0 %v501
        %v1187 = vpop.f32.mrb[0].mxu0
        %v1188 = vadd.f32 0.0, %v1187
        %v1189 = vpop.f32.mrb[0].mxu0
        %v1190 = vadd.f32 0.0, %v1189
        %v1191 = vpop.f32.mrb[0].mxu0
        %v1192 = vadd.f32 0.0, %v1191
        %v1193 = vpop.f32.mrb[0].mxu0
        %v1194 = vadd.f32 0.0, %v1193
        %1195 = vmatprep.mubr.bf16.mxu0 0
        %1196 = vmatmul.mubr.bf16.gmra.mrb[0].mxu0 %v502
        %v1197 = vpop.f32.mrb[0].mxu0
        %v1198 = vadd.f32 0.0, %v1197
        %v1199 = vpop.f32.mrb[0].mxu0
        %v1200 = vadd.f32 0.0, %v1199
        %v1201 = vpop.f32.mrb[0].mxu0
        %v1202 = vadd.f32 0.0, %v1201
        %v1203 = vpop.f32.mrb[0].mxu0
        %v1204 = vadd.f32 0.0, %v1203
        %1205 = vmatprep.mubr.bf16.mxu0 0
        %1206 = vmatmul.mubr.bf16.gmra.mrb[0].mxu0 %v503
        %v1207 = vpop.f32.mrb[0].mxu0
        %v1208 = vadd.f32 0.0, %v1207
        %v1209 = vpop.f32.mrb[0].mxu0
        %v1210 = vadd.f32 0.0, %v1209
        %v1211 = vpop.f32.mrb[0].mxu0
        %v1212 = vadd.f32 0.0, %v1211
        %v1213 = vpop.f32.mrb[0].mxu0
        %v1214 = vadd.f32 0.0, %v1213
        %1215 = vmatprep.mubr.bf16.mxu0 0
        %1216 = vmatmul.mubr.bf16.gmra.mrb[0].mxu0 %v504
        %v1217 = vpop.f32.mrb[0].mxu0
        %v1218 = vadd.f32 0.0, %v1217
        %v1219 = vpop.f32.mrb[0].mxu0
        %v1220 = vadd.f32 0.0, %v1219
        %v1221 = vpop.f32.mrb[0].mxu0
        %v1222 = vadd.f32 0.0, %v1221
        %v1223 = vpop.f32.mrb[0].mxu0
        %v1224 = vadd.f32 0.0, %v1223
        %1225 = vmatprep.mubr.bf16.mxu0 0
        %1226 = vmatmul.mubr.bf16.gmra.mrb[0].mxu0 %v505
        %v1227 = vpop.f32.mrb[0].mxu0
        %v1228 = vadd.f32 0.0, %v1227
        %v1229 = vpop.f32.mrb[0].mxu0
        %v1230 = vadd.f32 0.0, %v1229
        %v1231 = vpop.f32.mrb[0].mxu0
        %v1232 = vadd.f32 0.0, %v1231
        %v1233 = vpop.f32.mrb[0].mxu0
        %v1234 = vadd.f32 0.0, %v1233
        %1235 = vmatprep.mubr.bf16.mxu0 0
        %1236 = vmatmul.mubr.bf16.gmra.mrb[0].mxu0 %v506
        %v1237 = vpop.f32.mrb[0].mxu0
        %v1238 = vadd.f32 0.0, %v1237
        %v1239 = vpop.f32.mrb[0].mxu0
        %v1240 = vadd.f32 0.0, %v1239
        %v1241 = vpop.f32.mrb[0].mxu0
        %v1242 = vadd.f32 0.0, %v1241
        %v1243 = vpop.f32.mrb[0].mxu0
        %v1244 = vadd.f32 0.0, %v1243
        %1245 = vmatprep.mubr.bf16.mxu0 0
        %1246 = vmatmul.mubr.bf16.gmra.mrb[0].mxu0 %v507
        %v1247 = vpop.f32.mrb[0].mxu0
        %v1248 = vadd.f32 0.0, %v1247
        %v1249 = vpop.f32.mrb[0].mxu0
        %v1250 = vadd.f32 0.0, %v1249
        %v1251 = vpop.f32.mrb[0].mxu0
        %v1252 = vadd.f32 0.0, %v1251
        %v1253 = vpop.f32.mrb[0].mxu0
        %v1254 = vadd.f32 0.0, %v1253
        %1255 = vmatprep.mubr.bf16.mxu0 0
        %1256 = vmatmul.mubr.bf16.gmra.mrb[0].mxu0 %v508
        %v1257 = vpop.f32.mrb[0].mxu0
        %v1258 = vadd.f32 0.0, %v1257
        %v1259 = vpop.f32.mrb[0].mxu0
        %v1260 = vadd.f32 0.0, %v1259
        %v1261 = vpop.f32.mrb[0].mxu0
        %v1262 = vadd.f32 0.0, %v1261
        %v1263 = vpop.f32.mrb[0].mxu0
        %v1264 = vadd.f32 0.0, %v1263
        %1265 = vdwg.mxu0
        %1266 = vmatprep.subr.bf16.mxu0 %v806
        %1267 = vmatpush1.bf16.msra.mxu0 %v805
        %1268 = vmatprep.subr.bf16.mxu0 %v814
        %1269 = vmatpush1.bf16.msra.mxu0 %v813
        %1270 = vmatprep.subr.bf16.mxu0 %v822
        %1271 = vmatpush1.bf16.msra.mxu0 %v821
        %1272 = vmatprep.subr.bf16.mxu0 %v830
        %1273 = vmatpush1.bf16.msra.mxu0 %v829
        %1274 = vmatprep.subr.bf16.mxu0 %v838
        %1275 = vmatpush1.bf16.msra.mxu0 %v837
        %1276 = vmatprep.subr.bf16.mxu0 %v846
        %1277 = vmatpush1.bf16.msra.mxu0 %v845
        %1278 = vmatprep.subr.bf16.mxu0 %v854
        %1279 = vmatpush1.bf16.msra.mxu0 %v853
        %1280 = vmatprep.subr.bf16.mxu0 %v862
        %1281 = vmatpush1.bf16.msra.mxu0 %v861
        %1282 = vmatprep.subr.bf16.mxu0 0
        %1283 = vmatpush1.bf16.msra.mxu0 0
        %1284 = vmatprep.subr.bf16.mxu0 0
        %1285 = vmatpush1.bf16.msra.mxu0 0
        %1286 = vmatprep.subr.bf16.mxu0 0
        %1287 = vmatpush1.bf16.msra.mxu0 0
        %1288 = vmatprep.subr.bf16.mxu0 0
        %1289 = vmatpush1.bf16.msra.mxu0 0
        %1290 = vmatprep.subr.bf16.mxu0 0
        %1291 = vmatpush1.bf16.msra.mxu0 0
        %1292 = vmatprep.subr.bf16.mxu0 0
        %1293 = vmatpush1.bf16.msra.mxu0 0
        %1294 = vmatprep.subr.bf16.mxu0 0
        %1295 = vmatpush1.bf16.msra.mxu0 0
        %1296 = vmatprep.subr.bf16.mxu0 0
        %1297 = vmatpush1.bf16.msra.mxu0 0
        %1298 = vmatprep.mubr.bf16.mxu0 0
        %1299 = vmatmul.mubr.bf16.gmra.mrb[0].mxu0 %v501
        %v1300 = vpop.f32.mrb[0].mxu0
        %v1301 = vadd.f32 0.0, %v1300
        %v1302 = vpop.f32.mrb[0].mxu0
        %v1303 = vadd.f32 0.0, %v1302
        %v1304 = vpop.f32.mrb[0].mxu0
        %v1305 = vadd.f32 0.0, %v1304
        %v1306 = vpop.f32.mrb[0].mxu0
        %v1307 = vadd.f32 0.0, %v1306
        %1308 = vmatprep.mubr.bf16.mxu0 0
        %1309 = vmatmul.mubr.bf16.gmra.mrb[0].mxu0 %v502
        %v1310 = vpop.f32.mrb[0].mxu0
        %v1311 = vadd.f32 0.0, %v1310
        %v1312 = vpop.f32.mrb[0].mxu0
        %v1313 = vadd.f32 0.0, %v1312
        %v1314 = vpop.f32.mrb[0].mxu0
        %v1315 = vadd.f32 0.0, %v1314
        %v1316 = vpop.f32.mrb[0].mxu0
        %v1317 = vadd.f32 0.0, %v1316
        %1318 = vmatprep.mubr.bf16.mxu0 0
        %1319 = vmatmul.mubr.bf16.gmra.mrb[0].mxu0 %v503
        %v1320 = vpop.f32.mrb[0].mxu0
        %v1321 = vadd.f32 0.0, %v1320
        %v1322 = vpop.f32.mrb[0].mxu0
        %v1323 = vadd.f32 0.0, %v1322
        %v1324 = vpop.f32.mrb[0].mxu0
        %v1325 = vadd.f32 0.0, %v1324
        %v1326 = vpop.f32.mrb[0].mxu0
        %v1327 = vadd.f32 0.0, %v1326
        %1328 = vmatprep.mubr.bf16.mxu0 0
        %1329 = vmatmul.mubr.bf16.gmra.mrb[0].mxu0 %v504
        %v1330 = vpop.f32.mrb[0].mxu0
        %v1331 = vadd.f32 0.0, %v1330
        %v1332 = vpop.f32.mrb[0].mxu0
        %v1333 = vadd.f32 0.0, %v1332
        %v1334 = vpop.f32.mrb[0].mxu0
        %v1335 = vadd.f32 0.0, %v1334
        %v1336 = vpop.f32.mrb[0].mxu0
        %v1337 = vadd.f32 0.0, %v1336
        %1338 = vmatprep.mubr.bf16.mxu0 0
        %1339 = vmatmul.mubr.bf16.gmra.mrb[0].mxu0 %v505
        %v1340 = vpop.f32.mrb[0].mxu0
        %v1341 = vadd.f32 0.0, %v1340
        %v1342 = vpop.f32.mrb[0].mxu0
        %v1343 = vadd.f32 0.0, %v1342
        %v1344 = vpop.f32.mrb[0].mxu0
        %v1345 = vadd.f32 0.0, %v1344
        %v1346 = vpop.f32.mrb[0].mxu0
        %v1347 = vadd.f32 0.0, %v1346
        %1348 = vmatprep.mubr.bf16.mxu0 0
        %1349 = vmatmul.mubr.bf16.gmra.mrb[0].mxu0 %v506
        %v1350 = vpop.f32.mrb[0].mxu0
        %v1351 = vadd.f32 0.0, %v1350
        %v1352 = vpop.f32.mrb[0].mxu0
        %v1353 = vadd.f32 0.0, %v1352
        %v1354 = vpop.f32.mrb[0].mxu0
        %v1355 = vadd.f32 0.0, %v1354
        %v1356 = vpop.f32.mrb[0].mxu0
        %v1357 = vadd.f32 0.0, %v1356
        %1358 = vmatprep.mubr.bf16.mxu0 0
        %1359 = vmatmul.mubr.bf16.gmra.mrb[0].mxu0 %v507
        %v1360 = vpop.f32.mrb[0].mxu0
        %v1361 = vadd.f32 0.0, %v1360
        %v1362 = vpop.f32.mrb[0].mxu0
        %v1363 = vadd.f32 0.0, %v1362
        %v1364 = vpop.f32.mrb[0].mxu0
        %v1365 = vadd.f32 0.0, %v1364
        %v1366 = vpop.f32.mrb[0].mxu0
        %v1367 = vadd.f32 0.0, %v1366
        %1368 = vmatprep.mubr.bf16.mxu0 0
        %1369 = vmatmul.mubr.bf16.gmra.mrb[0].mxu0 %v508
        %v1370 = vpop.f32.mrb[0].mxu0
        %v1371 = vadd.f32 0.0, %v1370
        %v1372 = vpop.f32.mrb[0].mxu0
        %v1373 = vadd.f32 0.0, %v1372
        %v1374 = vpop.f32.mrb[0].mxu0
        %v1375 = vadd.f32 0.0, %v1374
        %v1376 = vpop.f32.mrb[0].mxu0
        %v1377 = vadd.f32 0.0, %v1376
        %1378 = vdwg.mxu0
        %1379 = vst [vmem:[#allocation2] sm:$0xff] %v962
        %1380 = vst [vmem:[#allocation2 + $0x8] sm:$0xff] %v964
        %1381 = vst [vmem:[#allocation2 + $0x10] sm:$0xff] %v1075
        %1382 = vst [vmem:[#allocation2 + $0x18] sm:$0xff] %v1077
        %1383 = vst [vmem:[#allocation2 + $0x20] sm:$0xff] %v1188
        %1384 = vst [vmem:[#allocation2 + $0x28] sm:$0xff] %v1190
        %1385 = vst [vmem:[#allocation2 + $0x30] sm:$0xff] %v1301
        %1386 = vst [vmem:[#allocation2 + $0x38] sm:$0xff] %v1303
        %1387 = vst [vmem:[#allocation2 + $0x40] sm:$0xff] %v966
        %1388 = vst [vmem:[#allocation2 + $0x48] sm:$0xff] %v968
        %1389 = vst [vmem:[#allocation2 + $0x50] sm:$0xff] %v1079
        %1390 = vst [vmem:[#allocation2 + $0x58] sm:$0xff] %v1081
        %1391 = vst [vmem:[#allocation2 + $0x60] sm:$0xff] %v1192
        %1392 = vst [vmem:[#allocation2 + $0x68] sm:$0xff] %v1194
        %1393 = vst [vmem:[#allocation2 + $0x70] sm:$0xff] %v1305
        %1394 = vst [vmem:[#allocation2 + $0x78] sm:$0xff] %v1307
        %1395 = vst [vmem:[#allocation2 + $0x80] sm:$0xff] %v972
        %1396 = vst [vmem:[#allocation2 + $0x88] sm:$0xff] %v974
        %1397 = vst [vmem:[#allocation2 + $0x90] sm:$0xff] %v1085
        %1398 = vst [vmem:[#allocation2 + $0x98] sm:$0xff] %v1087
        %1399 = vst [vmem:[#allocation2 + $0xa0] sm:$0xff] %v1198
        %1400 = vst [vmem:[#allocation2 + $0xa8] sm:$0xff] %v1200
        %1401 = vst [vmem:[#allocation2 + $0xb0] sm:$0xff] %v1311
        %1402 = vst [vmem:[#allocation2 + $0xb8] sm:$0xff] %v1313
        %1403 = vst [vmem:[#allocation2 + $0xc0] sm:$0xff] %v976
        %1404 = vst [vmem:[#allocation2 + $0xc8] sm:$0xff] %v978
        %1405 = vst [vmem:[#allocation2 + $0xd0] sm:$0xff] %v1089
        %1406 = vst [vmem:[#allocation2 + $0xd8] sm:$0xff] %v1091
        %1407 = vst [vmem:[#allocation2 + $0xe0] sm:$0xff] %v1202
        %1408 = vst [vmem:[#allocation2 + $0xe8] sm:$0xff] %v1204
        %1409 = vst [vmem:[#allocation2 + $0xf0] sm:$0xff] %v1315
        %1410 = vst [vmem:[#allocation2 + $0xf8] sm:$0xff] %v1317
        %1411 = vst [vmem:[#allocation2 + $0x100] sm:$0xff] %v982
        %1412 = vst [vmem:[#allocation2 + $0x108] sm:$0xff] %v984
        %1413 = vst [vmem:[#allocation2 + $0x110] sm:$0xff] %v1095
        %1414 = vst [vmem:[#allocation2 + $0x118] sm:$0xff] %v1097
        %1415 = vst [vmem:[#allocation2 + $0x120] sm:$0xff] %v1208
        %1416 = vst [vmem:[#allocation2 + $0x128] sm:$0xff] %v1210
        %1417 = vst [vmem:[#allocation2 + $0x130] sm:$0xff] %v1321
        %1418 = vst [vmem:[#allocation2 + $0x138] sm:$0xff] %v1323
        %1419 = vst [vmem:[#allocation2 + $0x140] sm:$0xff] %v986
        %1420 = vst [vmem:[#allocation2 + $0x148] sm:$0xff] %v988
        %1421 = vst [vmem:[#allocation2 + $0x150] sm:$0xff] %v1099
        %1422 = vst [vmem:[#allocation2 + $0x158] sm:$0xff] %v1101
        %1423 = vst [vmem:[#allocation2 + $0x160] sm:$0xff] %v1212
        %1424 = vst [vmem:[#allocation2 + $0x168] sm:$0xff] %v1214
        %1425 = vst [vmem:[#allocation2 + $0x170] sm:$0xff] %v1325
        %1426 = vst [vmem:[#allocation2 + $0x178] sm:$0xff] %v1327
        %1427 = vst [vmem:[#allocation2 + $0x180] sm:$0xff] %v992
        %1428 = vst [vmem:[#allocation2 + $0x188] sm:$0xff] %v994
        %1429 = vst [vmem:[#allocation2 + $0x190] sm:$0xff] %v1105
        %1430 = vst [vmem:[#allocation2 + $0x198] sm:$0xff] %v1107
        %1431 = vst [vmem:[#allocation2 + $0x1a0] sm:$0xff] %v1218
        %1432 = vst [vmem:[#allocation2 + $0x1a8] sm:$0xff] %v1220
        %1433 = vst [vmem:[#allocation2 + $0x1b0] sm:$0xff] %v1331
        %1434 = vst [vmem:[#allocation2 + $0x1b8] sm:$0xff] %v1333
        %1435 = vst [vmem:[#allocation2 + $0x1c0] sm:$0xff] %v996
        %1436 = vst [vmem:[#allocation2 + $0x1c8] sm:$0xff] %v998
        %1437 = vst [vmem:[#allocation2 + $0x1d0] sm:$0xff] %v1109
        %1438 = vst [vmem:[#allocation2 + $0x1d8] sm:$0xff] %v1111
        %1439 = vst [vmem:[#allocation2 + $0x1e0] sm:$0xff] %v1222
        %1440 = vst [vmem:[#allocation2 + $0x1e8] sm:$0xff] %v1224
        %1441 = vst [vmem:[#allocation2 + $0x1f0] sm:$0xff] %v1335
        %1442 = vst [vmem:[#allocation2 + $0x1f8] sm:$0xff] %v1337
        %1443 = vst [vmem:[#allocation2 + $0x200] sm:$0xff] %v1002
        %1444 = vst [vmem:[#allocation2 + $0x208] sm:$0xff] %v1004
        %1445 = vst [vmem:[#allocation2 + $0x210] sm:$0xff] %v1115
        %1446 = vst [vmem:[#allocation2 + $0x218] sm:$0xff] %v1117
        %1447 = vst [vmem:[#allocation2 + $0x220] sm:$0xff] %v1228
        %1448 = vst [vmem:[#allocation2 + $0x228] sm:$0xff] %v1230
        %1449 = vst [vmem:[#allocation2 + $0x230] sm:$0xff] %v1341
        %1450 = vst [vmem:[#allocation2 + $0x238] sm:$0xff] %v1343
        %1451 = vst [vmem:[#allocation2 + $0x240] sm:$0xff] %v1006
        %1452 = vst [vmem:[#allocation2 + $0x248] sm:$0xff] %v1008
        %1453 = vst [vmem:[#allocation2 + $0x250] sm:$0xff] %v1119
        %1454 = vst [vmem:[#allocation2 + $0x258] sm:$0xff] %v1121
        %1455 = vst [vmem:[#allocation2 + $0x260] sm:$0xff] %v1232
        %1456 = vst [vmem:[#allocation2 + $0x268] sm:$0xff] %v1234
        %1457 = vst [vmem:[#allocation2 + $0x270] sm:$0xff] %v1345
        %1458 = vst [vmem:[#allocation2 + $0x278] sm:$0xff] %v1347
        %1459 = vst [vmem:[#allocation2 + $0x280] sm:$0xff] %v1012
        %1460 = vst [vmem:[#allocation2 + $0x288] sm:$0xff] %v1014
        %1461 = vst [vmem:[#allocation2 + $0x290] sm:$0xff] %v1125
        %1462 = vst [vmem:[#allocation2 + $0x298] sm:$0xff] %v1127
        %1463 = vst [vmem:[#allocation2 + $0x2a0] sm:$0xff] %v1238
        %1464 = vst [vmem:[#allocation2 + $0x2a8] sm:$0xff] %v1240
        %1465 = vst [vmem:[#allocation2 + $0x2b0] sm:$0xff] %v1351
        %1466 = vst [vmem:[#allocation2 + $0x2b8] sm:$0xff] %v1353
        %1467 = vst [vmem:[#allocation2 + $0x2c0] sm:$0xff] %v1016
        %1468 = vst [vmem:[#allocation2 + $0x2c8] sm:$0xff] %v1018
        %1469 = vst [vmem:[#allocation2 + $0x2d0] sm:$0xff] %v1129
        %1470 = vst [vmem:[#allocation2 + $0x2d8] sm:$0xff] %v1131
        %1471 = vst [vmem:[#allocation2 + $0x2e0] sm:$0xff] %v1242
        %1472 = vst [vmem:[#allocation2 + $0x2e8] sm:$0xff] %v1244
        %1473 = vst [vmem:[#allocation2 + $0x2f0] sm:$0xff] %v1355
        %1474 = vst [vmem:[#allocation2 + $0x2f8] sm:$0xff] %v1357
        %1475 = vst [vmem:[#allocation2 + $0x300] sm:$0xff] %v1022
        %1476 = vst [vmem:[#allocation2 + $0x308] sm:$0xff] %v1024
        %1477 = vst [vmem:[#allocation2 + $0x310] sm:$0xff] %v1135
        %1478 = vst [vmem:[#allocation2 + $0x318] sm:$0xff] %v1137
        %1479 = vst [vmem:[#allocation2 + $0x320] sm:$0xff] %v1248
        %1480 = vst [vmem:[#allocation2 + $0x328] sm:$0xff] %v1250
        %1481 = vst [vmem:[#allocation2 + $0x330] sm:$0xff] %v1361
        %1482 = vst [vmem:[#allocation2 + $0x338] sm:$0xff] %v1363
        %1483 = vst [vmem:[#allocation2 + $0x340] sm:$0xff] %v1026
        %1484 = vst [vmem:[#allocation2 + $0x348] sm:$0xff] %v1028
        %1485 = vst [vmem:[#allocation2 + $0x350] sm:$0xff] %v1139
        %1486 = vst [vmem:[#allocation2 + $0x358] sm:$0xff] %v1141
        %1487 = vst [vmem:[#allocation2 + $0x360] sm:$0xff] %v1252
        %1488 = vst [vmem:[#allocation2 + $0x368] sm:$0xff] %v1254
        %1489 = vst [vmem:[#allocation2 + $0x370] sm:$0xff] %v1365
        %1490 = vst [vmem:[#allocation2 + $0x378] sm:$0xff] %v1367
        %1491 = vst [vmem:[#allocation2 + $0x380] sm:$0xff] %v1032
        %1492 = vst [vmem:[#allocation2 + $0x388] sm:$0xff] %v1034
        %1493 = vst [vmem:[#allocation2 + $0x390] sm:$0xff] %v1145
        %1494 = vst [vmem:[#allocation2 + $0x398] sm:$0xff] %v1147
        %1495 = vst [vmem:[#allocation2 + $0x3a0] sm:$0xff] %v1258
        %1496 = vst [vmem:[#allocation2 + $0x3a8] sm:$0xff] %v1260
        %1497 = vst [vmem:[#allocation2 + $0x3b0] sm:$0xff] %v1371
        %1498 = vst [vmem:[#allocation2 + $0x3b8] sm:$0xff] %v1373
        %1499 = vst [vmem:[#allocation2 + $0x3c0] sm:$0xff] %v1036
        %1500 = vst [vmem:[#allocation2 + $0x3c8] sm:$0xff] %v1038
        %1501 = vst [vmem:[#allocation2 + $0x3d0] sm:$0xff] %v1149
        %1502 = vst [vmem:[#allocation2 + $0x3d8] sm:$0xff] %v1151
        %1503 = vst [vmem:[#allocation2 + $0x3e0] sm:$0xff] %v1262
        %1504 = vst [vmem:[#allocation2 + $0x3e8] sm:$0xff] %v1264
        %1505 = vst [vmem:[#allocation2 + $0x3f0] sm:$0xff] %v1375
        %1506 = vst [vmem:[#allocation2 + $0x3f8] sm:$0xff] %v1377
        %v1507 = vld [vmem:[#allocation2] sm:$0xff]
        %v1508 = vld [vmem:[#allocation2 + $0x40] sm:$0xff]
        %v1509 = vld [vmem:[#allocation2 + $0x80] sm:$0xff]
        %v1510 = vld [vmem:[#allocation2 + $0xc0] sm:$0xff]
        %v1511 = vld [vmem:[#allocation2 + $0x100] sm:$0xff]
        %v1512 = vld [vmem:[#allocation2 + $0x140] sm:$0xff]
        %v1513 = vld [vmem:[#allocation2 + $0x180] sm:$0xff]
        %v1514 = vld [vmem:[#allocation2 + $0x1c0] sm:$0xff]
        %v1515 = vld [vmem:[#allocation2 + $0x200] sm:$0xff]
        %v1516 = vld [vmem:[#allocation2 + $0x240] sm:$0xff]
        %v1517 = vld [vmem:[#allocation2 + $0x280] sm:$0xff]
        %v1518 = vld [vmem:[#allocation2 + $0x2c0] sm:$0xff]
        %v1519 = vld [vmem:[#allocation2 + $0x300] sm:$0xff]
        %v1520 = vld [vmem:[#allocation2 + $0x340] sm:$0xff]
        %v1521 = vld [vmem:[#allocation2 + $0x380] sm:$0xff]
        %v1522 = vld [vmem:[#allocation2 + $0x3c0] sm:$0xff]
        %v1523 = vmul.f32 %v1507, %v1507
        %v1524 = vmul.f32 %v1508, %v1508
        %v1525 = vmul.f32 %v1509, %v1509
        %v1526 = vmul.f32 %v1510, %v1510
        %v1527 = vmul.f32 %v1511, %v1511
        %v1528 = vmul.f32 %v1512, %v1512
        %v1529 = vmul.f32 %v1513, %v1513
        %v1530 = vmul.f32 %v1514, %v1514
        %v1531 = vmul.f32 %v1515, %v1515
        %v1532 = vmul.f32 %v1516, %v1516
        %v1533 = vmul.f32 %v1517, %v1517
        %v1534 = vmul.f32 %v1518, %v1518
        %v1535 = vmul.f32 %v1519, %v1519
        %v1536 = vmul.f32 %v1520, %v1520
        %v1537 = vmul.f32 %v1521, %v1521
        %v1538 = vmul.f32 %v1522, %v1522
        %1539 = vadd.xlane.f32.xlu0 %v1523
        %v1540 = vpop.xlane.xlu0 %1539
        %1541 = vadd.xlane.f32.xlu0 %v1524
        %v1542 = vpop.xlane.xlu0 %1541
        %1543 = vadd.xlane.f32.xlu0 %v1525
        %v1544 = vpop.xlane.xlu0 %1543
        %1545 = vadd.xlane.f32.xlu0 %v1526
        %v1546 = vpop.xlane.xlu0 %1545
        %1547 = vadd.xlane.f32.xlu0 %v1527
        %v1548 = vpop.xlane.xlu0 %1547
        %1549 = vadd.xlane.f32.xlu0 %v1528
        %v1550 = vpop.xlane.xlu0 %1549
        %1551 = vadd.xlane.f32.xlu0 %v1529
        %v1552 = vpop.xlane.xlu0 %1551
        %1553 = vadd.xlane.f32.xlu0 %v1530
        %v1554 = vpop.xlane.xlu0 %1553
        %1555 = vadd.xlane.f32.xlu0 %v1531
        %v1556 = vpop.xlane.xlu0 %1555
        %1557 = vadd.xlane.f32.xlu0 %v1532
        %v1558 = vpop.xlane.xlu0 %1557
        %1559 = vadd.xlane.f32.xlu0 %v1533
        %v1560 = vpop.xlane.xlu0 %1559
        %1561 = vadd.xlane.f32.xlu0 %v1534
        %v1562 = vpop.xlane.xlu0 %1561
        %1563 = vadd.xlane.f32.xlu0 %v1535
        %v1564 = vpop.xlane.xlu0 %1563
        %1565 = vadd.xlane.f32.xlu0 %v1536
        %v1566 = vpop.xlane.xlu0 %1565
        %1567 = vadd.xlane.f32.xlu0 %v1537
        %v1568 = vpop.xlane.xlu0 %1567
        %1569 = vadd.xlane.f32.xlu0 %v1538
        %v1570 = vpop.xlane.xlu0 %1569
        %v1571 = vrcp.pop 128.0
        %v1572 = vmul.f32 %v1540, %v1571
        %v1573 = vmul.f32 %v1542, %v1571
        %v1574 = vmul.f32 %v1544, %v1571
        %v1575 = vmul.f32 %v1546, %v1571
        %v1576 = vmul.f32 %v1548, %v1571
        %v1577 = vmul.f32 %v1550, %v1571
        %v1578 = vmul.f32 %v1552, %v1571
        %v1579 = vmul.f32 %v1554, %v1571
        %v1580 = vmul.f32 %v1556, %v1571
        %v1581 = vmul.f32 %v1558, %v1571
        %v1582 = vmul.f32 %v1560, %v1571
        %v1583 = vmul.f32 %v1562, %v1571
        %v1584 = vmul.f32 %v1564, %v1571
        %v1585 = vmul.f32 %v1566, %v1571
        %v1586 = vmul.f32 %v1568, %v1571
        %v1587 = vmul.f32 %v1570, %v1571
        %v1588 = vadd.f32 %v1572, 1e-06
        %v1589 = vadd.f32 %v1573, 1e-06
        %v1590 = vadd.f32 %v1574, 1e-06
        %v1591 = vadd.f32 %v1575, 1e-06
        %v1592 = vadd.f32 %v1576, 1e-06
        %v1593 = vadd.f32 %v1577, 1e-06
        %v1594 = vadd.f32 %v1578, 1e-06
        %v1595 = vadd.f32 %v1579, 1e-06
        %v1596 = vadd.f32 %v1580, 1e-06
        %v1597 = vadd.f32 %v1581, 1e-06
        %v1598 = vadd.f32 %v1582, 1e-06
        %v1599 = vadd.f32 %v1583, 1e-06
        %v1600 = vadd.f32 %v1584, 1e-06
        %v1601 = vadd.f32 %v1585, 1e-06
        %v1602 = vadd.f32 %v1586, 1e-06
        %v1603 = vadd.f32 %v1587, 1e-06
        %v1604 = vrsqrt.pop %v1588
        %v1605 = vrsqrt.pop %v1589
        %v1606 = vrsqrt.pop %v1590
        %v1607 = vrsqrt.pop %v1591
        %v1608 = vrsqrt.pop %v1592
        %v1609 = vrsqrt.pop %v1593
        %v1610 = vrsqrt.pop %v1594
        %v1611 = vrsqrt.pop %v1595
        %v1612 = vrsqrt.pop %v1596
        %v1613 = vrsqrt.pop %v1597
        %v1614 = vrsqrt.pop %v1598
        %v1615 = vrsqrt.pop %v1599
        %v1616 = vrsqrt.pop %v1600
        %v1617 = vrsqrt.pop %v1601
        %v1618 = vrsqrt.pop %v1602
        %v1619 = vrsqrt.pop %v1603
        %v1620 = vmul.f32 %v1507, %v1604
        %v1621 = vmul.f32 %v1508, %v1605
        %v1622 = vmul.f32 %v1509, %v1606
        %v1623 = vmul.f32 %v1510, %v1607
        %v1624 = vmul.f32 %v1511, %v1608
        %v1625 = vmul.f32 %v1512, %v1609
        %v1626 = vmul.f32 %v1513, %v1610
        %v1627 = vmul.f32 %v1514, %v1611
        %v1628 = vmul.f32 %v1515, %v1612
        %v1629 = vmul.f32 %v1516, %v1613
        %v1630 = vmul.f32 %v1517, %v1614
        %v1631 = vmul.f32 %v1518, %v1615
        %v1632 = vmul.f32 %v1519, %v1616
        %v1633 = vmul.f32 %v1520, %v1617
        %v1634 = vmul.f32 %v1521, %v1618
        %v1635 = vmul.f32 %v1522, %v1619
        %v1637 = vlaneseq
        %v1638 = vshrl.u32 %v1637, 7
        %v1639 = vsub.s32 0, %v1638
        %v1640 = vrot.slane %v541, %v1639
        %v1642 = vmul.f32 %v1620, %v1640
        %v1643 = vmul.f32 %v1621, %v1640
        %v1644 = vmul.f32 %v1622, %v1640
        %v1645 = vmul.f32 %v1623, %v1640
        %v1646 = vmul.f32 %v1624, %v1640
        %v1647 = vmul.f32 %v1625, %v1640
        %v1648 = vmul.f32 %v1626, %v1640
        %v1649 = vmul.f32 %v1627, %v1640
        %v1650 = vmul.f32 %v1628, %v1640
        %v1651 = vmul.f32 %v1629, %v1640
        %v1652 = vmul.f32 %v1630, %v1640
        %v1653 = vmul.f32 %v1631, %v1640
        %v1654 = vmul.f32 %v1632, %v1640
        %v1655 = vmul.f32 %v1633, %v1640
        %v1656 = vmul.f32 %v1634, %v1640
        %v1657 = vmul.f32 %v1635, %v1640
        %v1658 = vmul.f32 %v1642, %v509
        %v1659 = vmul.f32 %v1643, %v510
        %v1660 = vmul.f32 %v1644, %v511
        %v1661 = vmul.f32 %v1645, %v512
        %v1662 = vmul.f32 %v1646, %v513
        %v1663 = vmul.f32 %v1647, %v514
        %v1664 = vmul.f32 %v1648, %v515
        %v1665 = vmul.f32 %v1649, %v516
        %v1666 = vmul.f32 %v1650, %v517
        %v1667 = vmul.f32 %v1651, %v518
        %v1668 = vmul.f32 %v1652, %v519
        %v1669 = vmul.f32 %v1653, %v520
        %v1670 = vmul.f32 %v1654, %v521
        %v1671 = vmul.f32 %v1655, %v522
        %v1672 = vmul.f32 %v1656, %v523
        %v1673 = vmul.f32 %v1657, %v524
        %1674 = vrot.lane.b32.xlu0 %v1642, 64
        %v1675 = vpop.permute.xlu0 %1674
        %1676 = vrot.lane.b32.xlu0 %v1643, 64
        %v1677 = vpop.permute.xlu0 %1676
        %1678 = vrot.lane.b32.xlu0 %v1644, 64
        %v1679 = vpop.permute.xlu0 %1678
        %1680 = vrot.lane.b32.xlu0 %v1645, 64
        %v1681 = vpop.permute.xlu0 %1680
        %1682 = vrot.lane.b32.xlu0 %v1646, 64
        %v1683 = vpop.permute.xlu0 %1682
        %1684 = vrot.lane.b32.xlu0 %v1647, 64
        %v1685 = vpop.permute.xlu0 %1684
        %1686 = vrot.lane.b32.xlu0 %v1648, 64
        %v1687 = vpop.permute.xlu0 %1686
        %1688 = vrot.lane.b32.xlu0 %v1649, 64
        %v1689 = vpop.permute.xlu0 %1688
        %1690 = vrot.lane.b32.xlu0 %v1650, 64
        %v1691 = vpop.permute.xlu0 %1690
        %1692 = vrot.lane.b32.xlu0 %v1651, 64
        %v1693 = vpop.permute.xlu0 %1692
        %1694 = vrot.lane.b32.xlu0 %v1652, 64
        %v1695 = vpop.permute.xlu0 %1694
        %1696 = vrot.lane.b32.xlu0 %v1653, 64
        %v1697 = vpop.permute.xlu0 %1696
        %1698 = vrot.lane.b32.xlu0 %v1654, 64
        %v1699 = vpop.permute.xlu0 %1698
        %1700 = vrot.lane.b32.xlu0 %v1655, 64
        %v1701 = vpop.permute.xlu0 %1700
        %1702 = vrot.lane.b32.xlu0 %v1656, 64
        %v1703 = vpop.permute.xlu0 %1702
        %1704 = vrot.lane.b32.xlu0 %v1657, 64
        %v1705 = vpop.permute.xlu0 %1704
        %v1706 = vmul.f32 %v1675, %v525
        %v1707 = vmul.f32 %v1677, %v526
        %v1708 = vmul.f32 %v1679, %v527
        %v1709 = vmul.f32 %v1681, %v528
        %v1710 = vmul.f32 %v1683, %v529
        %v1711 = vmul.f32 %v1685, %v530
        %v1712 = vmul.f32 %v1687, %v531
        %v1713 = vmul.f32 %v1689, %v532
        %v1714 = vmul.f32 %v1691, %v533
        %v1715 = vmul.f32 %v1693, %v534
        %v1716 = vmul.f32 %v1695, %v535
        %v1717 = vmul.f32 %v1697, %v536
        %v1718 = vmul.f32 %v1699, %v537
        %v1719 = vmul.f32 %v1701, %v538
        %v1720 = vmul.f32 %v1703, %v539
        %v1721 = vmul.f32 %v1705, %v540
        %v1722 = vadd.f32 %v1658, %v1706
        %v1723 = vadd.f32 %v1659, %v1707
        %v1724 = vadd.f32 %v1660, %v1708
        %v1725 = vadd.f32 %v1661, %v1709
        %v1726 = vadd.f32 %v1662, %v1710
        %v1727 = vadd.f32 %v1663, %v1711
        %v1728 = vadd.f32 %v1664, %v1712
        %v1729 = vadd.f32 %v1665, %v1713
        %v1730 = vadd.f32 %v1666, %v1714
        %v1731 = vadd.f32 %v1667, %v1715
        %v1732 = vadd.f32 %v1668, %v1716
        %v1733 = vadd.f32 %v1669, %v1717
        %v1734 = vadd.f32 %v1670, %v1718
        %v1735 = vadd.f32 %v1671, %v1719
        %v1736 = vadd.f32 %v1672, %v1720
        %v1737 = vadd.f32 %v1673, %v1721
        %v1738 = vpack.c.bf16 %v1723, %v1722
        %v1739 = vpack.c.bf16 %v1725, %v1724
        %v1740 = vpack.c.bf16 %v1727, %v1726
        %v1741 = vpack.c.bf16 %v1729, %v1728
        %v1742 = vpack.c.bf16 %v1731, %v1730
        %v1743 = vpack.c.bf16 %v1733, %v1732
        %v1744 = vpack.c.bf16 %v1735, %v1734
        %v1745 = vpack.c.bf16 %v1737, %v1736
        %v1754 = vunpack.c.l.b16 %v1738
        %v1755 = vunpack.c.h.b16 %v1738
        %v1756 = vunpack.c.l.b16 %v1739
        %v1757 = vunpack.c.h.b16 %v1739
        %v1758 = vunpack.c.l.b16 %v1740
        %v1759 = vunpack.c.h.b16 %v1740
        %v1760 = vunpack.c.l.b16 %v1741
        %v1761 = vunpack.c.h.b16 %v1741
        %v1762 = vunpack.c.l.b16 %v1742
        %v1763 = vunpack.c.h.b16 %v1742
        %v1764 = vunpack.c.l.b16 %v1743
        %v1765 = vunpack.c.h.b16 %v1743
        %v1766 = vunpack.c.l.b16 %v1744
        %v1767 = vunpack.c.h.b16 %v1744
        %v1768 = vunpack.c.l.b16 %v1745
        %v1769 = vunpack.c.h.b16 %v1745
        %v1770 = vpack.c.b16 %v1754, %v1754
        %v1771 = vpack.c.b16 %v1755, %v1755
        %v1772 = vpack.c.b16 %v1756, %v1756
        %v1773 = vpack.c.b16 %v1757, %v1757
        %v1774 = vpack.c.b16 %v1758, %v1758
        %v1775 = vpack.c.b16 %v1759, %v1759
        %v1776 = vpack.c.b16 %v1760, %v1760
        %v1777 = vpack.c.b16 %v1761, %v1761
        %v1778 = vpack.c.b16 %v1762, %v1762
        %v1779 = vpack.c.b16 %v1763, %v1763
        %v1780 = vpack.c.b16 %v1764, %v1764
        %v1781 = vpack.c.b16 %v1765, %v1765
        %v1782 = vpack.c.b16 %v1766, %v1766
        %v1783 = vpack.c.b16 %v1767, %v1767
        %v1784 = vpack.c.b16 %v1768, %v1768
        %v1785 = vpack.c.b16 %v1769, %v1769
        %1802 = vst [vmem:[%s463] sm:$0xf] %v1770
        %1803 = vst [vmem:[%s463 + $0x4] sm:$0xf] %v1771
        %1804 = vst [vmem:[%s463 + $0x8] sm:$0xf] %v1772
        %1805 = vst [vmem:[%s463 + $0xc] sm:$0xf] %v1773
        %1806 = vst [vmem:[%s463 + $0x10] sm:$0xf] %v1774
        %1807 = vst [vmem:[%s463 + $0x14] sm:$0xf] %v1775
        %1808 = vst [vmem:[%s463 + $0x18] sm:$0xf] %v1776
        %1809 = vst [vmem:[%s463 + $0x1c] sm:$0xf] %v1777
        %1810 = vst [vmem:[%s463 + $0x20] sm:$0xf] %v1778
        %1811 = vst [vmem:[%s463 + $0x24] sm:$0xf] %v1779
        %1812 = vst [vmem:[%s463 + $0x28] sm:$0xf] %v1780
        %1813 = vst [vmem:[%s463 + $0x2c] sm:$0xf] %v1781
        %1814 = vst [vmem:[%s463 + $0x30] sm:$0xf] %v1782
        %1815 = vst [vmem:[%s463 + $0x34] sm:$0xf] %v1783
        %1816 = vst [vmem:[%s463 + $0x38] sm:$0xf] %v1784
        %1817 = vst [vmem:[%s463 + $0x3c] sm:$0xf] %v1785
        %v1818 = vld [vmem:[#allocation2 + $0x8] sm:$0xff]
        %v1819 = vld [vmem:[#allocation2 + $0x48] sm:$0xff]
        %v1820 = vld [vmem:[#allocation2 + $0x88] sm:$0xff]
        %v1821 = vld [vmem:[#allocation2 + $0xc8] sm:$0xff]
        %v1822 = vld [vmem:[#allocation2 + $0x108] sm:$0xff]
        %v1823 = vld [vmem:[#allocation2 + $0x148] sm:$0xff]
        %v1824 = vld [vmem:[#allocation2 + $0x188] sm:$0xff]
        %v1825 = vld [vmem:[#allocation2 + $0x1c8] sm:$0xff]
        %v1826 = vld [vmem:[#allocation2 + $0x208] sm:$0xff]
        %v1827 = vld [vmem:[#allocation2 + $0x248] sm:$0xff]
        %v1828 = vld [vmem:[#allocation2 + $0x288] sm:$0xff]
        %v1829 = vld [vmem:[#allocation2 + $0x2c8] sm:$0xff]
        %v1830 = vld [vmem:[#allocation2 + $0x308] sm:$0xff]
        %v1831 = vld [vmem:[#allocation2 + $0x348] sm:$0xff]
        %v1832 = vld [vmem:[#allocation2 + $0x388] sm:$0xff]
        %v1833 = vld [vmem:[#allocation2 + $0x3c8] sm:$0xff]
        %v1834 = vmul.f32 %v1818, %v1818
        %v1835 = vmul.f32 %v1819, %v1819
        %v1836 = vmul.f32 %v1820, %v1820
        %v1837 = vmul.f32 %v1821, %v1821
        %v1838 = vmul.f32 %v1822, %v1822
        %v1839 = vmul.f32 %v1823, %v1823
        %v1840 = vmul.f32 %v1824, %v1824
        %v1841 = vmul.f32 %v1825, %v1825
        %v1842 = vmul.f32 %v1826, %v1826
        %v1843 = vmul.f32 %v1827, %v1827
        %v1844 = vmul.f32 %v1828, %v1828
        %v1845 = vmul.f32 %v1829, %v1829
        %v1846 = vmul.f32 %v1830, %v1830
        %v1847 = vmul.f32 %v1831, %v1831
        %v1848 = vmul.f32 %v1832, %v1832
        %v1849 = vmul.f32 %v1833, %v1833
        %1850 = vadd.xlane.f32.xlu0 %v1834
        %v1851 = vpop.xlane.xlu0 %1850
        %1852 = vadd.xlane.f32.xlu0 %v1835
        %v1853 = vpop.xlane.xlu0 %1852
        %1854 = vadd.xlane.f32.xlu0 %v1836
        %v1855 = vpop.xlane.xlu0 %1854
        %1856 = vadd.xlane.f32.xlu0 %v1837
        %v1857 = vpop.xlane.xlu0 %1856
        %1858 = vadd.xlane.f32.xlu0 %v1838
        %v1859 = vpop.xlane.xlu0 %1858
        %1860 = vadd.xlane.f32.xlu0 %v1839
        %v1861 = vpop.xlane.xlu0 %1860
        %1862 = vadd.xlane.f32.xlu0 %v1840
        %v1863 = vpop.xlane.xlu0 %1862
        %1864 = vadd.xlane.f32.xlu0 %v1841
        %v1865 = vpop.xlane.xlu0 %1864
        %1866 = vadd.xlane.f32.xlu0 %v1842
        %v1867 = vpop.xlane.xlu0 %1866
        %1868 = vadd.xlane.f32.xlu0 %v1843
        %v1869 = vpop.xlane.xlu0 %1868
        %1870 = vadd.xlane.f32.xlu0 %v1844
        %v1871 = vpop.xlane.xlu0 %1870
        %1872 = vadd.xlane.f32.xlu0 %v1845
        %v1873 = vpop.xlane.xlu0 %1872
        %1874 = vadd.xlane.f32.xlu0 %v1846
        %v1875 = vpop.xlane.xlu0 %1874
        %1876 = vadd.xlane.f32.xlu0 %v1847
        %v1877 = vpop.xlane.xlu0 %1876
        %1878 = vadd.xlane.f32.xlu0 %v1848
        %v1879 = vpop.xlane.xlu0 %1878
        %1880 = vadd.xlane.f32.xlu0 %v1849
        %v1881 = vpop.xlane.xlu0 %1880
        %v1882 = vmul.f32 %v1851, %v1571
        %v1883 = vmul.f32 %v1853, %v1571
        %v1884 = vmul.f32 %v1855, %v1571
        %v1885 = vmul.f32 %v1857, %v1571
        %v1886 = vmul.f32 %v1859, %v1571
        %v1887 = vmul.f32 %v1861, %v1571
        %v1888 = vmul.f32 %v1863, %v1571
        %v1889 = vmul.f32 %v1865, %v1571
        %v1890 = vmul.f32 %v1867, %v1571
        %v1891 = vmul.f32 %v1869, %v1571
        %v1892 = vmul.f32 %v1871, %v1571
        %v1893 = vmul.f32 %v1873, %v1571
        %v1894 = vmul.f32 %v1875, %v1571
        %v1895 = vmul.f32 %v1877, %v1571
        %v1896 = vmul.f32 %v1879, %v1571
        %v1897 = vmul.f32 %v1881, %v1571
        %v1898 = vadd.f32 %v1882, 1e-06
        %v1899 = vadd.f32 %v1883, 1e-06
        %v1900 = vadd.f32 %v1884, 1e-06
        %v1901 = vadd.f32 %v1885, 1e-06
        %v1902 = vadd.f32 %v1886, 1e-06
        %v1903 = vadd.f32 %v1887, 1e-06
        %v1904 = vadd.f32 %v1888, 1e-06
        %v1905 = vadd.f32 %v1889, 1e-06
        %v1906 = vadd.f32 %v1890, 1e-06
        %v1907 = vadd.f32 %v1891, 1e-06
        %v1908 = vadd.f32 %v1892, 1e-06
        %v1909 = vadd.f32 %v1893, 1e-06
        %v1910 = vadd.f32 %v1894, 1e-06
        %v1911 = vadd.f32 %v1895, 1e-06
        %v1912 = vadd.f32 %v1896, 1e-06
        %v1913 = vadd.f32 %v1897, 1e-06
        %v1914 = vrsqrt.pop %v1898
        %v1915 = vrsqrt.pop %v1899
        %v1916 = vrsqrt.pop %v1900
        %v1917 = vrsqrt.pop %v1901
        %v1918 = vrsqrt.pop %v1902
        %v1919 = vrsqrt.pop %v1903
        %v1920 = vrsqrt.pop %v1904
        %v1921 = vrsqrt.pop %v1905
        %v1922 = vrsqrt.pop %v1906
        %v1923 = vrsqrt.pop %v1907
        %v1924 = vrsqrt.pop %v1908
        %v1925 = vrsqrt.pop %v1909
        %v1926 = vrsqrt.pop %v1910
        %v1927 = vrsqrt.pop %v1911
        %v1928 = vrsqrt.pop %v1912
        %v1929 = vrsqrt.pop %v1913
        %v1930 = vmul.f32 %v1818, %v1914
        %v1931 = vmul.f32 %v1819, %v1915
        %v1932 = vmul.f32 %v1820, %v1916
        %v1933 = vmul.f32 %v1821, %v1917
        %v1934 = vmul.f32 %v1822, %v1918
        %v1935 = vmul.f32 %v1823, %v1919
        %v1936 = vmul.f32 %v1824, %v1920
        %v1937 = vmul.f32 %v1825, %v1921
        %v1938 = vmul.f32 %v1826, %v1922
        %v1939 = vmul.f32 %v1827, %v1923
        %v1940 = vmul.f32 %v1828, %v1924
        %v1941 = vmul.f32 %v1829, %v1925
        %v1942 = vmul.f32 %v1830, %v1926
        %v1943 = vmul.f32 %v1831, %v1927
        %v1944 = vmul.f32 %v1832, %v1928
        %v1945 = vmul.f32 %v1833, %v1929
        %v1946 = vmul.f32 %v1930, %v1640
        %v1947 = vmul.f32 %v1931, %v1640
        %v1948 = vmul.f32 %v1932, %v1640
        %v1949 = vmul.f32 %v1933, %v1640
        %v1950 = vmul.f32 %v1934, %v1640
        %v1951 = vmul.f32 %v1935, %v1640
        %v1952 = vmul.f32 %v1936, %v1640
        %v1953 = vmul.f32 %v1937, %v1640
        %v1954 = vmul.f32 %v1938, %v1640
        %v1955 = vmul.f32 %v1939, %v1640
        %v1956 = vmul.f32 %v1940, %v1640
        %v1957 = vmul.f32 %v1941, %v1640
        %v1958 = vmul.f32 %v1942, %v1640
        %v1959 = vmul.f32 %v1943, %v1640
        %v1960 = vmul.f32 %v1944, %v1640
        %v1961 = vmul.f32 %v1945, %v1640
        %v1962 = vmul.f32 %v1946, %v509
        %v1963 = vmul.f32 %v1947, %v510
        %v1964 = vmul.f32 %v1948, %v511
        %v1965 = vmul.f32 %v1949, %v512
        %v1966 = vmul.f32 %v1950, %v513
        %v1967 = vmul.f32 %v1951, %v514
        %v1968 = vmul.f32 %v1952, %v515
        %v1969 = vmul.f32 %v1953, %v516
        %v1970 = vmul.f32 %v1954, %v517
        %v1971 = vmul.f32 %v1955, %v518
        %v1972 = vmul.f32 %v1956, %v519
        %v1973 = vmul.f32 %v1957, %v520
        %v1974 = vmul.f32 %v1958, %v521
        %v1975 = vmul.f32 %v1959, %v522
        %v1976 = vmul.f32 %v1960, %v523
        %v1977 = vmul.f32 %v1961, %v524
        %1978 = vrot.lane.b32.xlu0 %v1946, 64
        %v1979 = vpop.permute.xlu0 %1978
        %1980 = vrot.lane.b32.xlu0 %v1947, 64
        %v1981 = vpop.permute.xlu0 %1980
        %1982 = vrot.lane.b32.xlu0 %v1948, 64
        %v1983 = vpop.permute.xlu0 %1982
        %1984 = vrot.lane.b32.xlu0 %v1949, 64
        %v1985 = vpop.permute.xlu0 %1984
        %1986 = vrot.lane.b32.xlu0 %v1950, 64
        %v1987 = vpop.permute.xlu0 %1986
        %1988 = vrot.lane.b32.xlu0 %v1951, 64
        %v1989 = vpop.permute.xlu0 %1988
        %1990 = vrot.lane.b32.xlu0 %v1952, 64
        %v1991 = vpop.permute.xlu0 %1990
        %1992 = vrot.lane.b32.xlu0 %v1953, 64
        %v1993 = vpop.permute.xlu0 %1992
        %1994 = vrot.lane.b32.xlu0 %v1954, 64
        %v1995 = vpop.permute.xlu0 %1994
        %1996 = vrot.lane.b32.xlu0 %v1955, 64
        %v1997 = vpop.permute.xlu0 %1996
        %1998 = vrot.lane.b32.xlu0 %v1956, 64
        %v1999 = vpop.permute.xlu0 %1998
        %2000 = vrot.lane.b32.xlu0 %v1957, 64
        %v2001 = vpop.permute.xlu0 %2000
        %2002 = vrot.lane.b32.xlu0 %v1958, 64
        %v2003 = vpop.permute.xlu0 %2002
        %2004 = vrot.lane.b32.xlu0 %v1959, 64
        %v2005 = vpop.permute.xlu0 %2004
        %2006 = vrot.lane.b32.xlu0 %v1960, 64
        %v2007 = vpop.permute.xlu0 %2006
        %2008 = vrot.lane.b32.xlu0 %v1961, 64
        %v2009 = vpop.permute.xlu0 %2008
        %v2010 = vmul.f32 %v1979, %v525
        %v2011 = vmul.f32 %v1981, %v526
        %v2012 = vmul.f32 %v1983, %v527
        %v2013 = vmul.f32 %v1985, %v528
        %v2014 = vmul.f32 %v1987, %v529
        %v2015 = vmul.f32 %v1989, %v530
        %v2016 = vmul.f32 %v1991, %v531
        %v2017 = vmul.f32 %v1993, %v532
        %v2018 = vmul.f32 %v1995, %v533
        %v2019 = vmul.f32 %v1997, %v534
        %v2020 = vmul.f32 %v1999, %v535
        %v2021 = vmul.f32 %v2001, %v536
        %v2022 = vmul.f32 %v2003, %v537
        %v2023 = vmul.f32 %v2005, %v538
        %v2024 = vmul.f32 %v2007, %v539
        %v2025 = vmul.f32 %v2009, %v540
        %v2026 = vadd.f32 %v1962, %v2010
        %v2027 = vadd.f32 %v1963, %v2011
        %v2028 = vadd.f32 %v1964, %v2012
        %v2029 = vadd.f32 %v1965, %v2013
        %v2030 = vadd.f32 %v1966, %v2014
        %v2031 = vadd.f32 %v1967, %v2015
        %v2032 = vadd.f32 %v1968, %v2016
        %v2033 = vadd.f32 %v1969, %v2017
        %v2034 = vadd.f32 %v1970, %v2018
        %v2035 = vadd.f32 %v1971, %v2019
        %v2036 = vadd.f32 %v1972, %v2020
        %v2037 = vadd.f32 %v1973, %v2021
        %v2038 = vadd.f32 %v1974, %v2022
        %v2039 = vadd.f32 %v1975, %v2023
        %v2040 = vadd.f32 %v1976, %v2024
        %v2041 = vadd.f32 %v1977, %v2025
        %v2042 = vpack.c.bf16 %v2027, %v2026
        %v2043 = vpack.c.bf16 %v2029, %v2028
        %v2044 = vpack.c.bf16 %v2031, %v2030
        %v2045 = vpack.c.bf16 %v2033, %v2032
        %v2046 = vpack.c.bf16 %v2035, %v2034
        %v2047 = vpack.c.bf16 %v2037, %v2036
        %v2048 = vpack.c.bf16 %v2039, %v2038
        %v2049 = vpack.c.bf16 %v2041, %v2040
        %v2058 = vunpack.c.l.b16 %v2042
        %v2059 = vunpack.c.h.b16 %v2042
        %v2060 = vunpack.c.l.b16 %v2043
        %v2061 = vunpack.c.h.b16 %v2043
        %v2062 = vunpack.c.l.b16 %v2044
        %v2063 = vunpack.c.h.b16 %v2044
        %v2064 = vunpack.c.l.b16 %v2045
        %v2065 = vunpack.c.h.b16 %v2045
        %v2066 = vunpack.c.l.b16 %v2046
        %v2067 = vunpack.c.h.b16 %v2046
        %v2068 = vunpack.c.l.b16 %v2047
        %v2069 = vunpack.c.h.b16 %v2047
        %v2070 = vunpack.c.l.b16 %v2048
        %v2071 = vunpack.c.h.b16 %v2048
        %v2072 = vunpack.c.l.b16 %v2049
        %v2073 = vunpack.c.h.b16 %v2049
        %v2074 = vpack.c.b16 %v2058, %v2058
        %v2075 = vpack.c.b16 %v2059, %v2059
        %v2076 = vpack.c.b16 %v2060, %v2060
        %v2077 = vpack.c.b16 %v2061, %v2061
        %v2078 = vpack.c.b16 %v2062, %v2062
        %v2079 = vpack.c.b16 %v2063, %v2063
        %v2080 = vpack.c.b16 %v2064, %v2064
        %v2081 = vpack.c.b16 %v2065, %v2065
        %v2082 = vpack.c.b16 %v2066, %v2066
        %v2083 = vpack.c.b16 %v2067, %v2067
        %v2084 = vpack.c.b16 %v2068, %v2068
        %v2085 = vpack.c.b16 %v2069, %v2069
        %v2086 = vpack.c.b16 %v2070, %v2070
        %v2087 = vpack.c.b16 %v2071, %v2071
        %v2088 = vpack.c.b16 %v2072, %v2072
        %v2089 = vpack.c.b16 %v2073, %v2073
        %s2106 = scalar_lea.vmem %s463, 64 [#allocation13]
        %2107 = vst [vmem:[%s2106] sm:$0xf] %v2074
        %2108 = vst [vmem:[%s2106 + $0x4] sm:$0xf] %v2075
        %2109 = vst [vmem:[%s2106 + $0x8] sm:$0xf] %v2076
        %2110 = vst [vmem:[%s2106 + $0xc] sm:$0xf] %v2077
        %2111 = vst [vmem:[%s2106 + $0x10] sm:$0xf] %v2078
        %2112 = vst [vmem:[%s2106 + $0x14] sm:$0xf] %v2079
        %2113 = vst [vmem:[%s2106 + $0x18] sm:$0xf] %v2080
        %2114 = vst [vmem:[%s2106 + $0x1c] sm:$0xf] %v2081
        %2115 = vst [vmem:[%s2106 + $0x20] sm:$0xf] %v2082
        %2116 = vst [vmem:[%s2106 + $0x24] sm:$0xf] %v2083
        %2117 = vst [vmem:[%s2106 + $0x28] sm:$0xf] %v2084
        %2118 = vst [vmem:[%s2106 + $0x2c] sm:$0xf] %v2085
        %2119 = vst [vmem:[%s2106 + $0x30] sm:$0xf] %v2086
        %2120 = vst [vmem:[%s2106 + $0x34] sm:$0xf] %v2087
        %2121 = vst [vmem:[%s2106 + $0x38] sm:$0xf] %v2088
        %2122 = vst [vmem:[%s2106 + $0x3c] sm:$0xf] %v2089
        %v2123 = vld [vmem:[#allocation2 + $0x10] sm:$0xff]
        %v2124 = vld [vmem:[#allocation2 + $0x50] sm:$0xff]
        %v2125 = vld [vmem:[#allocation2 + $0x90] sm:$0xff]
        %v2126 = vld [vmem:[#allocation2 + $0xd0] sm:$0xff]
        %v2127 = vld [vmem:[#allocation2 + $0x110] sm:$0xff]
        %v2128 = vld [vmem:[#allocation2 + $0x150] sm:$0xff]
        %v2129 = vld [vmem:[#allocation2 + $0x190] sm:$0xff]
        %v2130 = vld [vmem:[#allocation2 + $0x1d0] sm:$0xff]
        %v2131 = vld [vmem:[#allocation2 + $0x210] sm:$0xff]
        %v2132 = vld [vmem:[#allocation2 + $0x250] sm:$0xff]
        %v2133 = vld [vmem:[#allocation2 + $0x290] sm:$0xff]
        %v2134 = vld [vmem:[#allocation2 + $0x2d0] sm:$0xff]
        %v2135 = vld [vmem:[#allocation2 + $0x310] sm:$0xff]
        %v2136 = vld [vmem:[#allocation2 + $0x350] sm:$0xff]
        %v2137 = vld [vmem:[#allocation2 + $0x390] sm:$0xff]
        %v2138 = vld [vmem:[#allocation2 + $0x3d0] sm:$0xff]
        %v2139 = vmul.f32 %v2123, %v2123
        %v2140 = vmul.f32 %v2124, %v2124
        %v2141 = vmul.f32 %v2125, %v2125
        %v2142 = vmul.f32 %v2126, %v2126
        %v2143 = vmul.f32 %v2127, %v2127
        %v2144 = vmul.f32 %v2128, %v2128
        %v2145 = vmul.f32 %v2129, %v2129
        %v2146 = vmul.f32 %v2130, %v2130
        %v2147 = vmul.f32 %v2131, %v2131
        %v2148 = vmul.f32 %v2132, %v2132
        %v2149 = vmul.f32 %v2133, %v2133
        %v2150 = vmul.f32 %v2134, %v2134
        %v2151 = vmul.f32 %v2135, %v2135
        %v2152 = vmul.f32 %v2136, %v2136
        %v2153 = vmul.f32 %v2137, %v2137
        %v2154 = vmul.f32 %v2138, %v2138
        %2155 = vadd.xlane.f32.xlu0 %v2139
        %v2156 = vpop.xlane.xlu0 %2155
        %2157 = vadd.xlane.f32.xlu0 %v2140
        %v2158 = vpop.xlane.xlu0 %2157
        %2159 = vadd.xlane.f32.xlu0 %v2141
        %v2160 = vpop.xlane.xlu0 %2159
        %2161 = vadd.xlane.f32.xlu0 %v2142
        %v2162 = vpop.xlane.xlu0 %2161
        %2163 = vadd.xlane.f32.xlu0 %v2143
        %v2164 = vpop.xlane.xlu0 %2163
        %2165 = vadd.xlane.f32.xlu0 %v2144
        %v2166 = vpop.xlane.xlu0 %2165
        %2167 = vadd.xlane.f32.xlu0 %v2145
        %v2168 = vpop.xlane.xlu0 %2167
        %2169 = vadd.xlane.f32.xlu0 %v2146
        %v2170 = vpop.xlane.xlu0 %2169
        %2171 = vadd.xlane.f32.xlu0 %v2147
        %v2172 = vpop.xlane.xlu0 %2171
        %2173 = vadd.xlane.f32.xlu0 %v2148
        %v2174 = vpop.xlane.xlu0 %2173
        %2175 = vadd.xlane.f32.xlu0 %v2149
        %v2176 = vpop.xlane.xlu0 %2175
        %2177 = vadd.xlane.f32.xlu0 %v2150
        %v2178 = vpop.xlane.xlu0 %2177
        %2179 = vadd.xlane.f32.xlu0 %v2151
        %v2180 = vpop.xlane.xlu0 %2179
        %2181 = vadd.xlane.f32.xlu0 %v2152
        %v2182 = vpop.xlane.xlu0 %2181
        %2183 = vadd.xlane.f32.xlu0 %v2153
        %v2184 = vpop.xlane.xlu0 %2183
        %2185 = vadd.xlane.f32.xlu0 %v2154
        %v2186 = vpop.xlane.xlu0 %2185
        %v2187 = vmul.f32 %v2156, %v1571
        %v2188 = vmul.f32 %v2158, %v1571
        %v2189 = vmul.f32 %v2160, %v1571
        %v2190 = vmul.f32 %v2162, %v1571
        %v2191 = vmul.f32 %v2164, %v1571
        %v2192 = vmul.f32 %v2166, %v1571
        %v2193 = vmul.f32 %v2168, %v1571
        %v2194 = vmul.f32 %v2170, %v1571
        %v2195 = vmul.f32 %v2172, %v1571
        %v2196 = vmul.f32 %v2174, %v1571
        %v2197 = vmul.f32 %v2176, %v1571
        %v2198 = vmul.f32 %v2178, %v1571
        %v2199 = vmul.f32 %v2180, %v1571
        %v2200 = vmul.f32 %v2182, %v1571
        %v2201 = vmul.f32 %v2184, %v1571
        %v2202 = vmul.f32 %v2186, %v1571
        %v2203 = vadd.f32 %v2187, 1e-06
        %v2204 = vadd.f32 %v2188, 1e-06
        %v2205 = vadd.f32 %v2189, 1e-06
        %v2206 = vadd.f32 %v2190, 1e-06
        %v2207 = vadd.f32 %v2191, 1e-06
        %v2208 = vadd.f32 %v2192, 1e-06
        %v2209 = vadd.f32 %v2193, 1e-06
        %v2210 = vadd.f32 %v2194, 1e-06
        %v2211 = vadd.f32 %v2195, 1e-06
        %v2212 = vadd.f32 %v2196, 1e-06
        %v2213 = vadd.f32 %v2197, 1e-06
        %v2214 = vadd.f32 %v2198, 1e-06
        %v2215 = vadd.f32 %v2199, 1e-06
        %v2216 = vadd.f32 %v2200, 1e-06
        %v2217 = vadd.f32 %v2201, 1e-06
        %v2218 = vadd.f32 %v2202, 1e-06
        %v2219 = vrsqrt.pop %v2203
        %v2220 = vrsqrt.pop %v2204
        %v2221 = vrsqrt.pop %v2205
        %v2222 = vrsqrt.pop %v2206
        %v2223 = vrsqrt.pop %v2207
        %v2224 = vrsqrt.pop %v2208
        %v2225 = vrsqrt.pop %v2209
        %v2226 = vrsqrt.pop %v2210
        %v2227 = vrsqrt.pop %v2211
        %v2228 = vrsqrt.pop %v2212
        %v2229 = vrsqrt.pop %v2213
        %v2230 = vrsqrt.pop %v2214
        %v2231 = vrsqrt.pop %v2215
        %v2232 = vrsqrt.pop %v2216
        %v2233 = vrsqrt.pop %v2217
        %v2234 = vrsqrt.pop %v2218
        %v2235 = vmul.f32 %v2123, %v2219
        %v2236 = vmul.f32 %v2124, %v2220
        %v2237 = vmul.f32 %v2125, %v2221
        %v2238 = vmul.f32 %v2126, %v2222
        %v2239 = vmul.f32 %v2127, %v2223
        %v2240 = vmul.f32 %v2128, %v2224
        %v2241 = vmul.f32 %v2129, %v2225
        %v2242 = vmul.f32 %v2130, %v2226
        %v2243 = vmul.f32 %v2131, %v2227
        %v2244 = vmul.f32 %v2132, %v2228
        %v2245 = vmul.f32 %v2133, %v2229
        %v2246 = vmul.f32 %v2134, %v2230
        %v2247 = vmul.f32 %v2135, %v2231
        %v2248 = vmul.f32 %v2136, %v2232
        %v2249 = vmul.f32 %v2137, %v2233
        %v2250 = vmul.f32 %v2138, %v2234
        %v2251 = vmul.f32 %v2235, %v1640
        %v2252 = vmul.f32 %v2236, %v1640
        %v2253 = vmul.f32 %v2237, %v1640
        %v2254 = vmul.f32 %v2238, %v1640
        %v2255 = vmul.f32 %v2239, %v1640
        %v2256 = vmul.f32 %v2240, %v1640
        %v2257 = vmul.f32 %v2241, %v1640
        %v2258 = vmul.f32 %v2242, %v1640
        %v2259 = vmul.f32 %v2243, %v1640
        %v2260 = vmul.f32 %v2244, %v1640
        %v2261 = vmul.f32 %v2245, %v1640
        %v2262 = vmul.f32 %v2246, %v1640
        %v2263 = vmul.f32 %v2247, %v1640
        %v2264 = vmul.f32 %v2248, %v1640
        %v2265 = vmul.f32 %v2249, %v1640
        %v2266 = vmul.f32 %v2250, %v1640
        %v2267 = vmul.f32 %v2251, %v509
        %v2268 = vmul.f32 %v2252, %v510
        %v2269 = vmul.f32 %v2253, %v511
        %v2270 = vmul.f32 %v2254, %v512
        %v2271 = vmul.f32 %v2255, %v513
        %v2272 = vmul.f32 %v2256, %v514
        %v2273 = vmul.f32 %v2257, %v515
        %v2274 = vmul.f32 %v2258, %v516
        %v2275 = vmul.f32 %v2259, %v517
        %v2276 = vmul.f32 %v2260, %v518
        %v2277 = vmul.f32 %v2261, %v519
        %v2278 = vmul.f32 %v2262, %v520
        %v2279 = vmul.f32 %v2263, %v521
        %v2280 = vmul.f32 %v2264, %v522
        %v2281 = vmul.f32 %v2265, %v523
        %v2282 = vmul.f32 %v2266, %v524
        %2283 = vrot.lane.b32.xlu0 %v2251, 64
        %v2284 = vpop.permute.xlu0 %2283
        %2285 = vrot.lane.b32.xlu0 %v2252, 64
        %v2286 = vpop.permute.xlu0 %2285
        %2287 = vrot.lane.b32.xlu0 %v2253, 64
        %v2288 = vpop.permute.xlu0 %2287
        %2289 = vrot.lane.b32.xlu0 %v2254, 64
        %v2290 = vpop.permute.xlu0 %2289
        %2291 = vrot.lane.b32.xlu0 %v2255, 64
        %v2292 = vpop.permute.xlu0 %2291
        %2293 = vrot.lane.b32.xlu0 %v2256, 64
        %v2294 = vpop.permute.xlu0 %2293
        %2295 = vrot.lane.b32.xlu0 %v2257, 64
        %v2296 = vpop.permute.xlu0 %2295
        %2297 = vrot.lane.b32.xlu0 %v2258, 64
        %v2298 = vpop.permute.xlu0 %2297
        %2299 = vrot.lane.b32.xlu0 %v2259, 64
        %v2300 = vpop.permute.xlu0 %2299
        %2301 = vrot.lane.b32.xlu0 %v2260, 64
        %v2302 = vpop.permute.xlu0 %2301
        %2303 = vrot.lane.b32.xlu0 %v2261, 64
        %v2304 = vpop.permute.xlu0 %2303
        %2305 = vrot.lane.b32.xlu0 %v2262, 64
        %v2306 = vpop.permute.xlu0 %2305
        %2307 = vrot.lane.b32.xlu0 %v2263, 64
        %v2308 = vpop.permute.xlu0 %2307
        %2309 = vrot.lane.b32.xlu0 %v2264, 64
        %v2310 = vpop.permute.xlu0 %2309
        %2311 = vrot.lane.b32.xlu0 %v2265, 64
        %v2312 = vpop.permute.xlu0 %2311
        %2313 = vrot.lane.b32.xlu0 %v2266, 64
        %v2314 = vpop.permute.xlu0 %2313
        %v2315 = vmul.f32 %v2284, %v525
        %v2316 = vmul.f32 %v2286, %v526
        %v2317 = vmul.f32 %v2288, %v527
        %v2318 = vmul.f32 %v2290, %v528
        %v2319 = vmul.f32 %v2292, %v529
        %v2320 = vmul.f32 %v2294, %v530
        %v2321 = vmul.f32 %v2296, %v531
        %v2322 = vmul.f32 %v2298, %v532
        %v2323 = vmul.f32 %v2300, %v533
        %v2324 = vmul.f32 %v2302, %v534
        %v2325 = vmul.f32 %v2304, %v535
        %v2326 = vmul.f32 %v2306, %v536
        %v2327 = vmul.f32 %v2308, %v537
        %v2328 = vmul.f32 %v2310, %v538
        %v2329 = vmul.f32 %v2312, %v539
        %v2330 = vmul.f32 %v2314, %v540
        %v2331 = vadd.f32 %v2267, %v2315
        %v2332 = vadd.f32 %v2268, %v2316
        %v2333 = vadd.f32 %v2269, %v2317
        %v2334 = vadd.f32 %v2270, %v2318
        %v2335 = vadd.f32 %v2271, %v2319
        %v2336 = vadd.f32 %v2272, %v2320
        %v2337 = vadd.f32 %v2273, %v2321
        %v2338 = vadd.f32 %v2274, %v2322
        %v2339 = vadd.f32 %v2275, %v2323
        %v2340 = vadd.f32 %v2276, %v2324
        %v2341 = vadd.f32 %v2277, %v2325
        %v2342 = vadd.f32 %v2278, %v2326
        %v2343 = vadd.f32 %v2279, %v2327
        %v2344 = vadd.f32 %v2280, %v2328
        %v2345 = vadd.f32 %v2281, %v2329
        %v2346 = vadd.f32 %v2282, %v2330
        %v2347 = vpack.c.bf16 %v2332, %v2331
        %v2348 = vpack.c.bf16 %v2334, %v2333
        %v2349 = vpack.c.bf16 %v2336, %v2335
        %v2350 = vpack.c.bf16 %v2338, %v2337
        %v2351 = vpack.c.bf16 %v2340, %v2339
        %v2352 = vpack.c.bf16 %v2342, %v2341
        %v2353 = vpack.c.bf16 %v2344, %v2343
        %v2354 = vpack.c.bf16 %v2346, %v2345
        %v2363 = vunpack.c.l.b16 %v2347
        %v2364 = vunpack.c.h.b16 %v2347
        %v2365 = vunpack.c.l.b16 %v2348
        %v2366 = vunpack.c.h.b16 %v2348
        %v2367 = vunpack.c.l.b16 %v2349
        %v2368 = vunpack.c.h.b16 %v2349
        %v2369 = vunpack.c.l.b16 %v2350
        %v2370 = vunpack.c.h.b16 %v2350
        %v2371 = vunpack.c.l.b16 %v2351
        %v2372 = vunpack.c.h.b16 %v2351
        %v2373 = vunpack.c.l.b16 %v2352
        %v2374 = vunpack.c.h.b16 %v2352
        %v2375 = vunpack.c.l.b16 %v2353
        %v2376 = vunpack.c.h.b16 %v2353
        %v2377 = vunpack.c.l.b16 %v2354
        %v2378 = vunpack.c.h.b16 %v2354
        %v2379 = vpack.c.b16 %v2363, %v2363
        %v2380 = vpack.c.b16 %v2364, %v2364
        %v2381 = vpack.c.b16 %v2365, %v2365
        %v2382 = vpack.c.b16 %v2366, %v2366
        %v2383 = vpack.c.b16 %v2367, %v2367
        %v2384 = vpack.c.b16 %v2368, %v2368
        %v2385 = vpack.c.b16 %v2369, %v2369
        %v2386 = vpack.c.b16 %v2370, %v2370
        %v2387 = vpack.c.b16 %v2371, %v2371
        %v2388 = vpack.c.b16 %v2372, %v2372
        %v2389 = vpack.c.b16 %v2373, %v2373
        %v2390 = vpack.c.b16 %v2374, %v2374
        %v2391 = vpack.c.b16 %v2375, %v2375
        %v2392 = vpack.c.b16 %v2376, %v2376
        %v2393 = vpack.c.b16 %v2377, %v2377
        %v2394 = vpack.c.b16 %v2378, %v2378
        %s2411 = scalar_lea.vmem %s463, 128 [#allocation13]
        %2412 = vst [vmem:[%s2411] sm:$0xf] %v2379
        %2413 = vst [vmem:[%s2411 + $0x4] sm:$0xf] %v2380
        %2414 = vst [vmem:[%s2411 + $0x8] sm:$0xf] %v2381
        %2415 = vst [vmem:[%s2411 + $0xc] sm:$0xf] %v2382
        %2416 = vst [vmem:[%s2411 + $0x10] sm:$0xf] %v2383
        %2417 = vst [vmem:[%s2411 + $0x14] sm:$0xf] %v2384
        %2418 = vst [vmem:[%s2411 + $0x18] sm:$0xf] %v2385
        %2419 = vst [vmem:[%s2411 + $0x1c] sm:$0xf] %v2386
        %2420 = vst [vmem:[%s2411 + $0x20] sm:$0xf] %v2387
        %2421 = vst [vmem:[%s2411 + $0x24] sm:$0xf] %v2388
        %2422 = vst [vmem:[%s2411 + $0x28] sm:$0xf] %v2389
        %2423 = vst [vmem:[%s2411 + $0x2c] sm:$0xf] %v2390
        %2424 = vst [vmem:[%s2411 + $0x30] sm:$0xf] %v2391
        %2425 = vst [vmem:[%s2411 + $0x34] sm:$0xf] %v2392
        %2426 = vst [vmem:[%s2411 + $0x38] sm:$0xf] %v2393
        %2427 = vst [vmem:[%s2411 + $0x3c] sm:$0xf] %v2394
        %v2428 = vld [vmem:[#allocation2 + $0x18] sm:$0xff]
        %v2429 = vld [vmem:[#allocation2 + $0x58] sm:$0xff]
        %v2430 = vld [vmem:[#allocation2 + $0x98] sm:$0xff]
        %v2431 = vld [vmem:[#allocation2 + $0xd8] sm:$0xff]
        %v2432 = vld [vmem:[#allocation2 + $0x118] sm:$0xff]
        %v2433 = vld [vmem:[#allocation2 + $0x158] sm:$0xff]
        %v2434 = vld [vmem:[#allocation2 + $0x198] sm:$0xff]
        %v2435 = vld [vmem:[#allocation2 + $0x1d8] sm:$0xff]
        %v2436 = vld [vmem:[#allocation2 + $0x218] sm:$0xff]
        %v2437 = vld [vmem:[#allocation2 + $0x258] sm:$0xff]
        %v2438 = vld [vmem:[#allocation2 + $0x298] sm:$0xff]
        %v2439 = vld [vmem:[#allocation2 + $0x2d8] sm:$0xff]
        %v2440 = vld [vmem:[#allocation2 + $0x318] sm:$0xff]
        %v2441 = vld [vmem:[#allocation2 + $0x358] sm:$0xff]
        %v2442 = vld [vmem:[#allocation2 + $0x398] sm:$0xff]
        %v2443 = vld [vmem:[#allocation2 + $0x3d8] sm:$0xff]
        %v2444 = vmul.f32 %v2428, %v2428
        %v2445 = vmul.f32 %v2429, %v2429
        %v2446 = vmul.f32 %v2430, %v2430
        %v2447 = vmul.f32 %v2431, %v2431
        %v2448 = vmul.f32 %v2432, %v2432
        %v2449 = vmul.f32 %v2433, %v2433
        %v2450 = vmul.f32 %v2434, %v2434
        %v2451 = vmul.f32 %v2435, %v2435
        %v2452 = vmul.f32 %v2436, %v2436
        %v2453 = vmul.f32 %v2437, %v2437
        %v2454 = vmul.f32 %v2438, %v2438
        %v2455 = vmul.f32 %v2439, %v2439
        %v2456 = vmul.f32 %v2440, %v2440
        %v2457 = vmul.f32 %v2441, %v2441
        %v2458 = vmul.f32 %v2442, %v2442
        %v2459 = vmul.f32 %v2443, %v2443
        %2460 = vadd.xlane.f32.xlu0 %v2444
        %v2461 = vpop.xlane.xlu0 %2460
        %2462 = vadd.xlane.f32.xlu0 %v2445
        %v2463 = vpop.xlane.xlu0 %2462
        %2464 = vadd.xlane.f32.xlu0 %v2446
        %v2465 = vpop.xlane.xlu0 %2464
        %2466 = vadd.xlane.f32.xlu0 %v2447
        %v2467 = vpop.xlane.xlu0 %2466
        %2468 = vadd.xlane.f32.xlu0 %v2448
        %v2469 = vpop.xlane.xlu0 %2468
        %2470 = vadd.xlane.f32.xlu0 %v2449
        %v2471 = vpop.xlane.xlu0 %2470
        %2472 = vadd.xlane.f32.xlu0 %v2450
        %v2473 = vpop.xlane.xlu0 %2472
        %2474 = vadd.xlane.f32.xlu0 %v2451
        %v2475 = vpop.xlane.xlu0 %2474
        %2476 = vadd.xlane.f32.xlu0 %v2452
        %v2477 = vpop.xlane.xlu0 %2476
        %2478 = vadd.xlane.f32.xlu0 %v2453
        %v2479 = vpop.xlane.xlu0 %2478
        %2480 = vadd.xlane.f32.xlu0 %v2454
        %v2481 = vpop.xlane.xlu0 %2480
        %2482 = vadd.xlane.f32.xlu0 %v2455
        %v2483 = vpop.xlane.xlu0 %2482
        %2484 = vadd.xlane.f32.xlu0 %v2456
        %v2485 = vpop.xlane.xlu0 %2484
        %2486 = vadd.xlane.f32.xlu0 %v2457
        %v2487 = vpop.xlane.xlu0 %2486
        %2488 = vadd.xlane.f32.xlu0 %v2458
        %v2489 = vpop.xlane.xlu0 %2488
        %2490 = vadd.xlane.f32.xlu0 %v2459
        %v2491 = vpop.xlane.xlu0 %2490
        %v2492 = vmul.f32 %v2461, %v1571
        %v2493 = vmul.f32 %v2463, %v1571
        %v2494 = vmul.f32 %v2465, %v1571
        %v2495 = vmul.f32 %v2467, %v1571
        %v2496 = vmul.f32 %v2469, %v1571
        %v2497 = vmul.f32 %v2471, %v1571
        %v2498 = vmul.f32 %v2473, %v1571
        %v2499 = vmul.f32 %v2475, %v1571
        %v2500 = vmul.f32 %v2477, %v1571
        %v2501 = vmul.f32 %v2479, %v1571
        %v2502 = vmul.f32 %v2481, %v1571
        %v2503 = vmul.f32 %v2483, %v1571
        %v2504 = vmul.f32 %v2485, %v1571
        %v2505 = vmul.f32 %v2487, %v1571
        %v2506 = vmul.f32 %v2489, %v1571
        %v2507 = vmul.f32 %v2491, %v1571
        %v2508 = vadd.f32 %v2492, 1e-06
        %v2509 = vadd.f32 %v2493, 1e-06
        %v2510 = vadd.f32 %v2494, 1e-06
        %v2511 = vadd.f32 %v2495, 1e-06
        %v2512 = vadd.f32 %v2496, 1e-06
        %v2513 = vadd.f32 %v2497, 1e-06
        %v2514 = vadd.f32 %v2498, 1e-06
        %v2515 = vadd.f32 %v2499, 1e-06
        %v2516 = vadd.f32 %v2500, 1e-06
        %v2517 = vadd.f32 %v2501, 1e-06
        %v2518 = vadd.f32 %v2502, 1e-06
        %v2519 = vadd.f32 %v2503, 1e-06
        %v2520 = vadd.f32 %v2504, 1e-06
        %v2521 = vadd.f32 %v2505, 1e-06
        %v2522 = vadd.f32 %v2506, 1e-06
        %v2523 = vadd.f32 %v2507, 1e-06
        %v2524 = vrsqrt.pop %v2508
        %v2525 = vrsqrt.pop %v2509
        %v2526 = vrsqrt.pop %v2510
        %v2527 = vrsqrt.pop %v2511
        %v2528 = vrsqrt.pop %v2512
        %v2529 = vrsqrt.pop %v2513
        %v2530 = vrsqrt.pop %v2514
        %v2531 = vrsqrt.pop %v2515
        %v2532 = vrsqrt.pop %v2516
        %v2533 = vrsqrt.pop %v2517
        %v2534 = vrsqrt.pop %v2518
        %v2535 = vrsqrt.pop %v2519
        %v2536 = vrsqrt.pop %v2520
        %v2537 = vrsqrt.pop %v2521
        %v2538 = vrsqrt.pop %v2522
        %v2539 = vrsqrt.pop %v2523
        %v2540 = vmul.f32 %v2428, %v2524
        %v2541 = vmul.f32 %v2429, %v2525
        %v2542 = vmul.f32 %v2430, %v2526
        %v2543 = vmul.f32 %v2431, %v2527
        %v2544 = vmul.f32 %v2432, %v2528
        %v2545 = vmul.f32 %v2433, %v2529
        %v2546 = vmul.f32 %v2434, %v2530
        %v2547 = vmul.f32 %v2435, %v2531
        %v2548 = vmul.f32 %v2436, %v2532
        %v2549 = vmul.f32 %v2437, %v2533
        %v2550 = vmul.f32 %v2438, %v2534
        %v2551 = vmul.f32 %v2439, %v2535
        %v2552 = vmul.f32 %v2440, %v2536
        %v2553 = vmul.f32 %v2441, %v2537
        %v2554 = vmul.f32 %v2442, %v2538
        %v2555 = vmul.f32 %v2443, %v2539
        %v2556 = vmul.f32 %v2540, %v1640
        %v2557 = vmul.f32 %v2541, %v1640
        %v2558 = vmul.f32 %v2542, %v1640
        %v2559 = vmul.f32 %v2543, %v1640
        %v2560 = vmul.f32 %v2544, %v1640
        %v2561 = vmul.f32 %v2545, %v1640
        %v2562 = vmul.f32 %v2546, %v1640
        %v2563 = vmul.f32 %v2547, %v1640
        %v2564 = vmul.f32 %v2548, %v1640
        %v2565 = vmul.f32 %v2549, %v1640
        %v2566 = vmul.f32 %v2550, %v1640
        %v2567 = vmul.f32 %v2551, %v1640
        %v2568 = vmul.f32 %v2552, %v1640
        %v2569 = vmul.f32 %v2553, %v1640
        %v2570 = vmul.f32 %v2554, %v1640
        %v2571 = vmul.f32 %v2555, %v1640
        %v2572 = vmul.f32 %v2556, %v509
        %v2573 = vmul.f32 %v2557, %v510
        %v2574 = vmul.f32 %v2558, %v511
        %v2575 = vmul.f32 %v2559, %v512
        %v2576 = vmul.f32 %v2560, %v513
        %v2577 = vmul.f32 %v2561, %v514
        %v2578 = vmul.f32 %v2562, %v515
        %v2579 = vmul.f32 %v2563, %v516
        %v2580 = vmul.f32 %v2564, %v517
        %v2581 = vmul.f32 %v2565, %v518
        %v2582 = vmul.f32 %v2566, %v519
        %v2583 = vmul.f32 %v2567, %v520
        %v2584 = vmul.f32 %v2568, %v521
        %v2585 = vmul.f32 %v2569, %v522
        %v2586 = vmul.f32 %v2570, %v523
        %v2587 = vmul.f32 %v2571, %v524
        %2588 = vrot.lane.b32.xlu0 %v2556, 64
        %v2589 = vpop.permute.xlu0 %2588
        %2590 = vrot.lane.b32.xlu0 %v2557, 64
        %v2591 = vpop.permute.xlu0 %2590
        %2592 = vrot.lane.b32.xlu0 %v2558, 64
        %v2593 = vpop.permute.xlu0 %2592
        %2594 = vrot.lane.b32.xlu0 %v2559, 64
        %v2595 = vpop.permute.xlu0 %2594
        %2596 = vrot.lane.b32.xlu0 %v2560, 64
        %v2597 = vpop.permute.xlu0 %2596
        %2598 = vrot.lane.b32.xlu0 %v2561, 64
        %v2599 = vpop.permute.xlu0 %2598
        %2600 = vrot.lane.b32.xlu0 %v2562, 64
        %v2601 = vpop.permute.xlu0 %2600
        %2602 = vrot.lane.b32.xlu0 %v2563, 64
        %v2603 = vpop.permute.xlu0 %2602
        %2604 = vrot.lane.b32.xlu0 %v2564, 64
        %v2605 = vpop.permute.xlu0 %2604
        %2606 = vrot.lane.b32.xlu0 %v2565, 64
        %v2607 = vpop.permute.xlu0 %2606
        %2608 = vrot.lane.b32.xlu0 %v2566, 64
        %v2609 = vpop.permute.xlu0 %2608
        %2610 = vrot.lane.b32.xlu0 %v2567, 64
        %v2611 = vpop.permute.xlu0 %2610
        %2612 = vrot.lane.b32.xlu0 %v2568, 64
        %v2613 = vpop.permute.xlu0 %2612
        %2614 = vrot.lane.b32.xlu0 %v2569, 64
        %v2615 = vpop.permute.xlu0 %2614
        %2616 = vrot.lane.b32.xlu0 %v2570, 64
        %v2617 = vpop.permute.xlu0 %2616
        %2618 = vrot.lane.b32.xlu0 %v2571, 64
        %v2619 = vpop.permute.xlu0 %2618
        %v2620 = vmul.f32 %v2589, %v525
        %v2621 = vmul.f32 %v2591, %v526
        %v2622 = vmul.f32 %v2593, %v527
        %v2623 = vmul.f32 %v2595, %v528
        %v2624 = vmul.f32 %v2597, %v529
        %v2625 = vmul.f32 %v2599, %v530
        %v2626 = vmul.f32 %v2601, %v531
        %v2627 = vmul.f32 %v2603, %v532
        %v2628 = vmul.f32 %v2605, %v533
        %v2629 = vmul.f32 %v2607, %v534
        %v2630 = vmul.f32 %v2609, %v535
        %v2631 = vmul.f32 %v2611, %v536
        %v2632 = vmul.f32 %v2613, %v537
        %v2633 = vmul.f32 %v2615, %v538
        %v2634 = vmul.f32 %v2617, %v539
        %v2635 = vmul.f32 %v2619, %v540
        %v2636 = vadd.f32 %v2572, %v2620
        %v2637 = vadd.f32 %v2573, %v2621
        %v2638 = vadd.f32 %v2574, %v2622
        %v2639 = vadd.f32 %v2575, %v2623
        %v2640 = vadd.f32 %v2576, %v2624
        %v2641 = vadd.f32 %v2577, %v2625
        %v2642 = vadd.f32 %v2578, %v2626
        %v2643 = vadd.f32 %v2579, %v2627
        %v2644 = vadd.f32 %v2580, %v2628
        %v2645 = vadd.f32 %v2581, %v2629
        %v2646 = vadd.f32 %v2582, %v2630
        %v2647 = vadd.f32 %v2583, %v2631
        %v2648 = vadd.f32 %v2584, %v2632
        %v2649 = vadd.f32 %v2585, %v2633
        %v2650 = vadd.f32 %v2586, %v2634
        %v2651 = vadd.f32 %v2587, %v2635
        %v2652 = vpack.c.bf16 %v2637, %v2636
        %v2653 = vpack.c.bf16 %v2639, %v2638
        %v2654 = vpack.c.bf16 %v2641, %v2640
        %v2655 = vpack.c.bf16 %v2643, %v2642
        %v2656 = vpack.c.bf16 %v2645, %v2644
        %v2657 = vpack.c.bf16 %v2647, %v2646
        %v2658 = vpack.c.bf16 %v2649, %v2648
        %v2659 = vpack.c.bf16 %v2651, %v2650
        %v2668 = vunpack.c.l.b16 %v2652
        %v2669 = vunpack.c.h.b16 %v2652
        %v2670 = vunpack.c.l.b16 %v2653
        %v2671 = vunpack.c.h.b16 %v2653
        %v2672 = vunpack.c.l.b16 %v2654
        %v2673 = vunpack.c.h.b16 %v2654
        %v2674 = vunpack.c.l.b16 %v2655
        %v2675 = vunpack.c.h.b16 %v2655
        %v2676 = vunpack.c.l.b16 %v2656
        %v2677 = vunpack.c.h.b16 %v2656
        %v2678 = vunpack.c.l.b16 %v2657
        %v2679 = vunpack.c.h.b16 %v2657
        %v2680 = vunpack.c.l.b16 %v2658
        %v2681 = vunpack.c.h.b16 %v2658
        %v2682 = vunpack.c.l.b16 %v2659
        %v2683 = vunpack.c.h.b16 %v2659
        %v2684 = vpack.c.b16 %v2668, %v2668
        %v2685 = vpack.c.b16 %v2669, %v2669
        %v2686 = vpack.c.b16 %v2670, %v2670
        %v2687 = vpack.c.b16 %v2671, %v2671
        %v2688 = vpack.c.b16 %v2672, %v2672
        %v2689 = vpack.c.b16 %v2673, %v2673
        %v2690 = vpack.c.b16 %v2674, %v2674
        %v2691 = vpack.c.b16 %v2675, %v2675
        %v2692 = vpack.c.b16 %v2676, %v2676
        %v2693 = vpack.c.b16 %v2677, %v2677
        %v2694 = vpack.c.b16 %v2678, %v2678
        %v2695 = vpack.c.b16 %v2679, %v2679
        %v2696 = vpack.c.b16 %v2680, %v2680
        %v2697 = vpack.c.b16 %v2681, %v2681
        %v2698 = vpack.c.b16 %v2682, %v2682
        %v2699 = vpack.c.b16 %v2683, %v2683
        %s2716 = scalar_lea.vmem %s463, 192 [#allocation13]
        %2717 = vst [vmem:[%s2716] sm:$0xf] %v2684
        %2718 = vst [vmem:[%s2716 + $0x4] sm:$0xf] %v2685
        %2719 = vst [vmem:[%s2716 + $0x8] sm:$0xf] %v2686
        %2720 = vst [vmem:[%s2716 + $0xc] sm:$0xf] %v2687
        %2721 = vst [vmem:[%s2716 + $0x10] sm:$0xf] %v2688
        %2722 = vst [vmem:[%s2716 + $0x14] sm:$0xf] %v2689
        %2723 = vst [vmem:[%s2716 + $0x18] sm:$0xf] %v2690
        %2724 = vst [vmem:[%s2716 + $0x1c] sm:$0xf] %v2691
        %2725 = vst [vmem:[%s2716 + $0x20] sm:$0xf] %v2692
        %2726 = vst [vmem:[%s2716 + $0x24] sm:$0xf] %v2693
        %2727 = vst [vmem:[%s2716 + $0x28] sm:$0xf] %v2694
        %2728 = vst [vmem:[%s2716 + $0x2c] sm:$0xf] %v2695
        %2729 = vst [vmem:[%s2716 + $0x30] sm:$0xf] %v2696
        %2730 = vst [vmem:[%s2716 + $0x34] sm:$0xf] %v2697
        %2731 = vst [vmem:[%s2716 + $0x38] sm:$0xf] %v2698
        %2732 = vst [vmem:[%s2716 + $0x3c] sm:$0xf] %v2699
        %v2733 = vld [vmem:[#allocation2 + $0x20] sm:$0xff]
        %v2734 = vld [vmem:[#allocation2 + $0x60] sm:$0xff]
        %v2735 = vld [vmem:[#allocation2 + $0xa0] sm:$0xff]
        %v2736 = vld [vmem:[#allocation2 + $0xe0] sm:$0xff]
        %v2737 = vld [vmem:[#allocation2 + $0x120] sm:$0xff]
        %v2738 = vld [vmem:[#allocation2 + $0x160] sm:$0xff]
        %v2739 = vld [vmem:[#allocation2 + $0x1a0] sm:$0xff]
        %v2740 = vld [vmem:[#allocation2 + $0x1e0] sm:$0xff]
        %v2741 = vld [vmem:[#allocation2 + $0x220] sm:$0xff]
        %v2742 = vld [vmem:[#allocation2 + $0x260] sm:$0xff]
        %v2743 = vld [vmem:[#allocation2 + $0x2a0] sm:$0xff]
        %v2744 = vld [vmem:[#allocation2 + $0x2e0] sm:$0xff]
        %v2745 = vld [vmem:[#allocation2 + $0x320] sm:$0xff]
        %v2746 = vld [vmem:[#allocation2 + $0x360] sm:$0xff]
        %v2747 = vld [vmem:[#allocation2 + $0x3a0] sm:$0xff]
        %v2748 = vld [vmem:[#allocation2 + $0x3e0] sm:$0xff]
        %v2749 = vmul.f32 %v2733, %v2733
        %v2750 = vmul.f32 %v2734, %v2734
        %v2751 = vmul.f32 %v2735, %v2735
        %v2752 = vmul.f32 %v2736, %v2736
        %v2753 = vmul.f32 %v2737, %v2737
        %v2754 = vmul.f32 %v2738, %v2738
        %v2755 = vmul.f32 %v2739, %v2739
        %v2756 = vmul.f32 %v2740, %v2740
        %v2757 = vmul.f32 %v2741, %v2741
        %v2758 = vmul.f32 %v2742, %v2742
        %v2759 = vmul.f32 %v2743, %v2743
        %v2760 = vmul.f32 %v2744, %v2744
        %v2761 = vmul.f32 %v2745, %v2745
        %v2762 = vmul.f32 %v2746, %v2746
        %v2763 = vmul.f32 %v2747, %v2747
        %v2764 = vmul.f32 %v2748, %v2748
        %2765 = vadd.xlane.f32.xlu0 %v2749
        %v2766 = vpop.xlane.xlu0 %2765
        %2767 = vadd.xlane.f32.xlu0 %v2750
        %v2768 = vpop.xlane.xlu0 %2767
        %2769 = vadd.xlane.f32.xlu0 %v2751
        %v2770 = vpop.xlane.xlu0 %2769
        %2771 = vadd.xlane.f32.xlu0 %v2752
        %v2772 = vpop.xlane.xlu0 %2771
        %2773 = vadd.xlane.f32.xlu0 %v2753
        %v2774 = vpop.xlane.xlu0 %2773
        %2775 = vadd.xlane.f32.xlu0 %v2754
        %v2776 = vpop.xlane.xlu0 %2775
        %2777 = vadd.xlane.f32.xlu0 %v2755
        %v2778 = vpop.xlane.xlu0 %2777
        %2779 = vadd.xlane.f32.xlu0 %v2756
        %v2780 = vpop.xlane.xlu0 %2779
        %2781 = vadd.xlane.f32.xlu0 %v2757
        %v2782 = vpop.xlane.xlu0 %2781
        %2783 = vadd.xlane.f32.xlu0 %v2758
        %v2784 = vpop.xlane.xlu0 %2783
        %2785 = vadd.xlane.f32.xlu0 %v2759
        %v2786 = vpop.xlane.xlu0 %2785
        %2787 = vadd.xlane.f32.xlu0 %v2760
        %v2788 = vpop.xlane.xlu0 %2787
        %2789 = vadd.xlane.f32.xlu0 %v2761
        %v2790 = vpop.xlane.xlu0 %2789
        %2791 = vadd.xlane.f32.xlu0 %v2762
        %v2792 = vpop.xlane.xlu0 %2791
        %2793 = vadd.xlane.f32.xlu0 %v2763
        %v2794 = vpop.xlane.xlu0 %2793
        %2795 = vadd.xlane.f32.xlu0 %v2764
        %v2796 = vpop.xlane.xlu0 %2795
        %v2797 = vmul.f32 %v2766, %v1571
        %v2798 = vmul.f32 %v2768, %v1571
        %v2799 = vmul.f32 %v2770, %v1571
        %v2800 = vmul.f32 %v2772, %v1571
        %v2801 = vmul.f32 %v2774, %v1571
        %v2802 = vmul.f32 %v2776, %v1571
        %v2803 = vmul.f32 %v2778, %v1571
        %v2804 = vmul.f32 %v2780, %v1571
        %v2805 = vmul.f32 %v2782, %v1571
        %v2806 = vmul.f32 %v2784, %v1571
        %v2807 = vmul.f32 %v2786, %v1571
        %v2808 = vmul.f32 %v2788, %v1571
        %v2809 = vmul.f32 %v2790, %v1571
        %v2810 = vmul.f32 %v2792, %v1571
        %v2811 = vmul.f32 %v2794, %v1571
        %v2812 = vmul.f32 %v2796, %v1571
        %v2813 = vadd.f32 %v2797, 1e-06
        %v2814 = vadd.f32 %v2798, 1e-06
        %v2815 = vadd.f32 %v2799, 1e-06
        %v2816 = vadd.f32 %v2800, 1e-06
        %v2817 = vadd.f32 %v2801, 1e-06
        %v2818 = vadd.f32 %v2802, 1e-06
        %v2819 = vadd.f32 %v2803, 1e-06
        %v2820 = vadd.f32 %v2804, 1e-06
        %v2821 = vadd.f32 %v2805, 1e-06
        %v2822 = vadd.f32 %v2806, 1e-06
        %v2823 = vadd.f32 %v2807, 1e-06
        %v2824 = vadd.f32 %v2808, 1e-06
        %v2825 = vadd.f32 %v2809, 1e-06
        %v2826 = vadd.f32 %v2810, 1e-06
        %v2827 = vadd.f32 %v2811, 1e-06
        %v2828 = vadd.f32 %v2812, 1e-06
        %v2829 = vrsqrt.pop %v2813
        %v2830 = vrsqrt.pop %v2814
        %v2831 = vrsqrt.pop %v2815
        %v2832 = vrsqrt.pop %v2816
        %v2833 = vrsqrt.pop %v2817
        %v2834 = vrsqrt.pop %v2818
        %v2835 = vrsqrt.pop %v2819
        %v2836 = vrsqrt.pop %v2820
        %v2837 = vrsqrt.pop %v2821
        %v2838 = vrsqrt.pop %v2822
        %v2839 = vrsqrt.pop %v2823
        %v2840 = vrsqrt.pop %v2824
        %v2841 = vrsqrt.pop %v2825
        %v2842 = vrsqrt.pop %v2826
        %v2843 = vrsqrt.pop %v2827
        %v2844 = vrsqrt.pop %v2828
        %v2845 = vmul.f32 %v2733, %v2829
        %v2846 = vmul.f32 %v2734, %v2830
        %v2847 = vmul.f32 %v2735, %v2831
        %v2848 = vmul.f32 %v2736, %v2832
        %v2849 = vmul.f32 %v2737, %v2833
        %v2850 = vmul.f32 %v2738, %v2834
        %v2851 = vmul.f32 %v2739, %v2835
        %v2852 = vmul.f32 %v2740, %v2836
        %v2853 = vmul.f32 %v2741, %v2837
        %v2854 = vmul.f32 %v2742, %v2838
        %v2855 = vmul.f32 %v2743, %v2839
        %v2856 = vmul.f32 %v2744, %v2840
        %v2857 = vmul.f32 %v2745, %v2841
        %v2858 = vmul.f32 %v2746, %v2842
        %v2859 = vmul.f32 %v2747, %v2843
        %v2860 = vmul.f32 %v2748, %v2844
        %v2862 = vlaneseq
        %v2863 = vshrl.u32 %v2862, 7
        %v2864 = vsub.s32 0, %v2863
        %v2865 = vrot.slane %v542, %v2864
        %v2867 = vmul.f32 %v2845, %v2865
        %v2868 = vmul.f32 %v2846, %v2865
        %v2869 = vmul.f32 %v2847, %v2865
        %v2870 = vmul.f32 %v2848, %v2865
        %v2871 = vmul.f32 %v2849, %v2865
        %v2872 = vmul.f32 %v2850, %v2865
        %v2873 = vmul.f32 %v2851, %v2865
        %v2874 = vmul.f32 %v2852, %v2865
        %v2875 = vmul.f32 %v2853, %v2865
        %v2876 = vmul.f32 %v2854, %v2865
        %v2877 = vmul.f32 %v2855, %v2865
        %v2878 = vmul.f32 %v2856, %v2865
        %v2879 = vmul.f32 %v2857, %v2865
        %v2880 = vmul.f32 %v2858, %v2865
        %v2881 = vmul.f32 %v2859, %v2865
        %v2882 = vmul.f32 %v2860, %v2865
        %v2883 = vmul.f32 %v2867, %v509
        %v2884 = vmul.f32 %v2868, %v510
        %v2885 = vmul.f32 %v2869, %v511
        %v2886 = vmul.f32 %v2870, %v512
        %v2887 = vmul.f32 %v2871, %v513
        %v2888 = vmul.f32 %v2872, %v514
        %v2889 = vmul.f32 %v2873, %v515
        %v2890 = vmul.f32 %v2874, %v516
        %v2891 = vmul.f32 %v2875, %v517
        %v2892 = vmul.f32 %v2876, %v518
        %v2893 = vmul.f32 %v2877, %v519
        %v2894 = vmul.f32 %v2878, %v520
        %v2895 = vmul.f32 %v2879, %v521
        %v2896 = vmul.f32 %v2880, %v522
        %v2897 = vmul.f32 %v2881, %v523
        %v2898 = vmul.f32 %v2882, %v524
        %2899 = vrot.lane.b32.xlu0 %v2867, 64
        %v2900 = vpop.permute.xlu0 %2899
        %2901 = vrot.lane.b32.xlu0 %v2868, 64
        %v2902 = vpop.permute.xlu0 %2901
        %2903 = vrot.lane.b32.xlu0 %v2869, 64
        %v2904 = vpop.permute.xlu0 %2903
        %2905 = vrot.lane.b32.xlu0 %v2870, 64
        %v2906 = vpop.permute.xlu0 %2905
        %2907 = vrot.lane.b32.xlu0 %v2871, 64
        %v2908 = vpop.permute.xlu0 %2907
        %2909 = vrot.lane.b32.xlu0 %v2872, 64
        %v2910 = vpop.permute.xlu0 %2909
        %2911 = vrot.lane.b32.xlu0 %v2873, 64
        %v2912 = vpop.permute.xlu0 %2911
        %2913 = vrot.lane.b32.xlu0 %v2874, 64
        %v2914 = vpop.permute.xlu0 %2913
        %2915 = vrot.lane.b32.xlu0 %v2875, 64
        %v2916 = vpop.permute.xlu0 %2915
        %2917 = vrot.lane.b32.xlu0 %v2876, 64
        %v2918 = vpop.permute.xlu0 %2917
        %2919 = vrot.lane.b32.xlu0 %v2877, 64
        %v2920 = vpop.permute.xlu0 %2919
        %2921 = vrot.lane.b32.xlu0 %v2878, 64
        %v2922 = vpop.permute.xlu0 %2921
        %2923 = vrot.lane.b32.xlu0 %v2879, 64
        %v2924 = vpop.permute.xlu0 %2923
        %2925 = vrot.lane.b32.xlu0 %v2880, 64
        %v2926 = vpop.permute.xlu0 %2925
        %2927 = vrot.lane.b32.xlu0 %v2881, 64
        %v2928 = vpop.permute.xlu0 %2927
        %2929 = vrot.lane.b32.xlu0 %v2882, 64
        %v2930 = vpop.permute.xlu0 %2929
        %v2931 = vmul.f32 %v2900, %v525
        %v2932 = vmul.f32 %v2902, %v526
        %v2933 = vmul.f32 %v2904, %v527
        %v2934 = vmul.f32 %v2906, %v528
        %v2935 = vmul.f32 %v2908, %v529
        %v2936 = vmul.f32 %v2910, %v530
        %v2937 = vmul.f32 %v2912, %v531
        %v2938 = vmul.f32 %v2914, %v532
        %v2939 = vmul.f32 %v2916, %v533
        %v2940 = vmul.f32 %v2918, %v534
        %v2941 = vmul.f32 %v2920, %v535
        %v2942 = vmul.f32 %v2922, %v536
        %v2943 = vmul.f32 %v2924, %v537
        %v2944 = vmul.f32 %v2926, %v538
        %v2945 = vmul.f32 %v2928, %v539
        %v2946 = vmul.f32 %v2930, %v540
        %v2947 = vadd.f32 %v2883, %v2931
        %v2948 = vadd.f32 %v2884, %v2932
        %v2949 = vadd.f32 %v2885, %v2933
        %v2950 = vadd.f32 %v2886, %v2934
        %v2951 = vadd.f32 %v2887, %v2935
        %v2952 = vadd.f32 %v2888, %v2936
        %v2953 = vadd.f32 %v2889, %v2937
        %v2954 = vadd.f32 %v2890, %v2938
        %v2955 = vadd.f32 %v2891, %v2939
        %v2956 = vadd.f32 %v2892, %v2940
        %v2957 = vadd.f32 %v2893, %v2941
        %v2958 = vadd.f32 %v2894, %v2942
        %v2959 = vadd.f32 %v2895, %v2943
        %v2960 = vadd.f32 %v2896, %v2944
        %v2961 = vadd.f32 %v2897, %v2945
        %v2962 = vadd.f32 %v2898, %v2946
        %v2963 = vpack.c.bf16 %v2948, %v2947
        %v2964 = vpack.c.bf16 %v2950, %v2949
        %v2965 = vpack.c.bf16 %v2952, %v2951
        %v2966 = vpack.c.bf16 %v2954, %v2953
        %v2967 = vpack.c.bf16 %v2956, %v2955
        %v2968 = vpack.c.bf16 %v2958, %v2957
        %v2969 = vpack.c.bf16 %v2960, %v2959
        %v2970 = vpack.c.bf16 %v2962, %v2961
        %v2979 = vunpack.c.l.b16 %v2963
        %v2980 = vunpack.c.h.b16 %v2963
        %v2981 = vunpack.c.l.b16 %v2964
        %v2982 = vunpack.c.h.b16 %v2964
        %v2983 = vunpack.c.l.b16 %v2965
        %v2984 = vunpack.c.h.b16 %v2965
        %v2985 = vunpack.c.l.b16 %v2966
        %v2986 = vunpack.c.h.b16 %v2966
        %v2987 = vunpack.c.l.b16 %v2967
        %v2988 = vunpack.c.h.b16 %v2967
        %v2989 = vunpack.c.l.b16 %v2968
        %v2990 = vunpack.c.h.b16 %v2968
        %v2991 = vunpack.c.l.b16 %v2969
        %v2992 = vunpack.c.h.b16 %v2969
        %v2993 = vunpack.c.l.b16 %v2970
        %v2994 = vunpack.c.h.b16 %v2970
        %v2995 = vpack.c.b16 %v2979, %v2979
        %v2996 = vpack.c.b16 %v2980, %v2980
        %v2997 = vpack.c.b16 %v2981, %v2981
        %v2998 = vpack.c.b16 %v2982, %v2982
        %v2999 = vpack.c.b16 %v2983, %v2983
        %v3000 = vpack.c.b16 %v2984, %v2984
        %v3001 = vpack.c.b16 %v2985, %v2985
        %v3002 = vpack.c.b16 %v2986, %v2986
        %v3003 = vpack.c.b16 %v2987, %v2987
        %v3004 = vpack.c.b16 %v2988, %v2988
        %v3005 = vpack.c.b16 %v2989, %v2989
        %v3006 = vpack.c.b16 %v2990, %v2990
        %v3007 = vpack.c.b16 %v2991, %v2991
        %v3008 = vpack.c.b16 %v2992, %v2992
        %v3009 = vpack.c.b16 %v2993, %v2993
        %v3010 = vpack.c.b16 %v2994, %v2994
        %3027 = vst [vmem:[%s470] sm:$0xf] %v2995
        %3028 = vst [vmem:[%s470 + $0x4] sm:$0xf] %v2996
        %3029 = vst [vmem:[%s470 + $0x8] sm:$0xf] %v2997
        %3030 = vst [vmem:[%s470 + $0xc] sm:$0xf] %v2998
        %3031 = vst [vmem:[%s470 + $0x10] sm:$0xf] %v2999
        %3032 = vst [vmem:[%s470 + $0x14] sm:$0xf] %v3000
        %3033 = vst [vmem:[%s470 + $0x18] sm:$0xf] %v3001
        %3034 = vst [vmem:[%s470 + $0x1c] sm:$0xf] %v3002
        %3035 = vst [vmem:[%s470 + $0x20] sm:$0xf] %v3003
        %3036 = vst [vmem:[%s470 + $0x24] sm:$0xf] %v3004
        %3037 = vst [vmem:[%s470 + $0x28] sm:$0xf] %v3005
        %3038 = vst [vmem:[%s470 + $0x2c] sm:$0xf] %v3006
        %3039 = vst [vmem:[%s470 + $0x30] sm:$0xf] %v3007
        %3040 = vst [vmem:[%s470 + $0x34] sm:$0xf] %v3008
        %3041 = vst [vmem:[%s470 + $0x38] sm:$0xf] %v3009
        %3042 = vst [vmem:[%s470 + $0x3c] sm:$0xf] %v3010
        %v3043 = vld [vmem:[#allocation2 + $0x30] sm:$0xff]
        %v3044 = vld [vmem:[#allocation2 + $0x70] sm:$0xff]
        %v3045 = vld [vmem:[#allocation2 + $0xb0] sm:$0xff]
        %v3046 = vld [vmem:[#allocation2 + $0xf0] sm:$0xff]
        %v3047 = vld [vmem:[#allocation2 + $0x130] sm:$0xff]
        %v3048 = vld [vmem:[#allocation2 + $0x170] sm:$0xff]
        %v3049 = vld [vmem:[#allocation2 + $0x1b0] sm:$0xff]
        %v3050 = vld [vmem:[#allocation2 + $0x1f0] sm:$0xff]
        %v3051 = vld [vmem:[#allocation2 + $0x230] sm:$0xff]
        %v3052 = vld [vmem:[#allocation2 + $0x270] sm:$0xff]
        %v3053 = vld [vmem:[#allocation2 + $0x2b0] sm:$0xff]
        %v3054 = vld [vmem:[#allocation2 + $0x2f0] sm:$0xff]
        %v3055 = vld [vmem:[#allocation2 + $0x330] sm:$0xff]
        %v3056 = vld [vmem:[#allocation2 + $0x370] sm:$0xff]
        %v3057 = vld [vmem:[#allocation2 + $0x3b0] sm:$0xff]
        %v3058 = vld [vmem:[#allocation2 + $0x3f0] sm:$0xff]
        %v3059 = vpack.c.bf16 %v3044, %v3043
        %v3060 = vpack.c.bf16 %v3046, %v3045
        %v3061 = vpack.c.bf16 %v3048, %v3047
        %v3062 = vpack.c.bf16 %v3050, %v3049
        %v3063 = vpack.c.bf16 %v3052, %v3051
        %v3064 = vpack.c.bf16 %v3054, %v3053
        %v3065 = vpack.c.bf16 %v3056, %v3055
        %v3066 = vpack.c.bf16 %v3058, %v3057
        %v3075 = vunpack.c.l.b16 %v3059
        %v3076 = vunpack.c.h.b16 %v3059
        %v3077 = vunpack.c.l.b16 %v3060
        %v3078 = vunpack.c.h.b16 %v3060
        %v3079 = vunpack.c.l.b16 %v3061
        %v3080 = vunpack.c.h.b16 %v3061
        %v3081 = vunpack.c.l.b16 %v3062
        %v3082 = vunpack.c.h.b16 %v3062
        %v3083 = vunpack.c.l.b16 %v3063
        %v3084 = vunpack.c.h.b16 %v3063
        %v3085 = vunpack.c.l.b16 %v3064
        %v3086 = vunpack.c.h.b16 %v3064
        %v3087 = vunpack.c.l.b16 %v3065
        %v3088 = vunpack.c.h.b16 %v3065
        %v3089 = vunpack.c.l.b16 %v3066
        %v3090 = vunpack.c.h.b16 %v3066
        %v3091 = vpack.c.b16 %v3075, %v3075
        %v3092 = vpack.c.b16 %v3076, %v3076
        %v3093 = vpack.c.b16 %v3077, %v3077
        %v3094 = vpack.c.b16 %v3078, %v3078
        %v3095 = vpack.c.b16 %v3079, %v3079
        %v3096 = vpack.c.b16 %v3080, %v3080
        %v3097 = vpack.c.b16 %v3081, %v3081
        %v3098 = vpack.c.b16 %v3082, %v3082
        %v3099 = vpack.c.b16 %v3083, %v3083
        %v3100 = vpack.c.b16 %v3084, %v3084
        %v3101 = vpack.c.b16 %v3085, %v3085
        %v3102 = vpack.c.b16 %v3086, %v3086
        %v3103 = vpack.c.b16 %v3087, %v3087
        %v3104 = vpack.c.b16 %v3088, %v3088
        %v3105 = vpack.c.b16 %v3089, %v3089
        %v3106 = vpack.c.b16 %v3090, %v3090
        %3123 = vst [vmem:[%s477] sm:$0xf] %v3091
        %3124 = vst [vmem:[%s477 + $0x4] sm:$0xf] %v3092
        %3125 = vst [vmem:[%s477 + $0x8] sm:$0xf] %v3093
        %3126 = vst [vmem:[%s477 + $0xc] sm:$0xf] %v3094
        %3127 = vst [vmem:[%s477 + $0x10] sm:$0xf] %v3095
        %3128 = vst [vmem:[%s477 + $0x14] sm:$0xf] %v3096
        %3129 = vst [vmem:[%s477 + $0x18] sm:$0xf] %v3097
        %3130 = vst [vmem:[%s477 + $0x1c] sm:$0xf] %v3098
        %3131 = vst [vmem:[%s477 + $0x20] sm:$0xf] %v3099
        %3132 = vst [vmem:[%s477 + $0x24] sm:$0xf] %v3100
        %3133 = vst [vmem:[%s477 + $0x28] sm:$0xf] %v3101
        %3134 = vst [vmem:[%s477 + $0x2c] sm:$0xf] %v3102
        %3135 = vst [vmem:[%s477 + $0x30] sm:$0xf] %v3103
        %3136 = vst [vmem:[%s477 + $0x34] sm:$0xf] %v3104
        %3137 = vst [vmem:[%s477 + $0x38] sm:$0xf] %v3105
        %3138 = vst [vmem:[%s477 + $0x3c] sm:$0xf] %v3106
        %v3139 = vld [vmem:[#allocation2 + $0x28] sm:$0xff]
        %v3140 = vld [vmem:[#allocation2 + $0x68] sm:$0xff]
        %v3141 = vld [vmem:[#allocation2 + $0xa8] sm:$0xff]
        %v3142 = vld [vmem:[#allocation2 + $0xe8] sm:$0xff]
        %v3143 = vld [vmem:[#allocation2 + $0x128] sm:$0xff]
        %v3144 = vld [vmem:[#allocation2 + $0x168] sm:$0xff]
        %v3145 = vld [vmem:[#allocation2 + $0x1a8] sm:$0xff]
        %v3146 = vld [vmem:[#allocation2 + $0x1e8] sm:$0xff]
        %v3147 = vld [vmem:[#allocation2 + $0x228] sm:$0xff]
        %v3148 = vld [vmem:[#allocation2 + $0x268] sm:$0xff]
        %v3149 = vld [vmem:[#allocation2 + $0x2a8] sm:$0xff]
        %v3150 = vld [vmem:[#allocation2 + $0x2e8] sm:$0xff]
        %v3151 = vld [vmem:[#allocation2 + $0x328] sm:$0xff]
        %v3152 = vld [vmem:[#allocation2 + $0x368] sm:$0xff]
        %v3153 = vld [vmem:[#allocation2 + $0x3a8] sm:$0xff]
        %v3154 = vld [vmem:[#allocation2 + $0x3e8] sm:$0xff]
        %v3155 = vmul.f32 %v3139, %v3139
        %v3156 = vmul.f32 %v3140, %v3140
        %v3157 = vmul.f32 %v3141, %v3141
        %v3158 = vmul.f32 %v3142, %v3142
        %v3159 = vmul.f32 %v3143, %v3143
        %v3160 = vmul.f32 %v3144, %v3144
        %v3161 = vmul.f32 %v3145, %v3145
        %v3162 = vmul.f32 %v3146, %v3146
        %v3163 = vmul.f32 %v3147, %v3147
        %v3164 = vmul.f32 %v3148, %v3148
        %v3165 = vmul.f32 %v3149, %v3149
        %v3166 = vmul.f32 %v3150, %v3150
        %v3167 = vmul.f32 %v3151, %v3151
        %v3168 = vmul.f32 %v3152, %v3152
        %v3169 = vmul.f32 %v3153, %v3153
        %v3170 = vmul.f32 %v3154, %v3154
        %3171 = vadd.xlane.f32.xlu0 %v3155
        %v3172 = vpop.xlane.xlu0 %3171
        %3173 = vadd.xlane.f32.xlu0 %v3156
        %v3174 = vpop.xlane.xlu0 %3173
        %3175 = vadd.xlane.f32.xlu0 %v3157
        %v3176 = vpop.xlane.xlu0 %3175
        %3177 = vadd.xlane.f32.xlu0 %v3158
        %v3178 = vpop.xlane.xlu0 %3177
        %3179 = vadd.xlane.f32.xlu0 %v3159
        %v3180 = vpop.xlane.xlu0 %3179
        %3181 = vadd.xlane.f32.xlu0 %v3160
        %v3182 = vpop.xlane.xlu0 %3181
        %3183 = vadd.xlane.f32.xlu0 %v3161
        %v3184 = vpop.xlane.xlu0 %3183
        %3185 = vadd.xlane.f32.xlu0 %v3162
        %v3186 = vpop.xlane.xlu0 %3185
        %3187 = vadd.xlane.f32.xlu0 %v3163
        %v3188 = vpop.xlane.xlu0 %3187
        %3189 = vadd.xlane.f32.xlu0 %v3164
        %v3190 = vpop.xlane.xlu0 %3189
        %3191 = vadd.xlane.f32.xlu0 %v3165
        %v3192 = vpop.xlane.xlu0 %3191
        %3193 = vadd.xlane.f32.xlu0 %v3166
        %v3194 = vpop.xlane.xlu0 %3193
        %3195 = vadd.xlane.f32.xlu0 %v3167
        %v3196 = vpop.xlane.xlu0 %3195
        %3197 = vadd.xlane.f32.xlu0 %v3168
        %v3198 = vpop.xlane.xlu0 %3197
        %3199 = vadd.xlane.f32.xlu0 %v3169
        %v3200 = vpop.xlane.xlu0 %3199
        %3201 = vadd.xlane.f32.xlu0 %v3170
        %v3202 = vpop.xlane.xlu0 %3201
        %v3203 = vmul.f32 %v3172, %v1571
        %v3204 = vmul.f32 %v3174, %v1571
        %v3205 = vmul.f32 %v3176, %v1571
        %v3206 = vmul.f32 %v3178, %v1571
        %v3207 = vmul.f32 %v3180, %v1571
        %v3208 = vmul.f32 %v3182, %v1571
        %v3209 = vmul.f32 %v3184, %v1571
        %v3210 = vmul.f32 %v3186, %v1571
        %v3211 = vmul.f32 %v3188, %v1571
        %v3212 = vmul.f32 %v3190, %v1571
        %v3213 = vmul.f32 %v3192, %v1571
        %v3214 = vmul.f32 %v3194, %v1571
        %v3215 = vmul.f32 %v3196, %v1571
        %v3216 = vmul.f32 %v3198, %v1571
        %v3217 = vmul.f32 %v3200, %v1571
        %v3218 = vmul.f32 %v3202, %v1571
        %v3219 = vadd.f32 %v3203, 1e-06
        %v3220 = vadd.f32 %v3204, 1e-06
        %v3221 = vadd.f32 %v3205, 1e-06
        %v3222 = vadd.f32 %v3206, 1e-06
        %v3223 = vadd.f32 %v3207, 1e-06
        %v3224 = vadd.f32 %v3208, 1e-06
        %v3225 = vadd.f32 %v3209, 1e-06
        %v3226 = vadd.f32 %v3210, 1e-06
        %v3227 = vadd.f32 %v3211, 1e-06
        %v3228 = vadd.f32 %v3212, 1e-06
        %v3229 = vadd.f32 %v3213, 1e-06
        %v3230 = vadd.f32 %v3214, 1e-06
        %v3231 = vadd.f32 %v3215, 1e-06
        %v3232 = vadd.f32 %v3216, 1e-06
        %v3233 = vadd.f32 %v3217, 1e-06
        %v3234 = vadd.f32 %v3218, 1e-06
        %v3235 = vrsqrt.pop %v3219
        %v3236 = vrsqrt.pop %v3220
        %v3237 = vrsqrt.pop %v3221
        %v3238 = vrsqrt.pop %v3222
        %v3239 = vrsqrt.pop %v3223
        %v3240 = vrsqrt.pop %v3224
        %v3241 = vrsqrt.pop %v3225
        %v3242 = vrsqrt.pop %v3226
        %v3243 = vrsqrt.pop %v3227
        %v3244 = vrsqrt.pop %v3228
        %v3245 = vrsqrt.pop %v3229
        %v3246 = vrsqrt.pop %v3230
        %v3247 = vrsqrt.pop %v3231
        %v3248 = vrsqrt.pop %v3232
        %v3249 = vrsqrt.pop %v3233
        %v3250 = vrsqrt.pop %v3234
        %v3251 = vmul.f32 %v3139, %v3235
        %v3252 = vmul.f32 %v3140, %v3236
        %v3253 = vmul.f32 %v3141, %v3237
        %v3254 = vmul.f32 %v3142, %v3238
        %v3255 = vmul.f32 %v3143, %v3239
        %v3256 = vmul.f32 %v3144, %v3240
        %v3257 = vmul.f32 %v3145, %v3241
        %v3258 = vmul.f32 %v3146, %v3242
        %v3259 = vmul.f32 %v3147, %v3243
        %v3260 = vmul.f32 %v3148, %v3244
        %v3261 = vmul.f32 %v3149, %v3245
        %v3262 = vmul.f32 %v3150, %v3246
        %v3263 = vmul.f32 %v3151, %v3247
        %v3264 = vmul.f32 %v3152, %v3248
        %v3265 = vmul.f32 %v3153, %v3249
        %v3266 = vmul.f32 %v3154, %v3250
        %v3267 = vmul.f32 %v3251, %v2865
        %v3268 = vmul.f32 %v3252, %v2865
        %v3269 = vmul.f32 %v3253, %v2865
        %v3270 = vmul.f32 %v3254, %v2865
        %v3271 = vmul.f32 %v3255, %v2865
        %v3272 = vmul.f32 %v3256, %v2865
        %v3273 = vmul.f32 %v3257, %v2865
        %v3274 = vmul.f32 %v3258, %v2865
        %v3275 = vmul.f32 %v3259, %v2865
        %v3276 = vmul.f32 %v3260, %v2865
        %v3277 = vmul.f32 %v3261, %v2865
        %v3278 = vmul.f32 %v3262, %v2865
        %v3279 = vmul.f32 %v3263, %v2865
        %v3280 = vmul.f32 %v3264, %v2865
        %v3281 = vmul.f32 %v3265, %v2865
        %v3282 = vmul.f32 %v3266, %v2865
        %v3283 = vmul.f32 %v3267, %v509
        %v3284 = vmul.f32 %v3268, %v510
        %v3285 = vmul.f32 %v3269, %v511
        %v3286 = vmul.f32 %v3270, %v512
        %v3287 = vmul.f32 %v3271, %v513
        %v3288 = vmul.f32 %v3272, %v514
        %v3289 = vmul.f32 %v3273, %v515
        %v3290 = vmul.f32 %v3274, %v516
        %v3291 = vmul.f32 %v3275, %v517
        %v3292 = vmul.f32 %v3276, %v518
        %v3293 = vmul.f32 %v3277, %v519
        %v3294 = vmul.f32 %v3278, %v520
        %v3295 = vmul.f32 %v3279, %v521
        %v3296 = vmul.f32 %v3280, %v522
        %v3297 = vmul.f32 %v3281, %v523
        %v3298 = vmul.f32 %v3282, %v524
        %3299 = vrot.lane.b32.xlu0 %v3267, 64
        %v3300 = vpop.permute.xlu0 %3299
        %3301 = vrot.lane.b32.xlu0 %v3268, 64
        %v3302 = vpop.permute.xlu0 %3301
        %3303 = vrot.lane.b32.xlu0 %v3269, 64
        %v3304 = vpop.permute.xlu0 %3303
        %3305 = vrot.lane.b32.xlu0 %v3270, 64
        %v3306 = vpop.permute.xlu0 %3305
        %3307 = vrot.lane.b32.xlu0 %v3271, 64
        %v3308 = vpop.permute.xlu0 %3307
        %3309 = vrot.lane.b32.xlu0 %v3272, 64
        %v3310 = vpop.permute.xlu0 %3309
        %3311 = vrot.lane.b32.xlu0 %v3273, 64
        %v3312 = vpop.permute.xlu0 %3311
        %3313 = vrot.lane.b32.xlu0 %v3274, 64
        %v3314 = vpop.permute.xlu0 %3313
        %3315 = vrot.lane.b32.xlu0 %v3275, 64
        %v3316 = vpop.permute.xlu0 %3315
        %3317 = vrot.lane.b32.xlu0 %v3276, 64
        %v3318 = vpop.permute.xlu0 %3317
        %3319 = vrot.lane.b32.xlu0 %v3277, 64
        %v3320 = vpop.permute.xlu0 %3319
        %3321 = vrot.lane.b32.xlu0 %v3278, 64
        %v3322 = vpop.permute.xlu0 %3321
        %3323 = vrot.lane.b32.xlu0 %v3279, 64
        %v3324 = vpop.permute.xlu0 %3323
        %3325 = vrot.lane.b32.xlu0 %v3280, 64
        %v3326 = vpop.permute.xlu0 %3325
        %3327 = vrot.lane.b32.xlu0 %v3281, 64
        %v3328 = vpop.permute.xlu0 %3327
        %3329 = vrot.lane.b32.xlu0 %v3282, 64
        %v3330 = vpop.permute.xlu0 %3329
        %v3331 = vmul.f32 %v3300, %v525
        %v3332 = vmul.f32 %v3302, %v526
        %v3333 = vmul.f32 %v3304, %v527
        %v3334 = vmul.f32 %v3306, %v528
        %v3335 = vmul.f32 %v3308, %v529
        %v3336 = vmul.f32 %v3310, %v530
        %v3337 = vmul.f32 %v3312, %v531
        %v3338 = vmul.f32 %v3314, %v532
        %v3339 = vmul.f32 %v3316, %v533
        %v3340 = vmul.f32 %v3318, %v534
        %v3341 = vmul.f32 %v3320, %v535
        %v3342 = vmul.f32 %v3322, %v536
        %v3343 = vmul.f32 %v3324, %v537
        %v3344 = vmul.f32 %v3326, %v538
        %v3345 = vmul.f32 %v3328, %v539
        %v3346 = vmul.f32 %v3330, %v540
        %v3347 = vadd.f32 %v3283, %v3331
        %v3348 = vadd.f32 %v3284, %v3332
        %v3349 = vadd.f32 %v3285, %v3333
        %v3350 = vadd.f32 %v3286, %v3334
        %v3351 = vadd.f32 %v3287, %v3335
        %v3352 = vadd.f32 %v3288, %v3336
        %v3353 = vadd.f32 %v3289, %v3337
        %v3354 = vadd.f32 %v3290, %v3338
        %v3355 = vadd.f32 %v3291, %v3339
        %v3356 = vadd.f32 %v3292, %v3340
        %v3357 = vadd.f32 %v3293, %v3341
        %v3358 = vadd.f32 %v3294, %v3342
        %v3359 = vadd.f32 %v3295, %v3343
        %v3360 = vadd.f32 %v3296, %v3344
        %v3361 = vadd.f32 %v3297, %v3345
        %v3362 = vadd.f32 %v3298, %v3346
        %v3363 = vpack.c.bf16 %v3348, %v3347
        %v3364 = vpack.c.bf16 %v3350, %v3349
        %v3365 = vpack.c.bf16 %v3352, %v3351
        %v3366 = vpack.c.bf16 %v3354, %v3353
        %v3367 = vpack.c.bf16 %v3356, %v3355
        %v3368 = vpack.c.bf16 %v3358, %v3357
        %v3369 = vpack.c.bf16 %v3360, %v3359
        %v3370 = vpack.c.bf16 %v3362, %v3361
        %v3379 = vunpack.c.l.b16 %v3363
        %v3380 = vunpack.c.h.b16 %v3363
        %v3381 = vunpack.c.l.b16 %v3364
        %v3382 = vunpack.c.h.b16 %v3364
        %v3383 = vunpack.c.l.b16 %v3365
        %v3384 = vunpack.c.h.b16 %v3365
        %v3385 = vunpack.c.l.b16 %v3366
        %v3386 = vunpack.c.h.b16 %v3366
        %v3387 = vunpack.c.l.b16 %v3367
        %v3388 = vunpack.c.h.b16 %v3367
        %v3389 = vunpack.c.l.b16 %v3368
        %v3390 = vunpack.c.h.b16 %v3368
        %v3391 = vunpack.c.l.b16 %v3369
        %v3392 = vunpack.c.h.b16 %v3369
        %v3393 = vunpack.c.l.b16 %v3370
        %v3394 = vunpack.c.h.b16 %v3370
        %v3395 = vpack.c.b16 %v3379, %v3379
        %v3396 = vpack.c.b16 %v3380, %v3380
        %v3397 = vpack.c.b16 %v3381, %v3381
        %v3398 = vpack.c.b16 %v3382, %v3382
        %v3399 = vpack.c.b16 %v3383, %v3383
        %v3400 = vpack.c.b16 %v3384, %v3384
        %v3401 = vpack.c.b16 %v3385, %v3385
        %v3402 = vpack.c.b16 %v3386, %v3386
        %v3403 = vpack.c.b16 %v3387, %v3387
        %v3404 = vpack.c.b16 %v3388, %v3388
        %v3405 = vpack.c.b16 %v3389, %v3389
        %v3406 = vpack.c.b16 %v3390, %v3390
        %v3407 = vpack.c.b16 %v3391, %v3391
        %v3408 = vpack.c.b16 %v3392, %v3392
        %v3409 = vpack.c.b16 %v3393, %v3393
        %v3410 = vpack.c.b16 %v3394, %v3394
        %s3427 = scalar_lea.vmem %s470, 64 [#allocation14]
        %3428 = vst [vmem:[%s3427] sm:$0xf] %v3395
        %3429 = vst [vmem:[%s3427 + $0x4] sm:$0xf] %v3396
        %3430 = vst [vmem:[%s3427 + $0x8] sm:$0xf] %v3397
        %3431 = vst [vmem:[%s3427 + $0xc] sm:$0xf] %v3398
        %3432 = vst [vmem:[%s3427 + $0x10] sm:$0xf] %v3399
        %3433 = vst [vmem:[%s3427 + $0x14] sm:$0xf] %v3400
        %3434 = vst [vmem:[%s3427 + $0x18] sm:$0xf] %v3401
        %3435 = vst [vmem:[%s3427 + $0x1c] sm:$0xf] %v3402
        %3436 = vst [vmem:[%s3427 + $0x20] sm:$0xf] %v3403
        %3437 = vst [vmem:[%s3427 + $0x24] sm:$0xf] %v3404
        %3438 = vst [vmem:[%s3427 + $0x28] sm:$0xf] %v3405
        %3439 = vst [vmem:[%s3427 + $0x2c] sm:$0xf] %v3406
        %3440 = vst [vmem:[%s3427 + $0x30] sm:$0xf] %v3407
        %3441 = vst [vmem:[%s3427 + $0x34] sm:$0xf] %v3408
        %3442 = vst [vmem:[%s3427 + $0x38] sm:$0xf] %v3409
        %3443 = vst [vmem:[%s3427 + $0x3c] sm:$0xf] %v3410
        %v3444 = vld [vmem:[#allocation2 + $0x38] sm:$0xff]
        %v3445 = vld [vmem:[#allocation2 + $0x78] sm:$0xff]
        %v3446 = vld [vmem:[#allocation2 + $0xb8] sm:$0xff]
        %v3447 = vld [vmem:[#allocation2 + $0xf8] sm:$0xff]
        %v3448 = vld [vmem:[#allocation2 + $0x138] sm:$0xff]
        %v3449 = vld [vmem:[#allocation2 + $0x178] sm:$0xff]
        %v3450 = vld [vmem:[#allocation2 + $0x1b8] sm:$0xff]
        %v3451 = vld [vmem:[#allocation2 + $0x1f8] sm:$0xff]
        %v3452 = vld [vmem:[#allocation2 + $0x238] sm:$0xff]
        %v3453 = vld [vmem:[#allocation2 + $0x278] sm:$0xff]
        %v3454 = vld [vmem:[#allocation2 + $0x2b8] sm:$0xff]
        %v3455 = vld [vmem:[#allocation2 + $0x2f8] sm:$0xff]
        %v3456 = vld [vmem:[#allocation2 + $0x338] sm:$0xff]
        %v3457 = vld [vmem:[#allocation2 + $0x378] sm:$0xff]
        %v3458 = vld [vmem:[#allocation2 + $0x3b8] sm:$0xff]
        %v3459 = vld [vmem:[#allocation2 + $0x3f8] sm:$0xff]
        %v3460 = vpack.c.bf16 %v3445, %v3444
        %v3461 = vpack.c.bf16 %v3447, %v3446
        %v3462 = vpack.c.bf16 %v3449, %v3448
        %v3463 = vpack.c.bf16 %v3451, %v3450
        %v3464 = vpack.c.bf16 %v3453, %v3452
        %v3465 = vpack.c.bf16 %v3455, %v3454
        %v3466 = vpack.c.bf16 %v3457, %v3456
        %v3467 = vpack.c.bf16 %v3459, %v3458
        %v3476 = vunpack.c.l.b16 %v3460
        %v3477 = vunpack.c.h.b16 %v3460
        %v3478 = vunpack.c.l.b16 %v3461
        %v3479 = vunpack.c.h.b16 %v3461
        %v3480 = vunpack.c.l.b16 %v3462
        %v3481 = vunpack.c.h.b16 %v3462
        %v3482 = vunpack.c.l.b16 %v3463
        %v3483 = vunpack.c.h.b16 %v3463
        %v3484 = vunpack.c.l.b16 %v3464
        %v3485 = vunpack.c.h.b16 %v3464
        %v3486 = vunpack.c.l.b16 %v3465
        %v3487 = vunpack.c.h.b16 %v3465
        %v3488 = vunpack.c.l.b16 %v3466
        %v3489 = vunpack.c.h.b16 %v3466
        %v3490 = vunpack.c.l.b16 %v3467
        %v3491 = vunpack.c.h.b16 %v3467
        %v3492 = vpack.c.b16 %v3476, %v3476
        %v3493 = vpack.c.b16 %v3477, %v3477
        %v3494 = vpack.c.b16 %v3478, %v3478
        %v3495 = vpack.c.b16 %v3479, %v3479
        %v3496 = vpack.c.b16 %v3480, %v3480
        %v3497 = vpack.c.b16 %v3481, %v3481
        %v3498 = vpack.c.b16 %v3482, %v3482
        %v3499 = vpack.c.b16 %v3483, %v3483
        %v3500 = vpack.c.b16 %v3484, %v3484
        %v3501 = vpack.c.b16 %v3485, %v3485
        %v3502 = vpack.c.b16 %v3486, %v3486
        %v3503 = vpack.c.b16 %v3487, %v3487
        %v3504 = vpack.c.b16 %v3488, %v3488
        %v3505 = vpack.c.b16 %v3489, %v3489
        %v3506 = vpack.c.b16 %v3490, %v3490
        %v3507 = vpack.c.b16 %v3491, %v3491
        %s3524 = scalar_lea.vmem %s477, 64 [#allocation16]
        %3525 = vst [vmem:[%s3524] sm:$0xf] %v3492
        %3526 = vst [vmem:[%s3524 + $0x4] sm:$0xf] %v3493
        %3527 = vst [vmem:[%s3524 + $0x8] sm:$0xf] %v3494
        %3528 = vst [vmem:[%s3524 + $0xc] sm:$0xf] %v3495
        %3529 = vst [vmem:[%s3524 + $0x10] sm:$0xf] %v3496
        %3530 = vst [vmem:[%s3524 + $0x14] sm:$0xf] %v3497
        %3531 = vst [vmem:[%s3524 + $0x18] sm:$0xf] %v3498
        %3532 = vst [vmem:[%s3524 + $0x1c] sm:$0xf] %v3499
        %3533 = vst [vmem:[%s3524 + $0x20] sm:$0xf] %v3500
        %3534 = vst [vmem:[%s3524 + $0x24] sm:$0xf] %v3501
        %3535 = vst [vmem:[%s3524 + $0x28] sm:$0xf] %v3502
        %3536 = vst [vmem:[%s3524 + $0x2c] sm:$0xf] %v3503
        %3537 = vst [vmem:[%s3524 + $0x30] sm:$0xf] %v3504
        %3538 = vst [vmem:[%s3524 + $0x34] sm:$0xf] %v3505
        %3539 = vst [vmem:[%s3524 + $0x38] sm:$0xf] %v3506
        %3540 = vst [vmem:[%s3524 + $0x3c] sm:$0xf] %v3507
        %s3541 = sand.u32 %s196, 1
        %s3542 = scalar_lea.sflag [#allocation5], %s3541
        %s3543 = sand.u32 %s196, 1
        %s3544 = smul.addr %s3543, 256
        %s3545 = scalar_lea.vmem [#allocation13], %s3544
        %s3546 = sand.u32 %s31, 1
        %s3547 = scalar_lea.sflag [#allocation15], %s3546
        %s3548 = sand.u32 %s224, 1
        %s3549 = smul.addr %s3548, 128
        %s3550 = scalar_lea.vmem [#allocation14], %s3549
        %s3551 = sand.u32 %s31, 1
        %s3552 = scalar_lea.sflag [#allocation15], %s3551
        %s3553 = sand.u32 %s252, 1
        %s3554 = smul.addr %s3553, 128
        %s3555 = scalar_lea.vmem [#allocation16], %s3554
        // Predicated region
        $region69: #{tpu_custom_call.1} parent=43 // pred_check
          %p3556 = pneg %p206
        $region70: #{tpu_custom_call.1} parent=43 // pred_check_branch
          %3558 = sbr.rel (%p3556) target = $region72
        $region71: #{tpu_custom_call.1} parent=43 // pred_region
          #allocation18 [shape = 'u32[6]{0}', space=smem, size = 0x18, scoped, tag = 'DMA stride descriptor']
          %s3559 = smul.u32 16, %s36
          %s3561 = ssub.s32 4096, 4096
          %3562 = vsyncadd %s3542, %s3561
          %s3563 = smul.addr %s35, 128
          %s3564 = sadd.s32 %s3559, %s3563
          %s3565 = smul.addr %s3564, 64
          %s3566 = scalar_lea.hbm %s6, %s3565
          %s3568 = sshll.u32 1, 14
          %s3569 = sxor.u32 4294967295, %s3568
          %s3572 = sshll.u32 7, 18
          %s3573 = sxor.u32 4294967295, %s3572
          %s3574 = sand.u32 0, %s3573
          %s3576 = sor.u32 %s3574, 0
          %s3578 = sshll.u32 3, 24
          %s3579 = sxor.u32 4294967295, %s3578
          %s3580 = sand.u32 %s3576, %s3579
          %s3582 = sor.u32 %s3580, 0
          %s3583 = sshll.u32 %s3545, 4
          %s3584 = int_to_ptr.vmem [resolvable:$true] %s3583
          %3590 = sst [smem:[#allocation18]] 1024
          %s3591 = scalar_lea.smem [#allocation18], 1
          %3592 = sst [smem:[%s3591]] 2048
          %s3593 = scalar_lea.smem [#allocation18], 2
          %3594 = sst [smem:[%s3593]] 16
          %s3595 = scalar_lea.smem [#allocation18], 3
          %3596 = sst [smem:[%s3595]] 64
          %s3597 = scalar_lea.smem [#allocation18], 4
          %3598 = sst [smem:[%s3597]] 64
          %s3599 = scalar_lea.smem [#allocation18], 5
          %3600 = sst [smem:[%s3599]] 4
          %3602 = dma.general %s3584, 4096, %s3566, %s3542, [#allocation17], [#allocation18], %s3582, 0
        $region72: #{tpu_custom_call.1} parent=43 // pred_fallthru
          _
        // Predicated region
        $region73: #{tpu_custom_call.1} parent=43 // pred_check
          %p3603 = pneg %p234
        $region74: #{tpu_custom_call.1} parent=43 // pred_check_branch
          %3605 = sbr.rel (%p3603) target = $region76
        $region75: #{tpu_custom_call.1} parent=43 // pred_region
          #allocation20 [shape = 'u32[6]{0}', space=smem, size = 0x18, scoped, tag = 'DMA stride descriptor']
          %s3606 = smul.u32 16, %s36
          %s3608 = ssub.s32 2048, 2048
          %3609 = vsyncadd %s3547, %s3608
          %s3610 = smul.addr %s35, 64
          %s3611 = sadd.s32 %s3606, %s3610
          %s3612 = smul.addr %s3611, 64
          %s3613 = scalar_lea.hbm %s7, %s3612
          %s3615 = sshll.u32 1, 14
          %s3616 = sxor.u32 4294967295, %s3615
          %s3619 = sshll.u32 7, 18
          %s3620 = sxor.u32 4294967295, %s3619
          %s3621 = sand.u32 0, %s3620
          %s3623 = sor.u32 %s3621, 0
          %s3625 = sshll.u32 3, 24
          %s3626 = sxor.u32 4294967295, %s3625
          %s3627 = sand.u32 %s3623, %s3626
          %s3629 = sor.u32 %s3627, 0
          %s3630 = sshll.u32 %s3550, 4
          %s3631 = int_to_ptr.vmem [resolvable:$true] %s3630
          %3637 = sst [smem:[#allocation20]] 1024
          %s3638 = scalar_lea.smem [#allocation20], 1
          %3639 = sst [smem:[%s3638]] 2048
          %s3640 = scalar_lea.smem [#allocation20], 2
          %3641 = sst [smem:[%s3640]] 16
          %s3642 = scalar_lea.smem [#allocation20], 3
          %3643 = sst [smem:[%s3642]] 64
          %s3644 = scalar_lea.smem [#allocation20], 4
          %3645 = sst [smem:[%s3644]] 64
          %s3646 = scalar_lea.smem [#allocation20], 5
          %3647 = sst [smem:[%s3646]] 4
          %3649 = dma.general %s3631, 2048, %s3613, %s3547, [#allocation19], [#allocation20], %s3629, 0
        $region76: #{tpu_custom_call.1} parent=43 // pred_fallthru
          _
        // Predicated region
        $region77: #{tpu_custom_call.1} parent=43 // pred_check
          %p3650 = pneg %p262
        $region78: #{tpu_custom_call.1} parent=43 // pred_check_branch
          %3652 = sbr.rel (%p3650) target = $region80
        $region79: #{tpu_custom_call.1} parent=43 // pred_region
          #allocation22 [shape = 'u32[6]{0}', space=smem, size = 0x18, scoped, tag = 'DMA stride descriptor']
          %s3653 = smul.u32 16, %s36
          %s3655 = ssub.s32 2048, 2048
          %3656 = vsyncadd %s3552, %s3655
          %s3657 = smul.addr %s35, 64
          %s3658 = sadd.s32 %s3653, %s3657
          %s3659 = smul.addr %s3658, 64
          %s3660 = scalar_lea.hbm %s8, %s3659
          %s3662 = sshll.u32 1, 14
          %s3663 = sxor.u32 4294967295, %s3662
          %s3666 = sshll.u32 7, 18
          %s3667 = sxor.u32 4294967295, %s3666
          %s3668 = sand.u32 0, %s3667
          %s3670 = sor.u32 %s3668, 0
          %s3672 = sshll.u32 3, 24
          %s3673 = sxor.u32 4294967295, %s3672
          %s3674 = sand.u32 %s3670, %s3673
          %s3676 = sor.u32 %s3674, 0
          %s3677 = sshll.u32 %s3555, 4
          %s3678 = int_to_ptr.vmem [resolvable:$true] %s3677
          %3684 = sst [smem:[#allocation22]] 1024
          %s3685 = scalar_lea.smem [#allocation22], 1
          %3686 = sst [smem:[%s3685]] 2048
          %s3687 = scalar_lea.smem [#allocation22], 2
          %3688 = sst [smem:[%s3687]] 16
          %s3689 = scalar_lea.smem [#allocation22], 3
          %3690 = sst [smem:[%s3689]] 64
          %s3691 = scalar_lea.smem [#allocation22], 4
          %3692 = sst [smem:[%s3691]] 64
          %s3693 = scalar_lea.smem [#allocation22], 5
          %3694 = sst [smem:[%s3693]] 4
          %3696 = dma.general %s3678, 2048, %s3660, %s3552, [#allocation21], [#allocation22], %s3676, 0
        $region80: #{tpu_custom_call.1} parent=43 // pred_fallthru
          _
      $region44: #{tpu_custom_call.1} parent=5 // pred_fallthru
        _
      %p3697 = scmp.le.s32.totalorder 2, %s26
      // Predicated region
      $region81: #{tpu_custom_call.1} parent=5 // pred_check
        %p3698 = pneg %p3697
      $region82: #{tpu_custom_call.1} parent=5 // pred_check_branch
        %3700 = sbr.rel (%p3698) target = $region84
      $region83: #{tpu_custom_call.1} parent=5 // pred_region
        %s3701 = ssub.s32 %s26, 2
        // Predicated region
        $region85: #{tpu_custom_call.1} parent=83 // pred_check
          %p3702 = pneg %p212
        $region86: #{tpu_custom_call.1} parent=83 // pred_check_branch
          %3704 = sbr.rel (%p3702) target = $region88
        $region87: #{tpu_custom_call.1} parent=83 // pred_region
          %s3705 = sand.u32 %s197, 1
          %s3706 = scalar_lea.sflag [#allocation5], %s3705
          %s3707 = sand.u32 %s197, 1
          %s3708 = smul.addr %s3707, 256
          %s3709 = scalar_lea.vmem [#allocation13], %s3708
          %3710 = dma.done %s3706, 4096
        $region88: #{tpu_custom_call.1} parent=83 // pred_fallthru
          _
        // Predicated region
        $region89: #{tpu_custom_call.1} parent=83 // pred_check
          %p3711 = pneg %p240
        $region90: #{tpu_custom_call.1} parent=83 // pred_check_branch
          %3713 = sbr.rel (%p3711) target = $region92
        $region91: #{tpu_custom_call.1} parent=83 // pred_region
          %s3714 = sand.u32 %s32, 1
          %s3715 = scalar_lea.sflag [#allocation15], %s3714
          %s3716 = sand.u32 %s225, 1
          %s3717 = smul.addr %s3716, 128
          %s3718 = scalar_lea.vmem [#allocation14], %s3717
          %3719 = dma.done %s3715, 2048
        $region92: #{tpu_custom_call.1} parent=83 // pred_fallthru
          _
        // Predicated region
        $region93: #{tpu_custom_call.1} parent=83 // pred_check
          %p3720 = pneg %p268
        $region94: #{tpu_custom_call.1} parent=83 // pred_check_branch
          %3722 = sbr.rel (%p3720) target = $region96
        $region95: #{tpu_custom_call.1} parent=83 // pred_region
          %s3723 = sand.u32 %s32, 1
          %s3724 = scalar_lea.sflag [#allocation15], %s3723
          %s3725 = sand.u32 %s253, 1
          %s3726 = smul.addr %s3725, 128
          %s3727 = scalar_lea.vmem [#allocation16], %s3726
          %3728 = dma.done %s3724, 2048
        $region96: #{tpu_custom_call.1} parent=83 // pred_fallthru
          _
      $region84: #{tpu_custom_call.1} parent=5 // pred_fallthru
        _
    $region6: #{tpu_custom_call.1} parent=1 // loop_footer
      %s30 = sadd.s32 1, %s26
    $region7: #{tpu_custom_call.1} parent=1 // loop_footer_branch
      %25 = sbr.rel target = $region3
    $region8: #{tpu_custom_call.1} parent=1 // loop_exit
      _
    %3729 = vsyncpa [#allocation4], 1
    %s3730 = scalar_lea.sflag [#allocation4], 1
    %3731 = vsyncpa %s3730, 1
    %3732 = vsyncpa [#allocation7], 1
    %3733 = vsyncpa [#allocation10], 1
    %3734 = vsyncpa [#allocation5], 1
    %s3735 = scalar_lea.sflag [#allocation5], 1
    %3736 = vsyncpa %s3735, 1
    %3737 = vsyncpa [#allocation15], 1
    %s3738 = scalar_lea.sflag [#allocation15], 1
    %3739 = vsyncpa %s3738, 1

</llo_original>
